<compile_context>
chip_gen: v6e
topology: v6e:2x2x1
jax: 0.10.0
libtpu: 0.0.40
codegen_flags: <defaults>
</compile_context>

<pallas_src>
import functools

import jax
import jax.numpy as jnp
from jax.experimental import pallas as pl
from jax.experimental.pallas import tpu as pltpu


# 2x2 / stride-1 max-pool feeding a stride-2 conv, decomposed by parity:
# for output parity r, the two contributing conv rows of pool row 2i+r are
# conv rows 2(i+oi)+p for (p, oi) in _PARITY_TERMS[r].
_PARITY_TERMS = (((0, 0), (1, 0)),   # r = 0: rows 2i+0, 2i+1
                 ((1, 0), (0, 1)))   # r = 1: rows 2i+1, 2(i+1)+0


# ----------------------------------------------------------------------------
# Fused kernel: one batch tile per grid step
# ----------------------------------------------------------------------------
def _smallcnn_kernel(p1_ref, w1_ref, b1_ref, w2_ref, b2_ref,
                     wf1_ref, bf1_ref, wf2_ref, bf2_ref,
                     o_ref, y1s_ref, p2f_ref):
    TB = o_ref.shape[1]                     # batch tile

    # ---- conv1 + ReLU --------------------------------------------------------
    # p1 rows = (phase, b, i) [i padded 7->8]; lanes = (j, 8x8 patch element).
    # w1 is block-diagonal over j, so the matmul output is lane-dense:
    #   y1s[ph, b, i, j*16 + c] = relu(conv1)[b, 2i+p, 2j+q, c],  ph = 2p+q.
    p1 = p1_ref[...].reshape(4 * TB * 8, 8 * 64)
    y1 = jnp.dot(p1, w1_ref[...], preferred_element_type=jnp.float32)
    y1 = jnp.maximum(y1 + b1_ref[...], 0.0)                   # (4*TB*8, 128)
    y1s_ref[...] = y1.reshape(4, TB, 8, 128)

    # ---- maxpool1 (2x2, s=1) fused with the conv2 im2col ---------------------
    # Rows of the im2col scratch are (b, oh) [oh padded 5->8]; lanes are
    # (kh, kw, ow, cin).  For each conv2 tap (kh, kw) the needed pool1 values
    # are a max of four contiguous (TB, 5, 80) slices of y1s.  The 8 taps of
    # each 640-lane half are concatenated in value space -> two 128-aligned
    # 640-lane stores per row group instead of 16 narrow masked stores.
    p2f_ref[:, 5:8, :] = jnp.zeros((TB, 3, 1280), jnp.float32)   # padded rows
    for half in range(2):
        pieces = []
        for kh in (2 * half, 2 * half + 1):
            rh, ah = kh % 2, kh // 2
            for kw in range(4):
                rw, aw = kw % 2, kw // 2
                tap = None
                for pp, oi in _PARITY_TERMS[rh]:
                    for qq, oj in _PARITY_TERMS[rw]:
                        ph = 2 * pp + qq
                        t = y1s_ref[ph, :,
                                    ah + oi: ah + oi + 5,
                                    (aw + oj) * 16: (aw + oj) * 16 + 80]
                        tap = t if tap is None else jnp.maximum(tap, t)
                pieces.append(tap)                             # (TB, 5, 80)
        p2f_ref[:, 0:5, half * 640:(half + 1) * 640] = (
            jnp.concatenate(pieces, axis=-1))

    # ---- conv2 + ReLU --------------------------------------------------------
    # w2 is block-diagonal over ow, so y2 lanes are (ow, cout) (160 wide).
    p2 = p2f_ref[...].reshape(TB * 8, 1280).astype(jnp.bfloat16)
    y2 = jnp.dot(p2, w2_ref[...], preferred_element_type=jnp.float32)
    y2 = jnp.maximum(y2 + b2_ref[...], 0.0).reshape(TB, 8, 160)

    # ---- maxpool2 (2x2, s=1): shifted-slice maxima, no scratch ---------------
    # p2v[b, h, w*32 + c] = maxpool2[b, c, h, w]
    p2v = jnp.maximum(jnp.maximum(y2[:, 0:4, 0:128], y2[:, 0:4, 32:160]),
                      jnp.maximum(y2[:, 1:5, 0:128], y2[:, 1:5, 32:160]))

    # ---- fc1 + ReLU: sum of 4 per-row 128-lane matmuls -----------------------
    # (PyTorch's NCHW flatten permutation is folded into wf1's packing.)
    acc = None
    for h in range(4):
        part = jnp.dot(p2v[:, h, :].astype(jnp.bfloat16), wf1_ref[h],
                       preferred_element_type=jnp.float32)
        acc = part if acc is None else acc + part
    hid = jnp.maximum(acc + bf1_ref[...], 0.0)                 # (TB, 32)

    # ---- fc2 -----------------------------------------------------------------
    out = jnp.dot(hid.astype(jnp.bfloat16), wf2_ref[...],
                  preferred_element_type=jnp.float32) + bf2_ref[...]
    o_ref[0] = out.astype(o_ref.dtype)                         # (TB, classes)


# ----------------------------------------------------------------------------
# XLA-side conv1 im2col (the only glue left)
# ----------------------------------------------------------------------------
def _conv1_patches(x):
    """(B, 28, 28) f32 -> (4, B, 8, 512) bf16 conv1 patches.

    Row (ph=2p+q, b, i), lane (j*64 + kh*8 + kw) holds
    x_pad2[b, 2*(2i+p)+kh, 2*(2j+q)+kw] : the 8x8/stride-2 patch of conv1
    output position (2i+p, 2j+q).  i and j are padded 7->8 for tile alignment;
    padded (and the 14th-row/col) entries are never read downstream.
    """
    B = x.shape[0]
    xpp = jnp.pad(x, ((0, 0), (2, 4), (2, 4)))                 # (B, 34, 34)
    pats = [xpp[:, kh:kh + 28:2, kw:kw + 28:2]
            for kh in range(8) for kw in range(8)]             # 64 x (B,14,14)
    p = jnp.stack(pats, axis=-1)                               # (B,14,14,64)
    p = p.reshape(B, 7, 2, 7, 2, 64).transpose(2, 4, 0, 1, 3, 5)  # (p,q,b,i,j,k)
    p = jnp.pad(p, ((0, 0), (0, 0), (0, 0), (0, 1), (0, 1), (0, 0)))
    return p.reshape(4, B, 8, 8 * 64).astype(jnp.bfloat16)


# ----------------------------------------------------------------------------
# Public forward: NCHW input (like PyTorch)
# ----------------------------------------------------------------------------
def smallcnn_forward(x_nchw, params, *, tile_b=4):
    B, cin, H, W = x_nchw.shape
    assert (cin, H, W) == (1, 28, 28), "SmallCNN's fc layer requires 1x28x28 input"
    C = params["wf2"].shape[1]

    nt = -(-B // tile_b)
    Bp = nt * tile_b
    x = x_nchw.reshape(B, H, W).astype(jnp.float32)
    if Bp != B:
        x = jnp.pad(x, ((0, Bp - B), (0, 0), (0, 0)))

    # TODO(synk): conv1's im2col could be moved in-kernel from the 2 KiB/image
    # padded image; kept XLA-side since the stride-2 lane gather is awkward on
    # the VPU and this path is ~32 KiB/image of HBM, well below compute time.
    p1 = _conv1_patches(x)                                     # (4, Bp, 8, 512)

    out = pl.pallas_call(
        _smallcnn_kernel,
        out_shape=jax.ShapeDtypeStruct((nt, tile_b, C), jnp.float32),
        grid_spec=pltpu.PrefetchScalarGridSpec(
            num_scalar_prefetch=0,
            grid=(nt,),
            in_specs=[
                pl.BlockSpec((4, tile_b, 8, 512), lambda t: (0, t, 0, 0)),  # patches
                pl.BlockSpec((512, 128), lambda t: (0, 0)),        # w1 (blk-diag)
                pl.BlockSpec((1, 128), lambda t: (0, 0)),          # b1
                pl.BlockSpec((1280, 160), lambda t: (0, 0)),       # w2 (blk-diag)
                pl.BlockSpec((1, 160), lambda t: (0, 0)),          # b2
                pl.BlockSpec((4, 128, 32), lambda t: (0, 0, 0)),   # wf1
                pl.BlockSpec((1, 32), lambda t: (0, 0)),           # bf1
                pl.BlockSpec((32, C), lambda t: (0, 0)),           # wf2
                pl.BlockSpec((1, C), lambda t: (0, 0)),            # bf2
            ],
            out_specs=pl.BlockSpec((1, tile_b, C), lambda t: (t, 0, 0)),
            scratch_shapes=[
                pltpu.VMEM((4, tile_b, 8, 128), jnp.float32),      # conv1+relu
                pltpu.VMEM((tile_b, 8, 1280), jnp.float32),        # conv2 im2col
            ],
        ),
        compiler_params=pltpu.CompilerParams(
            dimension_semantics=("parallel",),
            vmem_limit_bytes=32 * 1024 * 1024),
    )(p1, params["w1"], params["b1"], params["w2"], params["b2"],
      params["wf1"], params["bf1"], params["wf2"], params["bf2"])

    return out.reshape(Bp, C)[:B]


# ----------------------------------------------------------------------------
# Parameters: PyTorch layouts, repacked once for the kernel
# ----------------------------------------------------------------------------
def init_torch_params(key, num_classes=10, in_channels=1):
    assert in_channels == 1
    ks = jax.random.split(key, 8)
    n = lambda k, s: 0.05 * jax.random.normal(k, s, jnp.float32)
    return {
        "w1": n(ks[0], (16, in_channels, 8, 8)), "b1": n(ks[1], (16,)),
        "w2": n(ks[2], (32, 16, 4, 4)),          "b2": n(ks[3], (32,)),
        "wf1": n(ks[4], (32, 512)),              "bf1": n(ks[5], (32,)),
        "wf2": n(ks[6], (num_classes, 32)),      "bf2": n(ks[7], (num_classes,)),
    }


def pack_params(tp):
    """conv weights -> bf16 block-diagonal matrices (lane-dense conv outputs);
    biases tiled to match; PyTorch NCHW flatten folded into fc1's packing."""
    num_classes = tp["wf2"].shape[0]
    w1k = jnp.transpose(tp["w1"], (2, 3, 1, 0)).reshape(64, 16)         # (k, c)
    w1p = jnp.einsum("kc,jv->jkvc", w1k,
                     jnp.eye(8, dtype=jnp.float32)).reshape(512, 128)
    w2k = jnp.transpose(tp["w2"], (2, 3, 1, 0))                         # (kh,kw,ci,co)
    w2p = jnp.einsum("abic,wv->abwivc", w2k,
                     jnp.eye(5, dtype=jnp.float32)).reshape(1280, 160)
    wf1p = (tp["wf1"].T.reshape(32, 4, 4, 32)
            .transpose(1, 2, 0, 3).reshape(4, 128, 32))                 # (h, wc, n)
    return {
        "w1": w1p.astype(jnp.bfloat16),
        "b1": jnp.tile(tp["b1"].reshape(1, 16), (1, 8)),                # (1, 128)
        "w2": w2p.astype(jnp.bfloat16),
        "b2": jnp.tile(tp["b2"].reshape(1, 32), (1, 5)),                # (1, 160)
        "wf1": wf1p.astype(jnp.bfloat16),
        "bf1": tp["bf1"].reshape(1, 32),
        "wf2": tp["wf2"].T.astype(jnp.bfloat16),
        "bf2": tp["bf2"].reshape(1, num_classes),
    }


# ----------------------------------------------------------------------------
# Pure-JAX f32 reference (mirrors the PyTorch module)
# ----------------------------------------------------------------------------
def smallcnn_reference(x_nchw, tp):
    dn = ("NCHW", "OIHW", "NCHW")
    y = jax.lax.conv_general_dilated(x_nchw, tp["w1"], (2, 2), ((2, 2), (2, 2)),
                                     dimension_numbers=dn)
    y = jax.nn.relu(y + tp["b1"].reshape(1, -1, 1, 1))
    y = jnp.maximum(jnp.maximum(y[:, :, :-1, :-1], y[:, :, :-1, 1:]),
                    jnp.maximum(y[:, :, 1:, :-1], y[:, :, 1:, 1:]))
    y = jax.lax.conv_general_dilated(y, tp["w2"], (2, 2), ((0, 0), (0, 0)),
                                     dimension_numbers=dn)
    y = jax.nn.relu(y + tp["b2"].reshape(1, -1, 1, 1))
    y = jnp.maximum(jnp.maximum(y[:, :, :-1, :-1], y[:, :, :-1, 1:]),
                    jnp.maximum(y[:, :, 1:, :-1], y[:, :, 1:, 1:]))
    feat = y.reshape(y.shape[0], -1)
    hid = jax.nn.relu(feat @ tp["wf1"].T + tp["bf1"])
    return hid @ tp["wf2"].T + tp["bf2"]


if __name__ == "__main__":
    key = jax.random.PRNGKey(0)
    k_x, k_p = jax.random.split(key)
    B = 8
    x = jax.random.normal(k_x, (B, 1, 28, 28), jnp.float32)
    tparams = init_torch_params(k_p, num_classes=10, in_channels=1)
    params = pack_params(tparams)

    fwd = jax.jit(functools.partial(smallcnn_forward, tile_b=4))   # grid = (2,)
    out = fwd(x, params)
    jax.block_until_ready(out)
    assert out.shape == (B, 10) and out.dtype == jnp.float32

    # Compare against the reference with bf16-rounded matmul operands (the
    # kernel feeds the MXU bf16 inputs with f32 accumulation).
    rnd = lambda v: v.astype(jnp.bfloat16).astype(jnp.float32)
    tp_r = dict(tparams)
    for k in ("w1", "w2", "wf1", "wf2"):
        tp_r[k] = rnd(tp_r[k])
    ref = smallcnn_reference(rnd(x), tp_r)
    err = float(jnp.max(jnp.abs(out - ref)))
    assert err < 3e-2, f"max abs error vs reference: {err}"
    print("KERNEL_OK")
</pallas_src>

<mosaic_0001>
module attributes {stable_mosaic.version = 11 : i64} {
  func.func @_smallcnn_kernel(%arg0: i32, %arg1: memref<4x4x8x512xbf16, #tpu.memory_space<vmem>>, %arg2: memref<512x128xbf16, #tpu.memory_space<vmem>>, %arg3: memref<1x128xf32, #tpu.memory_space<vmem>>, %arg4: memref<1280x160xbf16, #tpu.memory_space<vmem>>, %arg5: memref<1x160xf32, #tpu.memory_space<vmem>>, %arg6: memref<4x128x32xbf16, #tpu.memory_space<vmem>>, %arg7: memref<1x32xf32, #tpu.memory_space<vmem>>, %arg8: memref<32x10xbf16, #tpu.memory_space<vmem>>, %arg9: memref<1x10xf32, #tpu.memory_space<vmem>>, %arg10: memref<1x4x10xf32, #tpu.memory_space<vmem>>, %arg11: memref<4x4x8x128xf32, #tpu.memory_space<vmem>>, %arg12: memref<4x8x1280xf32, #tpu.memory_space<vmem>>) attributes {dimension_semantics = [#tpu.dimension_semantics<parallel>], iteration_bounds = array<i64: 2>, scalar_prefetch = 0 : i64, scratch_operands = 2 : i64, tpu.core_type = #tpu.core_type<tc>, window_params = [{transform_indices = @transform_0, window_bounds = array<i64: 4, 4, 8, 512>}, {pipeline_mode = #tpu.pipeline_mode<synchronous>, transform_indices = @transform_1, window_bounds = array<i64: 512, 128>}, {pipeline_mode = #tpu.pipeline_mode<synchronous>, transform_indices = @transform_2, window_bounds = array<i64: 1, 128>}, {pipeline_mode = #tpu.pipeline_mode<synchronous>, transform_indices = @transform_3, window_bounds = array<i64: 1280, 160>}, {pipeline_mode = #tpu.pipeline_mode<synchronous>, transform_indices = @transform_4, window_bounds = array<i64: 1, 160>}, {pipeline_mode = #tpu.pipeline_mode<synchronous>, transform_indices = @transform_5, window_bounds = array<i64: 4, 128, 32>}, {pipeline_mode = #tpu.pipeline_mode<synchronous>, transform_indices = @transform_6, window_bounds = array<i64: 1, 32>}, {pipeline_mode = #tpu.pipeline_mode<synchronous>, transform_indices = @transform_7, window_bounds = array<i64: 32, 10>}, {pipeline_mode = #tpu.pipeline_mode<synchronous>, transform_indices = @transform_8, window_bounds = array<i64: 1, 10>}, {transform_indices = @transform_9, window_bounds = array<i64: 1, 4, 10>}]} {
    %c0 = arith.constant 0 : index
    %c0_0 = arith.constant 0 : index
    %c0_1 = arith.constant 0 : index
    %c0_2 = arith.constant 0 : index
    %0 = vector.load %arg1[%c0, %c0_0, %c0_1, %c0_2] : memref<4x4x8x512xbf16, #tpu.memory_space<vmem>>, vector<4x4x8x512xbf16>
    %1 = vector.shape_cast %0 : vector<4x4x8x512xbf16> to vector<128x512xbf16>
    %c0_3 = arith.constant 0 : index
    %c0_4 = arith.constant 0 : index
    %2 = vector.load %arg2[%c0_3, %c0_4] : memref<512x128xbf16, #tpu.memory_space<vmem>>, vector<512x128xbf16>
    %cst = arith.constant dense<0.000000e+00> : vector<128x128xf32>
    %3 = tpu.matmul %1, %2, %cst {dimension_numbers = #tpu.dot_dimension_numbers<[1], [0], [0], [1], [0, 0, 1, 1], [], []>} : vector<128x512xbf16>, vector<512x128xbf16>, vector<128x128xf32> -> vector<128x128xf32>
    %c0_5 = arith.constant 0 : index
    %c0_6 = arith.constant 0 : index
    %4 = vector.load %arg3[%c0_5, %c0_6] : memref<1x128xf32, #tpu.memory_space<vmem>>, vector<1x128xf32>
    %5 = vector.broadcast %4 : vector<1x128xf32> to vector<128x128xf32>
    %6 = arith.addf %3, %5 : vector<128x128xf32>
    %cst_7 = arith.constant 0.000000e+00 : f32
    %7 = vector.broadcast %cst_7 : f32 to vector<128x128xf32>
    %8 = arith.maximumf %6, %7 : vector<128x128xf32>
    %9 = vector.shape_cast %8 : vector<128x128xf32> to vector<4x4x8x128xf32>
    %c0_8 = arith.constant 0 : index
    %c0_9 = arith.constant 0 : index
    %c0_10 = arith.constant 0 : index
    %c0_11 = arith.constant 0 : index
    %10 = vector.load %arg11[%c0_8, %c0_9, %c0_10, %c0_11] : memref<4x4x8x128xf32, #tpu.memory_space<vmem>>, vector<4x4x8x128xf32>
    tpu.vector_store %arg11[%c0_8, %c0_9, %c0_10, %c0_11], %9 {strides = array<i32>} : memref<4x4x8x128xf32, #tpu.memory_space<vmem>>, vector<4x4x8x128xf32>,
    %cst_12 = arith.constant 0.000000e+00 : f32
    %11 = vector.broadcast %cst_12 : f32 to vector<4x3x1280xf32>
    %c0_13 = arith.constant 0 : index
    %c5 = arith.constant 5 : index
    %c0_14 = arith.constant 0 : index
    %12 = vector.load %arg12[%c0_13, %c5, %c0_14] : memref<4x8x1280xf32, #tpu.memory_space<vmem>>, vector<4x3x1280xf32>
    tpu.vector_store %arg12[%c0_13, %c5, %c0_14], %11 {strides = array<i32>} : memref<4x8x1280xf32, #tpu.memory_space<vmem>>, vector<4x3x1280xf32>,
    %c0_15 = arith.constant 0 : index
    %c0_16 = arith.constant 0 : index
    %c0_17 = arith.constant 0 : index
    %c0_18 = arith.constant 0 : index
    %13 = vector.load %arg11[%c0_15, %c0_16, %c0_17, %c0_18] : memref<4x4x8x128xf32, #tpu.memory_space<vmem>>, vector<1x4x5x80xf32>
    %14 = vector.shape_cast %13 : vector<1x4x5x80xf32> to vector<4x5x80xf32>
    %c1 = arith.constant 1 : index
    %c0_19 = arith.constant 0 : index
    %c0_20 = arith.constant 0 : index
    %c0_21 = arith.constant 0 : index
    %15 = vector.load %arg11[%c1, %c0_19, %c0_20, %c0_21] : memref<4x4x8x128xf32, #tpu.memory_space<vmem>>, vector<1x4x5x80xf32>
    %16 = vector.shape_cast %15 : vector<1x4x5x80xf32> to vector<4x5x80xf32>
    %17 = arith.maximumf %14, %16 : vector<4x5x80xf32>
    %c2 = arith.constant 2 : index
    %c0_22 = arith.constant 0 : index
    %c0_23 = arith.constant 0 : index
    %c0_24 = arith.constant 0 : index
    %18 = vector.load %arg11[%c2, %c0_22, %c0_23, %c0_24] : memref<4x4x8x128xf32, #tpu.memory_space<vmem>>, vector<1x4x5x80xf32>
    %19 = vector.shape_cast %18 : vector<1x4x5x80xf32> to vector<4x5x80xf32>
    %20 = arith.maximumf %17, %19 : vector<4x5x80xf32>
    %c3 = arith.constant 3 : index
    %c0_25 = arith.constant 0 : index
    %c0_26 = arith.constant 0 : index
    %c0_27 = arith.constant 0 : index
    %21 = vector.load %arg11[%c3, %c0_25, %c0_26, %c0_27] : memref<4x4x8x128xf32, #tpu.memory_space<vmem>>, vector<1x4x5x80xf32>
    %22 = vector.shape_cast %21 : vector<1x4x5x80xf32> to vector<4x5x80xf32>
    %23 = arith.maximumf %20, %22 : vector<4x5x80xf32>
    %c1_28 = arith.constant 1 : index
    %c0_29 = arith.constant 0 : index
    %c0_30 = arith.constant 0 : index
    %c0_31 = arith.constant 0 : index
    %24 = vector.load %arg11[%c1_28, %c0_29, %c0_30, %c0_31] : memref<4x4x8x128xf32, #tpu.memory_space<vmem>>, vector<1x4x5x80xf32>
    %25 = vector.shape_cast %24 : vector<1x4x5x80xf32> to vector<4x5x80xf32>
    %c0_32 = arith.constant 0 : index
    %c0_33 = arith.constant 0 : index
    %c0_34 = arith.constant 0 : index
    %c16 = arith.constant 16 : index
    %26 = vector.load %arg11[%c0_32, %c0_33, %c0_34, %c16] : memref<4x4x8x128xf32, #tpu.memory_space<vmem>>, vector<1x4x5x80xf32>
    %27 = vector.shape_cast %26 : vector<1x4x5x80xf32> to vector<4x5x80xf32>
    %28 = arith.maximumf %25, %27 : vector<4x5x80xf32>
    %c3_35 = arith.constant 3 : index
    %c0_36 = arith.constant 0 : index
    %c0_37 = arith.constant 0 : index
    %c0_38 = arith.constant 0 : index
    %29 = vector.load %arg11[%c3_35, %c0_36, %c0_37, %c0_38] : memref<4x4x8x128xf32, #tpu.memory_space<vmem>>, vector<1x4x5x80xf32>
    %30 = vector.shape_cast %29 : vector<1x4x5x80xf32> to vector<4x5x80xf32>
    %31 = arith.maximumf %28, %30 : vector<4x5x80xf32>
    %c2_39 = arith.constant 2 : index
    %c0_40 = arith.constant 0 : index
    %c0_41 = arith.constant 0 : index
    %c16_42 = arith.constant 16 : index
    %32 = vector.load %arg11[%c2_39, %c0_40, %c0_41, %c16_42] : memref<4x4x8x128xf32, #tpu.memory_space<vmem>>, vector<1x4x5x80xf32>
    %33 = vector.shape_cast %32 : vector<1x4x5x80xf32> to vector<4x5x80xf32>
    %34 = arith.maximumf %31, %33 : vector<4x5x80xf32>
    %c0_43 = arith.constant 0 : index
    %c0_44 = arith.constant 0 : index
    %c0_45 = arith.constant 0 : index
    %c16_46 = arith.constant 16 : index
    %35 = vector.load %arg11[%c0_43, %c0_44, %c0_45, %c16_46] : memref<4x4x8x128xf32, #tpu.memory_space<vmem>>, vector<1x4x5x80xf32>
    %36 = vector.shape_cast %35 : vector<1x4x5x80xf32> to vector<4x5x80xf32>
    %c1_47 = arith.constant 1 : index
    %c0_48 = arith.constant 0 : index
    %c0_49 = arith.constant 0 : index
    %c16_50 = arith.constant 16 : index
    %37 = vector.load %arg11[%c1_47, %c0_48, %c0_49, %c16_50] : memref<4x4x8x128xf32, #tpu.memory_space<vmem>>, vector<1x4x5x80xf32>
    %38 = vector.shape_cast %37 : vector<1x4x5x80xf32> to vector<4x5x80xf32>
    %39 = arith.maximumf %36, %38 : vector<4x5x80xf32>
    %c2_51 = arith.constant 2 : index
    %c0_52 = arith.constant 0 : index
    %c0_53 = arith.constant 0 : index
    %c16_54 = arith.constant 16 : index
    %40 = vector.load %arg11[%c2_51, %c0_52, %c0_53, %c16_54] : memref<4x4x8x128xf32, #tpu.memory_space<vmem>>, vector<1x4x5x80xf32>
    %41 = vector.shape_cast %40 : vector<1x4x5x80xf32> to vector<4x5x80xf32>
    %42 = arith.maximumf %39, %41 : vector<4x5x80xf32>
    %c3_55 = arith.constant 3 : index
    %c0_56 = arith.constant 0 : index
    %c0_57 = arith.constant 0 : index
    %c16_58 = arith.constant 16 : index
    %43 = vector.load %arg11[%c3_55, %c0_56, %c0_57, %c16_58] : memref<4x4x8x128xf32, #tpu.memory_space<vmem>>, vector<1x4x5x80xf32>
    %44 = vector.shape_cast %43 : vector<1x4x5x80xf32> to vector<4x5x80xf32>
    %45 = arith.maximumf %42, %44 : vector<4x5x80xf32>
    %c1_59 = arith.constant 1 : index
    %c0_60 = arith.constant 0 : index
    %c0_61 = arith.constant 0 : index
    %c16_62 = arith.constant 16 : index
    %46 = vector.load %arg11[%c1_59, %c0_60, %c0_61, %c16_62] : memref<4x4x8x128xf32, #tpu.memory_space<vmem>>, vector<1x4x5x80xf32>
    %47 = vector.shape_cast %46 : vector<1x4x5x80xf32> to vector<4x5x80xf32>
    %c0_63 = arith.constant 0 : index
    %c0_64 = arith.constant 0 : index
    %c0_65 = arith.constant 0 : index
    %c32 = arith.constant 32 : index
    %48 = vector.load %arg11[%c0_63, %c0_64, %c0_65, %c32] : memref<4x4x8x128xf32, #tpu.memory_space<vmem>>, vector<1x4x5x80xf32>
    %49 = vector.shape_cast %48 : vector<1x4x5x80xf32> to vector<4x5x80xf32>
    %50 = arith.maximumf %47, %49 : vector<4x5x80xf32>
    %c3_66 = arith.constant 3 : index
    %c0_67 = arith.constant 0 : index
    %c0_68 = arith.constant 0 : index
    %c16_69 = arith.constant 16 : index
    %51 = vector.load %arg11[%c3_66, %c0_67, %c0_68, %c16_69] : memref<4x4x8x128xf32, #tpu.memory_space<vmem>>, vector<1x4x5x80xf32>
    %52 = vector.shape_cast %51 : vector<1x4x5x80xf32> to vector<4x5x80xf32>
    %53 = arith.maximumf %50, %52 : vector<4x5x80xf32>
    %c2_70 = arith.constant 2 : index
    %c0_71 = arith.constant 0 : index
    %c0_72 = arith.constant 0 : index
    %c32_73 = arith.constant 32 : index
    %54 = vector.load %arg11[%c2_70, %c0_71, %c0_72, %c32_73] : memref<4x4x8x128xf32, #tpu.memory_space<vmem>>, vector<1x4x5x80xf32>
    %55 = vector.shape_cast %54 : vector<1x4x5x80xf32> to vector<4x5x80xf32>
    %56 = arith.maximumf %53, %55 : vector<4x5x80xf32>
    %c2_74 = arith.constant 2 : index
    %c0_75 = arith.constant 0 : index
    %c0_76 = arith.constant 0 : index
    %c0_77 = arith.constant 0 : index
    %57 = vector.load %arg11[%c2_74, %c0_75, %c0_76, %c0_77] : memref<4x4x8x128xf32, #tpu.memory_space<vmem>>, vector<1x4x5x80xf32>
    %58 = vector.shape_cast %57 : vector<1x4x5x80xf32> to vector<4x5x80xf32>
    %c3_78 = arith.constant 3 : index
    %c0_79 = arith.constant 0 : index
    %c0_80 = arith.constant 0 : index
    %c0_81 = arith.constant 0 : index
    %59 = vector.load %arg11[%c3_78, %c0_79, %c0_80, %c0_81] : memref<4x4x8x128xf32, #tpu.memory_space<vmem>>, vector<1x4x5x80xf32>
    %60 = vector.shape_cast %59 : vector<1x4x5x80xf32> to vector<4x5x80xf32>
    %61 = arith.maximumf %58, %60 : vector<4x5x80xf32>
    %c0_82 = arith.constant 0 : index
    %c0_83 = arith.constant 0 : index
    %c1_84 = arith.constant 1 : index
    %c0_85 = arith.constant 0 : index
    %62 = vector.load %arg11[%c0_82, %c0_83, %c1_84, %c0_85] : memref<4x4x8x128xf32, #tpu.memory_space<vmem>>, vector<1x4x5x80xf32>
    %63 = vector.shape_cast %62 : vector<1x4x5x80xf32> to vector<4x5x80xf32>
    %64 = arith.maximumf %61, %63 : vector<4x5x80xf32>
    %c1_86 = arith.constant 1 : index
    %c0_87 = arith.constant 0 : index
    %c1_88 = arith.constant 1 : index
    %c0_89 = arith.constant 0 : index
    %65 = vector.load %arg11[%c1_86, %c0_87, %c1_88, %c0_89] : memref<4x4x8x128xf32, #tpu.memory_space<vmem>>, vector<1x4x5x80xf32>
    %66 = vector.shape_cast %65 : vector<1x4x5x80xf32> to vector<4x5x80xf32>
    %67 = arith.maximumf %64, %66 : vector<4x5x80xf32>
    %c3_90 = arith.constant 3 : index
    %c0_91 = arith.constant 0 : index
    %c0_92 = arith.constant 0 : index
    %c0_93 = arith.constant 0 : index
    %68 = vector.load %arg11[%c3_90, %c0_91, %c0_92, %c0_93] : memref<4x4x8x128xf32, #tpu.memory_space<vmem>>, vector<1x4x5x80xf32>
    %69 = vector.shape_cast %68 : vector<1x4x5x80xf32> to vector<4x5x80xf32>
    %c2_94 = arith.constant 2 : index
    %c0_95 = arith.constant 0 : index
    %c0_96 = arith.constant 0 : index
    %c16_97 = arith.constant 16 : index
    %70 = vector.load %arg11[%c2_94, %c0_95, %c0_96, %c16_97] : memref<4x4x8x128xf32, #tpu.memory_space<vmem>>, vector<1x4x5x80xf32>
    %71 = vector.shape_cast %70 : vector<1x4x5x80xf32> to vector<4x5x80xf32>
    %72 = arith.maximumf %69, %71 : vector<4x5x80xf32>
    %c1_98 = arith.constant 1 : index
    %c0_99 = arith.constant 0 : index
    %c1_100 = arith.constant 1 : index
    %c0_101 = arith.constant 0 : index
    %73 = vector.load %arg11[%c1_98, %c0_99, %c1_100, %c0_101] : memref<4x4x8x128xf32, #tpu.memory_space<vmem>>, vector<1x4x5x80xf32>
    %74 = vector.shape_cast %73 : vector<1x4x5x80xf32> to vector<4x5x80xf32>
    %75 = arith.maximumf %72, %74 : vector<4x5x80xf32>
    %c0_102 = arith.constant 0 : index
    %c0_103 = arith.constant 0 : index
    %c1_104 = arith.constant 1 : index
    %c16_105 = arith.constant 16 : index
    %76 = vector.load %arg11[%c0_102, %c0_103, %c1_104, %c16_105] : memref<4x4x8x128xf32, #tpu.memory_space<vmem>>, vector<1x4x5x80xf32>
    %77 = vector.shape_cast %76 : vector<1x4x5x80xf32> to vector<4x5x80xf32>
    %78 = arith.maximumf %75, %77 : vector<4x5x80xf32>
    %c2_106 = arith.constant 2 : index
    %c0_107 = arith.constant 0 : index
    %c0_108 = arith.constant 0 : index
    %c16_109 = arith.constant 16 : index
    %79 = vector.load %arg11[%c2_106, %c0_107, %c0_108, %c16_109] : memref<4x4x8x128xf32, #tpu.memory_space<vmem>>, vector<1x4x5x80xf32>
    %80 = vector.shape_cast %79 : vector<1x4x5x80xf32> to vector<4x5x80xf32>
    %c3_110 = arith.constant 3 : index
    %c0_111 = arith.constant 0 : index
    %c0_112 = arith.constant 0 : index
    %c16_113 = arith.constant 16 : index
    %81 = vector.load %arg11[%c3_110, %c0_111, %c0_112, %c16_113] : memref<4x4x8x128xf32, #tpu.memory_space<vmem>>, vector<1x4x5x80xf32>
    %82 = vector.shape_cast %81 : vector<1x4x5x80xf32> to vector<4x5x80xf32>
    %83 = arith.maximumf %80, %82 : vector<4x5x80xf32>
    %c0_114 = arith.constant 0 : index
    %c0_115 = arith.constant 0 : index
    %c1_116 = arith.constant 1 : index
    %c16_117 = arith.constant 16 : index
    %84 = vector.load %arg11[%c0_114, %c0_115, %c1_116, %c16_117] : memref<4x4x8x128xf32, #tpu.memory_space<vmem>>, vector<1x4x5x80xf32>
    %85 = vector.shape_cast %84 : vector<1x4x5x80xf32> to vector<4x5x80xf32>
    %86 = arith.maximumf %83, %85 : vector<4x5x80xf32>
    %c1_118 = arith.constant 1 : index
    %c0_119 = arith.constant 0 : index
    %c1_120 = arith.constant 1 : index
    %c16_121 = arith.constant 16 : index
    %87 = vector.load %arg11[%c1_118, %c0_119, %c1_120, %c16_121] : memref<4x4x8x128xf32, #tpu.memory_space<vmem>>, vector<1x4x5x80xf32>
    %88 = vector.shape_cast %87 : vector<1x4x5x80xf32> to vector<4x5x80xf32>
    %89 = arith.maximumf %86, %88 : vector<4x5x80xf32>
    %c3_122 = arith.constant 3 : index
    %c0_123 = arith.constant 0 : index
    %c0_124 = arith.constant 0 : index
    %c16_125 = arith.constant 16 : index
    %90 = vector.load %arg11[%c3_122, %c0_123, %c0_124, %c16_125] : memref<4x4x8x128xf32, #tpu.memory_space<vmem>>, vector<1x4x5x80xf32>
    %91 = vector.shape_cast %90 : vector<1x4x5x80xf32> to vector<4x5x80xf32>
    %c2_126 = arith.constant 2 : index
    %c0_127 = arith.constant 0 : index
    %c0_128 = arith.constant 0 : index
    %c32_129 = arith.constant 32 : index
    %92 = vector.load %arg11[%c2_126, %c0_127, %c0_128, %c32_129] : memref<4x4x8x128xf32, #tpu.memory_space<vmem>>, vector<1x4x5x80xf32>
    %93 = vector.shape_cast %92 : vector<1x4x5x80xf32> to vector<4x5x80xf32>
    %94 = arith.maximumf %91, %93 : vector<4x5x80xf32>
    %c1_130 = arith.constant 1 : index
    %c0_131 = arith.constant 0 : index
    %c1_132 = arith.constant 1 : index
    %c16_133 = arith.constant 16 : index
    %95 = vector.load %arg11[%c1_130, %c0_131, %c1_132, %c16_133] : memref<4x4x8x128xf32, #tpu.memory_space<vmem>>, vector<1x4x5x80xf32>
    %96 = vector.shape_cast %95 : vector<1x4x5x80xf32> to vector<4x5x80xf32>
    %97 = arith.maximumf %94, %96 : vector<4x5x80xf32>
    %c0_134 = arith.constant 0 : index
    %c0_135 = arith.constant 0 : index
    %c1_136 = arith.constant 1 : index
    %c32_137 = arith.constant 32 : index
    %98 = vector.load %arg11[%c0_134, %c0_135, %c1_136, %c32_137] : memref<4x4x8x128xf32, #tpu.memory_space<vmem>>, vector<1x4x5x80xf32>
    %99 = vector.shape_cast %98 : vector<1x4x5x80xf32> to vector<4x5x80xf32>
    %100 = arith.maximumf %97, %99 : vector<4x5x80xf32>
    %101 = tpu.concatenate %23, %34, %45, %56, %67, %78, %89, %100 in 2 : vector<4x5x80xf32>, vector<4x5x80xf32>, vector<4x5x80xf32>, vector<4x5x80xf32>, vector<4x5x80xf32>, vector<4x5x80xf32>, vector<4x5x80xf32>, vector<4x5x80xf32> -> vector<4x5x640xf32>
    %c0_138 = arith.constant 0 : index
    %c0_139 = arith.constant 0 : index
    %c0_140 = arith.constant 0 : index
    %102 = vector.load %arg12[%c0_138, %c0_139, %c0_140] : memref<4x8x1280xf32, #tpu.memory_space<vmem>>, vector<4x5x640xf32>
    tpu.vector_store %arg12[%c0_138, %c0_139, %c0_140], %101 {strides = array<i32>} : memref<4x8x1280xf32, #tpu.memory_space<vmem>>, vector<4x5x640xf32>,
    %c0_141 = arith.constant 0 : index
    %c0_142 = arith.constant 0 : index
    %c1_143 = arith.constant 1 : index
    %c0_144 = arith.constant 0 : index
    %103 = vector.load %arg11[%c0_141, %c0_142, %c1_143, %c0_144] : memref<4x4x8x128xf32, #tpu.memory_space<vmem>>, vector<1x4x5x80xf32>
    %104 = vector.shape_cast %103 : vector<1x4x5x80xf32> to vector<4x5x80xf32>
    %c1_145 = arith.constant 1 : index
    %c0_146 = arith.constant 0 : index
    %c1_147 = arith.constant 1 : index
    %c0_148 = arith.constant 0 : index
    %105 = vector.load %arg11[%c1_145, %c0_146, %c1_147, %c0_148] : memref<4x4x8x128xf32, #tpu.memory_space<vmem>>, vector<1x4x5x80xf32>
    %106 = vector.shape_cast %105 : vector<1x4x5x80xf32> to vector<4x5x80xf32>
    %107 = arith.maximumf %104, %106 : vector<4x5x80xf32>
    %c2_149 = arith.constant 2 : index
    %c0_150 = arith.constant 0 : index
    %c1_151 = arith.constant 1 : index
    %c0_152 = arith.constant 0 : index
    %108 = vector.load %arg11[%c2_149, %c0_150, %c1_151, %c0_152] : memref<4x4x8x128xf32, #tpu.memory_space<vmem>>, vector<1x4x5x80xf32>
    %109 = vector.shape_cast %108 : vector<1x4x5x80xf32> to vector<4x5x80xf32>
    %110 = arith.maximumf %107, %109 : vector<4x5x80xf32>
    %c3_153 = arith.constant 3 : index
    %c0_154 = arith.constant 0 : index
    %c1_155 = arith.constant 1 : index
    %c0_156 = arith.constant 0 : index
    %111 = vector.load %arg11[%c3_153, %c0_154, %c1_155, %c0_156] : memref<4x4x8x128xf32, #tpu.memory_space<vmem>>, vector<1x4x5x80xf32>
    %112 = vector.shape_cast %111 : vector<1x4x5x80xf32> to vector<4x5x80xf32>
    %113 = arith.maximumf %110, %112 : vector<4x5x80xf32>
    %c1_157 = arith.constant 1 : index
    %c0_158 = arith.constant 0 : index
    %c1_159 = arith.constant 1 : index
    %c0_160 = arith.constant 0 : index
    %114 = vector.load %arg11[%c1_157, %c0_158, %c1_159, %c0_160] : memref<4x4x8x128xf32, #tpu.memory_space<vmem>>, vector<1x4x5x80xf32>
    %115 = vector.shape_cast %114 : vector<1x4x5x80xf32> to vector<4x5x80xf32>
    %c0_161 = arith.constant 0 : index
    %c0_162 = arith.constant 0 : index
    %c1_163 = arith.constant 1 : index
    %c16_164 = arith.constant 16 : index
    %116 = vector.load %arg11[%c0_161, %c0_162, %c1_163, %c16_164] : memref<4x4x8x128xf32, #tpu.memory_space<vmem>>, vector<1x4x5x80xf32>
    %117 = vector.shape_cast %116 : vector<1x4x5x80xf32> to vector<4x5x80xf32>
    %118 = arith.maximumf %115, %117 : vector<4x5x80xf32>
    %c3_165 = arith.constant 3 : index
    %c0_166 = arith.constant 0 : index
    %c1_167 = arith.constant 1 : index
    %c0_168 = arith.constant 0 : index
    %119 = vector.load %arg11[%c3_165, %c0_166, %c1_167, %c0_168] : memref<4x4x8x128xf32, #tpu.memory_space<vmem>>, vector<1x4x5x80xf32>
    %120 = vector.shape_cast %119 : vector<1x4x5x80xf32> to vector<4x5x80xf32>
    %121 = arith.maximumf %118, %120 : vector<4x5x80xf32>
    %c2_169 = arith.constant 2 : index
    %c0_170 = arith.constant 0 : index
    %c1_171 = arith.constant 1 : index
    %c16_172 = arith.constant 16 : index
    %122 = vector.load %arg11[%c2_169, %c0_170, %c1_171, %c16_172] : memref<4x4x8x128xf32, #tpu.memory_space<vmem>>, vector<1x4x5x80xf32>
    %123 = vector.shape_cast %122 : vector<1x4x5x80xf32> to vector<4x5x80xf32>
    %124 = arith.maximumf %121, %123 : vector<4x5x80xf32>
    %c0_173 = arith.constant 0 : index
    %c0_174 = arith.constant 0 : index
    %c1_175 = arith.constant 1 : index
    %c16_176 = arith.constant 16 : index
    %125 = vector.load %arg11[%c0_173, %c0_174, %c1_175, %c16_176] : memref<4x4x8x128xf32, #tpu.memory_space<vmem>>, vector<1x4x5x80xf32>
    %126 = vector.shape_cast %125 : vector<1x4x5x80xf32> to vector<4x5x80xf32>
    %c1_177 = arith.constant 1 : index
    %c0_178 = arith.constant 0 : index
    %c1_179 = arith.constant 1 : index
    %c16_180 = arith.constant 16 : index
    %127 = vector.load %arg11[%c1_177, %c0_178, %c1_179, %c16_180] : memref<4x4x8x128xf32, #tpu.memory_space<vmem>>, vector<1x4x5x80xf32>
    %128 = vector.shape_cast %127 : vector<1x4x5x80xf32> to vector<4x5x80xf32>
    %129 = arith.maximumf %126, %128 : vector<4x5x80xf32>
    %c2_181 = arith.constant 2 : index
    %c0_182 = arith.constant 0 : index
    %c1_183 = arith.constant 1 : index
    %c16_184 = arith.constant 16 : index
    %130 = vector.load %arg11[%c2_181, %c0_182, %c1_183, %c16_184] : memref<4x4x8x128xf32, #tpu.memory_space<vmem>>, vector<1x4x5x80xf32>
    %131 = vector.shape_cast %130 : vector<1x4x5x80xf32> to vector<4x5x80xf32>
    %132 = arith.maximumf %129, %131 : vector<4x5x80xf32>
    %c3_185 = arith.constant 3 : index
    %c0_186 = arith.constant 0 : index
    %c1_187 = arith.constant 1 : index
    %c16_188 = arith.constant 16 : index
    %133 = vector.load %arg11[%c3_185, %c0_186, %c1_187, %c16_188] : memref<4x4x8x128xf32, #tpu.memory_space<vmem>>, vector<1x4x5x80xf32>
    %134 = vector.shape_cast %133 : vector<1x4x5x80xf32> to vector<4x5x80xf32>
    %135 = arith.maximumf %132, %134 : vector<4x5x80xf32>
    %c1_189 = arith.constant 1 : index
    %c0_190 = arith.constant 0 : index
    %c1_191 = arith.constant 1 : index
    %c16_192 = arith.constant 16 : index
    %136 = vector.load %arg11[%c1_189, %c0_190, %c1_191, %c16_192] : memref<4x4x8x128xf32, #tpu.memory_space<vmem>>, vector<1x4x5x80xf32>
    %137 = vector.shape_cast %136 : vector<1x4x5x80xf32> to vector<4x5x80xf32>
    %c0_193 = arith.constant 0 : index
    %c0_194 = arith.constant 0 : index
    %c1_195 = arith.constant 1 : index
    %c32_196 = arith.constant 32 : index
    %138 = vector.load %arg11[%c0_193, %c0_194, %c1_195, %c32_196] : memref<4x4x8x128xf32, #tpu.memory_space<vmem>>, vector<1x4x5x80xf32>
    %139 = vector.shape_cast %138 : vector<1x4x5x80xf32> to vector<4x5x80xf32>
    %140 = arith.maximumf %137, %139 : vector<4x5x80xf32>
    %c3_197 = arith.constant 3 : index
    %c0_198 = arith.constant 0 : index
    %c1_199 = arith.constant 1 : index
    %c16_200 = arith.constant 16 : index
    %141 = vector.load %arg11[%c3_197, %c0_198, %c1_199, %c16_200] : memref<4x4x8x128xf32, #tpu.memory_space<vmem>>, vector<1x4x5x80xf32>
    %142 = vector.shape_cast %141 : vector<1x4x5x80xf32> to vector<4x5x80xf32>
    %143 = arith.maximumf %140, %142 : vector<4x5x80xf32>
    %c2_201 = arith.constant 2 : index
    %c0_202 = arith.constant 0 : index
    %c1_203 = arith.constant 1 : index
    %c32_204 = arith.constant 32 : index
    %144 = vector.load %arg11[%c2_201, %c0_202, %c1_203, %c32_204] : memref<4x4x8x128xf32, #tpu.memory_space<vmem>>, vector<1x4x5x80xf32>
    %145 = vector.shape_cast %144 : vector<1x4x5x80xf32> to vector<4x5x80xf32>
    %146 = arith.maximumf %143, %145 : vector<4x5x80xf32>
    %c2_205 = arith.constant 2 : index
    %c0_206 = arith.constant 0 : index
    %c1_207 = arith.constant 1 : index
    %c0_208 = arith.constant 0 : index
    %147 = vector.load %arg11[%c2_205, %c0_206, %c1_207, %c0_208] : memref<4x4x8x128xf32, #tpu.memory_space<vmem>>, vector<1x4x5x80xf32>
    %148 = vector.shape_cast %147 : vector<1x4x5x80xf32> to vector<4x5x80xf32>
    %c3_209 = arith.constant 3 : index
    %c0_210 = arith.constant 0 : index
    %c1_211 = arith.constant 1 : index
    %c0_212 = arith.constant 0 : index
    %149 = vector.load %arg11[%c3_209, %c0_210, %c1_211, %c0_212] : memref<4x4x8x128xf32, #tpu.memory_space<vmem>>, vector<1x4x5x80xf32>
    %150 = vector.shape_cast %149 : vector<1x4x5x80xf32> to vector<4x5x80xf32>
    %151 = arith.maximumf %148, %150 : vector<4x5x80xf32>
    %c0_213 = arith.constant 0 : index
    %c0_214 = arith.constant 0 : index
    %c2_215 = arith.constant 2 : index
    %c0_216 = arith.constant 0 : index
    %152 = vector.load %arg11[%c0_213, %c0_214, %c2_215, %c0_216] : memref<4x4x8x128xf32, #tpu.memory_space<vmem>>, vector<1x4x5x80xf32>
    %153 = vector.shape_cast %152 : vector<1x4x5x80xf32> to vector<4x5x80xf32>
    %154 = arith.maximumf %151, %153 : vector<4x5x80xf32>
    %c1_217 = arith.constant 1 : index
    %c0_218 = arith.constant 0 : index
    %c2_219 = arith.constant 2 : index
    %c0_220 = arith.constant 0 : index
    %155 = vector.load %arg11[%c1_217, %c0_218, %c2_219, %c0_220] : memref<4x4x8x128xf32, #tpu.memory_space<vmem>>, vector<1x4x5x80xf32>
    %156 = vector.shape_cast %155 : vector<1x4x5x80xf32> to vector<4x5x80xf32>
    %157 = arith.maximumf %154, %156 : vector<4x5x80xf32>
    %c3_221 = arith.constant 3 : index
    %c0_222 = arith.constant 0 : index
    %c1_223 = arith.constant 1 : index
    %c0_224 = arith.constant 0 : index
    %158 = vector.load %arg11[%c3_221, %c0_222, %c1_223, %c0_224] : memref<4x4x8x128xf32, #tpu.memory_space<vmem>>, vector<1x4x5x80xf32>
    %159 = vector.shape_cast %158 : vector<1x4x5x80xf32> to vector<4x5x80xf32>
    %c2_225 = arith.constant 2 : index
    %c0_226 = arith.constant 0 : index
    %c1_227 = arith.constant 1 : index
    %c16_228 = arith.constant 16 : index
    %160 = vector.load %arg11[%c2_225, %c0_226, %c1_227, %c16_228] : memref<4x4x8x128xf32, #tpu.memory_space<vmem>>, vector<1x4x5x80xf32>
    %161 = vector.shape_cast %160 : vector<1x4x5x80xf32> to vector<4x5x80xf32>
    %162 = arith.maximumf %159, %161 : vector<4x5x80xf32>
    %c1_229 = arith.constant 1 : index
    %c0_230 = arith.constant 0 : index
    %c2_231 = arith.constant 2 : index
    %c0_232 = arith.constant 0 : index
    %163 = vector.load %arg11[%c1_229, %c0_230, %c2_231, %c0_232] : memref<4x4x8x128xf32, #tpu.memory_space<vmem>>, vector<1x4x5x80xf32>
    %164 = vector.shape_cast %163 : vector<1x4x5x80xf32> to vector<4x5x80xf32>
    %165 = arith.maximumf %162, %164 : vector<4x5x80xf32>
    %c0_233 = arith.constant 0 : index
    %c0_234 = arith.constant 0 : index
    %c2_235 = arith.constant 2 : index
    %c16_236 = arith.constant 16 : index
    %166 = vector.load %arg11[%c0_233, %c0_234, %c2_235, %c16_236] : memref<4x4x8x128xf32, #tpu.memory_space<vmem>>, vector<1x4x5x80xf32>
    %167 = vector.shape_cast %166 : vector<1x4x5x80xf32> to vector<4x5x80xf32>
    %168 = arith.maximumf %165, %167 : vector<4x5x80xf32>
    %c2_237 = arith.constant 2 : index
    %c0_238 = arith.constant 0 : index
    %c1_239 = arith.constant 1 : index
    %c16_240 = arith.constant 16 : index
    %169 = vector.load %arg11[%c2_237, %c0_238, %c1_239, %c16_240] : memref<4x4x8x128xf32, #tpu.memory_space<vmem>>, vector<1x4x5x80xf32>
    %170 = vector.shape_cast %169 : vector<1x4x5x80xf32> to vector<4x5x80xf32>
    %c3_241 = arith.constant 3 : index
    %c0_242 = arith.constant 0 : index
    %c1_243 = arith.constant 1 : index
    %c16_244 = arith.constant 16 : index
    %171 = vector.load %arg11[%c3_241, %c0_242, %c1_243, %c16_244] : memref<4x4x8x128xf32, #tpu.memory_space<vmem>>, vector<1x4x5x80xf32>
    %172 = vector.shape_cast %171 : vector<1x4x5x80xf32> to vector<4x5x80xf32>
    %173 = arith.maximumf %170, %172 : vector<4x5x80xf32>
    %c0_245 = arith.constant 0 : index
    %c0_246 = arith.constant 0 : index
    %c2_247 = arith.constant 2 : index
    %c16_248 = arith.constant 16 : index
    %174 = vector.load %arg11[%c0_245, %c0_246, %c2_247, %c16_248] : memref<4x4x8x128xf32, #tpu.memory_space<vmem>>, vector<1x4x5x80xf32>
    %175 = vector.shape_cast %174 : vector<1x4x5x80xf32> to vector<4x5x80xf32>
    %176 = arith.maximumf %173, %175 : vector<4x5x80xf32>
    %c1_249 = arith.constant 1 : index
    %c0_250 = arith.constant 0 : index
    %c2_251 = arith.constant 2 : index
    %c16_252 = arith.constant 16 : index
    %177 = vector.load %arg11[%c1_249, %c0_250, %c2_251, %c16_252] : memref<4x4x8x128xf32, #tpu.memory_space<vmem>>, vector<1x4x5x80xf32>
    %178 = vector.shape_cast %177 : vector<1x4x5x80xf32> to vector<4x5x80xf32>
    %179 = arith.maximumf %176, %178 : vector<4x5x80xf32>
    %c3_253 = arith.constant 3 : index
    %c0_254 = arith.constant 0 : index
    %c1_255 = arith.constant 1 : index
    %c16_256 = arith.constant 16 : index
    %180 = vector.load %arg11[%c3_253, %c0_254, %c1_255, %c16_256] : memref<4x4x8x128xf32, #tpu.memory_space<vmem>>, vector<1x4x5x80xf32>
    %181 = vector.shape_cast %180 : vector<1x4x5x80xf32> to vector<4x5x80xf32>
    %c2_257 = arith.constant 2 : index
    %c0_258 = arith.constant 0 : index
    %c1_259 = arith.constant 1 : index
    %c32_260 = arith.constant 32 : index
    %182 = vector.load %arg11[%c2_257, %c0_258, %c1_259, %c32_260] : memref<4x4x8x128xf32, #tpu.memory_space<vmem>>, vector<1x4x5x80xf32>
    %183 = vector.shape_cast %182 : vector<1x4x5x80xf32> to vector<4x5x80xf32>
    %184 = arith.maximumf %181, %183 : vector<4x5x80xf32>
    %c1_261 = arith.constant 1 : index
    %c0_262 = arith.constant 0 : index
    %c2_263 = arith.constant 2 : index
    %c16_264 = arith.constant 16 : index
    %185 = vector.load %arg11[%c1_261, %c0_262, %c2_263, %c16_264] : memref<4x4x8x128xf32, #tpu.memory_space<vmem>>, vector<1x4x5x80xf32>
    %186 = vector.shape_cast %185 : vector<1x4x5x80xf32> to vector<4x5x80xf32>
    %187 = arith.maximumf %184, %186 : vector<4x5x80xf32>
    %c0_265 = arith.constant 0 : index
    %c0_266 = arith.constant 0 : index
    %c2_267 = arith.constant 2 : index
    %c32_268 = arith.constant 32 : index
    %188 = vector.load %arg11[%c0_265, %c0_266, %c2_267, %c32_268] : memref<4x4x8x128xf32, #tpu.memory_space<vmem>>, vector<1x4x5x80xf32>
    %189 = vector.shape_cast %188 : vector<1x4x5x80xf32> to vector<4x5x80xf32>
    %190 = arith.maximumf %187, %189 : vector<4x5x80xf32>
    %191 = tpu.concatenate %113, %124, %135, %146, %157, %168, %179, %190 in 2 : vector<4x5x80xf32>, vector<4x5x80xf32>, vector<4x5x80xf32>, vector<4x5x80xf32>, vector<4x5x80xf32>, vector<4x5x80xf32>, vector<4x5x80xf32>, vector<4x5x80xf32> -> vector<4x5x640xf32>
    %c0_269 = arith.constant 0 : index
    %c0_270 = arith.constant 0 : index
    %c640 = arith.constant 640 : index
    %192 = vector.load %arg12[%c0_269, %c0_270, %c640] : memref<4x8x1280xf32, #tpu.memory_space<vmem>>, vector<4x5x640xf32>
    tpu.vector_store %arg12[%c0_269, %c0_270, %c640], %191 {strides = array<i32>} : memref<4x8x1280xf32, #tpu.memory_space<vmem>>, vector<4x5x640xf32>,
    %c0_271 = arith.constant 0 : index
    %c0_272 = arith.constant 0 : index
    %c0_273 = arith.constant 0 : index
    %193 = vector.load %arg12[%c0_271, %c0_272, %c0_273] : memref<4x8x1280xf32, #tpu.memory_space<vmem>>, vector<4x8x1280xf32>
    %194 = vector.shape_cast %193 : vector<4x8x1280xf32> to vector<32x1280xf32>
    %195 = arith.truncf %194 : vector<32x1280xf32> to vector<32x1280xbf16>
    %c0_274 = arith.constant 0 : index
    %c0_275 = arith.constant 0 : index
    %196 = vector.load %arg4[%c0_274, %c0_275] : memref<1280x160xbf16, #tpu.memory_space<vmem>>, vector<1280x160xbf16>
    %cst_276 = arith.constant dense<0.000000e+00> : vector<32x160xf32>
    %197 = tpu.matmul %195, %196, %cst_276 {dimension_numbers = #tpu.dot_dimension_numbers<[1], [0], [0], [1], [0, 0, 1, 1], [], []>} : vector<32x1280xbf16>, vector<1280x160xbf16>, vector<32x160xf32> -> vector<32x160xf32>
    %c0_277 = arith.constant 0 : index
    %c0_278 = arith.constant 0 : index
    %198 = vector.load %arg5[%c0_277, %c0_278] : memref<1x160xf32, #tpu.memory_space<vmem>>, vector<1x160xf32>
    %199 = vector.broadcast %198 : vector<1x160xf32> to vector<32x160xf32>
    %200 = arith.addf %197, %199 : vector<32x160xf32>
    %cst_279 = arith.constant 0.000000e+00 : f32
    %201 = vector.broadcast %cst_279 : f32 to vector<32x160xf32>
    %202 = arith.maximumf %200, %201 : vector<32x160xf32>
    %203 = vector.shape_cast %202 : vector<32x160xf32> to vector<4x8x160xf32>
    %204 = vector.extract_strided_slice %203 {offsets = [0, 0, 0], sizes = [4, 4, 128], strides = [1, 1, 1]} : vector<4x8x160xf32> to vector<4x4x128xf32>
    %205 = vector.extract_strided_slice %203 {offsets = [0, 0, 32], sizes = [4, 4, 128], strides = [1, 1, 1]} : vector<4x8x160xf32> to vector<4x4x128xf32>
    %206 = arith.maximumf %204, %205 : vector<4x4x128xf32>
    %207 = vector.extract_strided_slice %203 {offsets = [0, 1, 0], sizes = [4, 4, 128], strides = [1, 1, 1]} : vector<4x8x160xf32> to vector<4x4x128xf32>
    %208 = vector.extract_strided_slice %203 {offsets = [0, 1, 32], sizes = [4, 4, 128], strides = [1, 1, 1]} : vector<4x8x160xf32> to vector<4x4x128xf32>
    %209 = arith.maximumf %207, %208 : vector<4x4x128xf32>
    %210 = arith.maximumf %206, %209 : vector<4x4x128xf32>
    %211 = vector.extract_strided_slice %210 {offsets = [0, 0, 0], sizes = [4, 1, 128], strides = [1, 1, 1]} : vector<4x4x128xf32> to vector<4x1x128xf32>
    %212 = vector.shape_cast %211 : vector<4x1x128xf32> to vector<4x128xf32>
    %213 = arith.truncf %212 : vector<4x128xf32> to vector<4x128xbf16>
    %c0_280 = arith.constant 0 : index
    %c0_281 = arith.constant 0 : index
    %c0_282 = arith.constant 0 : index
    %214 = vector.load %arg6[%c0_280, %c0_281, %c0_282] : memref<4x128x32xbf16, #tpu.memory_space<vmem>>, vector<1x128x32xbf16>
    %215 = vector.shape_cast %214 : vector<1x128x32xbf16> to vector<128x32xbf16>
    %cst_283 = arith.constant dense<0.000000e+00> : vector<4x32xf32>
    %216 = tpu.matmul %213, %215, %cst_283 {dimension_numbers = #tpu.dot_dimension_numbers<[1], [0], [0], [1], [0, 0, 1, 1], [], []>} : vector<4x128xbf16>, vector<128x32xbf16>, vector<4x32xf32> -> vector<4x32xf32>
    %217 = vector.extract_strided_slice %210 {offsets = [0, 1, 0], sizes = [4, 1, 128], strides = [1, 1, 1]} : vector<4x4x128xf32> to vector<4x1x128xf32>
    %218 = vector.shape_cast %217 : vector<4x1x128xf32> to vector<4x128xf32>
    %219 = arith.truncf %218 : vector<4x128xf32> to vector<4x128xbf16>
    %c1_284 = arith.constant 1 : index
    %c0_285 = arith.constant 0 : index
    %c0_286 = arith.constant 0 : index
    %220 = vector.load %arg6[%c1_284, %c0_285, %c0_286] : memref<4x128x32xbf16, #tpu.memory_space<vmem>>, vector<1x128x32xbf16>
    %221 = vector.shape_cast %220 : vector<1x128x32xbf16> to vector<128x32xbf16>
    %cst_287 = arith.constant dense<0.000000e+00> : vector<4x32xf32>
    %222 = tpu.matmul %219, %221, %cst_287 {dimension_numbers = #tpu.dot_dimension_numbers<[1], [0], [0], [1], [0, 0, 1, 1], [], []>} : vector<4x128xbf16>, vector<128x32xbf16>, vector<4x32xf32> -> vector<4x32xf32>
    %223 = arith.addf %216, %222 : vector<4x32xf32>
    %224 = vector.extract_strided_slice %210 {offsets = [0, 2, 0], sizes = [4, 1, 128], strides = [1, 1, 1]} : vector<4x4x128xf32> to vector<4x1x128xf32>
    %225 = vector.shape_cast %224 : vector<4x1x128xf32> to vector<4x128xf32>
    %226 = arith.truncf %225 : vector<4x128xf32> to vector<4x128xbf16>
    %c2_288 = arith.constant 2 : index
    %c0_289 = arith.constant 0 : index
    %c0_290 = arith.constant 0 : index
    %227 = vector.load %arg6[%c2_288, %c0_289, %c0_290] : memref<4x128x32xbf16, #tpu.memory_space<vmem>>, vector<1x128x32xbf16>
    %228 = vector.shape_cast %227 : vector<1x128x32xbf16> to vector<128x32xbf16>
    %cst_291 = arith.constant dense<0.000000e+00> : vector<4x32xf32>
    %229 = tpu.matmul %226, %228, %cst_291 {dimension_numbers = #tpu.dot_dimension_numbers<[1], [0], [0], [1], [0, 0, 1, 1], [], []>} : vector<4x128xbf16>, vector<128x32xbf16>, vector<4x32xf32> -> vector<4x32xf32>
    %230 = arith.addf %223, %229 : vector<4x32xf32>
    %231 = vector.extract_strided_slice %210 {offsets = [0, 3, 0], sizes = [4, 1, 128], strides = [1, 1, 1]} : vector<4x4x128xf32> to vector<4x1x128xf32>
    %232 = vector.shape_cast %231 : vector<4x1x128xf32> to vector<4x128xf32>
    %233 = arith.truncf %232 : vector<4x128xf32> to vector<4x128xbf16>
    %c3_292 = arith.constant 3 : index
    %c0_293 = arith.constant 0 : index
    %c0_294 = arith.constant 0 : index
    %234 = vector.load %arg6[%c3_292, %c0_293, %c0_294] : memref<4x128x32xbf16, #tpu.memory_space<vmem>>, vector<1x128x32xbf16>
    %235 = vector.shape_cast %234 : vector<1x128x32xbf16> to vector<128x32xbf16>
    %cst_295 = arith.constant dense<0.000000e+00> : vector<4x32xf32>
    %236 = tpu.matmul %233, %235, %cst_295 {dimension_numbers = #tpu.dot_dimension_numbers<[1], [0], [0], [1], [0, 0, 1, 1], [], []>} : vector<4x128xbf16>, vector<128x32xbf16>, vector<4x32xf32> -> vector<4x32xf32>
    %237 = arith.addf %230, %236 : vector<4x32xf32>
    %c0_296 = arith.constant 0 : index
    %c0_297 = arith.constant 0 : index
    %238 = vector.load %arg7[%c0_296, %c0_297] : memref<1x32xf32, #tpu.memory_space<vmem>>, vector<1x32xf32>
    %239 = vector.broadcast %238 : vector<1x32xf32> to vector<4x32xf32>
    %240 = arith.addf %237, %239 : vector<4x32xf32>
    %cst_298 = arith.constant 0.000000e+00 : f32
    %241 = vector.broadcast %cst_298 : f32 to vector<4x32xf32>
    %242 = arith.maximumf %240, %241 : vector<4x32xf32>
    %243 = arith.truncf %242 : vector<4x32xf32> to vector<4x32xbf16>
    %c0_299 = arith.constant 0 : index
    %c0_300 = arith.constant 0 : index
    %244 = vector.load %arg8[%c0_299, %c0_300] : memref<32x10xbf16, #tpu.memory_space<vmem>>, vector<32x10xbf16>
    %cst_301 = arith.constant dense<0.000000e+00> : vector<4x10xf32>
    %245 = tpu.matmul %243, %244, %cst_301 {dimension_numbers = #tpu.dot_dimension_numbers<[1], [0], [0], [1], [0, 0, 1, 1], [], []>} : vector<4x32xbf16>, vector<32x10xbf16>, vector<4x10xf32> -> vector<4x10xf32>
    %c0_302 = arith.constant 0 : index
    %c0_303 = arith.constant 0 : index
    %246 = vector.load %arg9[%c0_302, %c0_303] : memref<1x10xf32, #tpu.memory_space<vmem>>, vector<1x10xf32>
    %247 = vector.broadcast %246 : vector<1x10xf32> to vector<4x10xf32>
    %248 = arith.addf %245, %247 : vector<4x10xf32>
    %c0_304 = arith.constant 0 : index
    %c0_305 = arith.constant 0 : index
    %c0_306 = arith.constant 0 : index
    %249 = vector.load %arg10[%c0_304, %c0_305, %c0_306] : memref<1x4x10xf32, #tpu.memory_space<vmem>>, vector<1x4x10xf32>
    %250 = vector.shape_cast %249 : vector<1x4x10xf32> to vector<4x10xf32>
    %251 = vector.shape_cast %248 : vector<4x10xf32> to vector<1x4x10xf32>
    tpu.vector_store %arg10[%c0_304, %c0_305, %c0_306], %251 {strides = array<i32>} : memref<1x4x10xf32, #tpu.memory_space<vmem>>, vector<1x4x10xf32>,
    return
  }
  func.func @transform_0(%arg0: i32) -> (i32, i32, i32, i32) {
    %c0_i32 = arith.constant 0 : i32
    %c0_i32_0 = arith.constant 0 : i32
    %c0_i32_1 = arith.constant 0 : i32
    %c0_i32_2 = arith.constant 0 : i32
    return %c0_i32, %arg0, %c0_i32_0, %c0_i32_1 : i32, i32, i32, i32
  }
  func.func @transform_1(%arg0: i32) -> (i32, i32) {
    %c0_i32 = arith.constant 0 : i32
    %c0_i32_0 = arith.constant 0 : i32
    %c0_i32_1 = arith.constant 0 : i32
    return %c0_i32, %c0_i32_0 : i32, i32
  }
  func.func @transform_2(%arg0: i32) -> (i32, i32) {
    %c0_i32 = arith.constant 0 : i32
    %c0_i32_0 = arith.constant 0 : i32
    %c0_i32_1 = arith.constant 0 : i32
    return %c0_i32, %c0_i32_0 : i32, i32
  }
  func.func @transform_3(%arg0: i32) -> (i32, i32) {
    %c0_i32 = arith.constant 0 : i32
    %c0_i32_0 = arith.constant 0 : i32
    %c0_i32_1 = arith.constant 0 : i32
    return %c0_i32, %c0_i32_0 : i32, i32
  }
  func.func @transform_4(%arg0: i32) -> (i32, i32) {
    %c0_i32 = arith.constant 0 : i32
    %c0_i32_0 = arith.constant 0 : i32
    %c0_i32_1 = arith.constant 0 : i32
    return %c0_i32, %c0_i32_0 : i32, i32
  }
  func.func @transform_5(%arg0: i32) -> (i32, i32, i32) {
    %c0_i32 = arith.constant 0 : i32
    %c0_i32_0 = arith.constant 0 : i32
    %c0_i32_1 = arith.constant 0 : i32
    %c0_i32_2 = arith.constant 0 : i32
    return %c0_i32, %c0_i32_0, %c0_i32_1 : i32, i32, i32
  }
  func.func @transform_6(%arg0: i32) -> (i32, i32) {
    %c0_i32 = arith.constant 0 : i32
    %c0_i32_0 = arith.constant 0 : i32
    %c0_i32_1 = arith.constant 0 : i32
    return %c0_i32, %c0_i32_0 : i32, i32
  }
  func.func @transform_7(%arg0: i32) -> (i32, i32) {
    %c0_i32 = arith.constant 0 : i32
    %c0_i32_0 = arith.constant 0 : i32
    %c0_i32_1 = arith.constant 0 : i32
    return %c0_i32, %c0_i32_0 : i32, i32
  }
  func.func @transform_8(%arg0: i32) -> (i32, i32) {
    %c0_i32 = arith.constant 0 : i32
    %c0_i32_0 = arith.constant 0 : i32
    %c0_i32_1 = arith.constant 0 : i32
    return %c0_i32, %c0_i32_0 : i32, i32
  }
  func.func @transform_9(%arg0: i32) -> (i32, i32, i32) {
    %c0_i32 = arith.constant 0 : i32
    %c0_i32_0 = arith.constant 0 : i32
    %c0_i32_1 = arith.constant 0 : i32
    return %arg0, %c0_i32, %c0_i32_0 : i32, i32, i32
  }
}

</mosaic_0001>

<llo_original>
// kernel: smallcnn_forward.1
$region0: #{smallcnn_forward.1}
  #allocation0 [shape = 'u32[]', space=smem, size = 0x4, offset = 0x4, fixed_abs, tag = 'smem constant byte address 0x4 - core index']
  #allocation1 [shape = 'u32[144,128]{1,0:T(1,128)}', space=vmem, size = 0x12000, scoped, tag = 'internal scratch']
  #allocation2 [shape = 'f32[4,4,8,128]{3,2,1,0:T(8,128)}', space=vmem, size = 0x10000, scoped, tag = 'scratch operand']
  #allocation3 [shape = 'f32[4,8,1280]{2,1,0:T(8,128)}', space=vmem, size = 0x28000, scoped, tag = 'scratch operand']
  %s0 = inlined_call_operand.vmem [shape: bf16[4,8,8,512], index: 0, kind: input, shape index: {}]
  %s1 = inlined_call_operand.vmem [shape: bf16[512,128], index: 1, kind: input, shape index: {}]
  %s2 = inlined_call_operand.vmem [shape: f32[1,128], index: 2, kind: input, shape index: {}]
  %s3 = inlined_call_operand.vmem [shape: bf16[1280,160], index: 3, kind: input, shape index: {}]
  %s4 = inlined_call_operand.vmem [shape: f32[1,160], index: 4, kind: input, shape index: {}]
  %s5 = inlined_call_operand.vmem [shape: bf16[4,128,32], index: 5, kind: input, shape index: {}]
  %s6 = inlined_call_operand.vmem [shape: f32[1,32], index: 6, kind: input, shape index: {}]
  %s7 = inlined_call_operand.vmem [shape: bf16[32,10], index: 7, kind: input, shape index: {}]
  %s8 = inlined_call_operand.vmem [shape: f32[1,10], index: 8, kind: input, shape index: {}]
  %s9 = inlined_call_operand.hbm [shape: f32[2,4,10], index: 9, kind: output, shape index: {}]
  %s10 = sld [smem:[#allocation0]]
  $region92: #{smallcnn_forward.1} parent=0
    _
  %s12 = ssub.s32 1, %s10
  %s13 = scalar_select 0, %s12, %s10
  $region1: #{smallcnn_forward.1} parent=0
    #allocation4 [shape = 'u8[262144]{0}', space=vmem, size = 0x40000, scoped, tag = 'input window, operand 0']
    #allocation5 [shape = 'u8[4096]{0}', space=vmem, size = 0x1000, scoped, tag = 'output window, operand 0']
    #allocation6 [shape = 's32[2]{0}', space=sflag, size = 0x8, scoped, tag = 'scoped memory for smallcnn_forward.1']
    %14 = vsyncpa [#allocation6], 0
    %s15 = scalar_lea.sflag [#allocation6], 1
    %16 = vsyncpa %s15, 0
    loop: start=0, step=1, limit=4
    $region2: #{smallcnn_forward.1} parent=1 // loop_pre_header
      _
    $region3: #{smallcnn_forward.1} parent=1 // loop_header
      %s18 = sphi 0, %s22
      %p19 = scmp.ge.s32.totalorder %s18, 4
      %s28 = sphi 0, %s30
      %s31 = sphi 0, %s28
      %s32 = sphi 0, %s31
      %s48 = sphi 0, %s32
      %s52 = sphi 0, %s52
      %s54 = sphi 0, %s52
      %s55 = sphi 0, %s54
      %s69 = sphi 0, %s55
      %s73 = sphi 0, %s73
      %s75 = sphi 0, %s73
      %s76 = sphi 0, %s75
      %s90 = sphi 0, %s76
      %s94 = sphi 0, %s94
      %s96 = sphi 0, %s94
      %s97 = sphi 0, %s96
      %s111 = sphi 0, %s97
      %s115 = sphi 0, %s115
      %s117 = sphi 0, %s115
      %s118 = sphi 0, %s117
      %s132 = sphi 0, %s118
      %s136 = sphi 0, %s136
      %s138 = sphi 0, %s136
      %s139 = sphi 0, %s138
      %s153 = sphi 0, %s139
      %s157 = sphi 0, %s157
      %s159 = sphi 0, %s157
      %s160 = sphi 0, %s159
      %s174 = sphi 0, %s160
      %s178 = sphi 0, %s178
      %s180 = sphi 0, %s178
      %s181 = sphi 0, %s180
      %s195 = sphi 0, %s181
      %s199 = sphi 0, %s199
      %s201 = sphi 0, %s199
      %s202 = sphi 0, %s201
      %s216 = sphi 0, %s202
      %s222 = sphi 0, %s224
      %s225 = sphi 0, %s222
      %s226 = sphi 0, %s225
      %s242 = sphi 0, %s226
    $region4: #{smallcnn_forward.1} parent=1 // loop_header_branch
      %21 = sbr.rel (%p19) target = $region8
    $region5: #{smallcnn_forward.1} parent=1 // loop_body
      %s23 = ssub.s32 %s18, 1
      %s24 = ssub.s32 %s18, 2
      %s25 = sadd.s32 %s18, 1
      %s26 = ssub.s32 %s18, %s25
      %p27 = scmp.eq.s32.totalorder %s26, 0
      %s29 = sadd.s32 %s28, 1
      %s30 = scalar_select %p27, %s28, %s29
      %p33 = pneg %p27
      %p34 = scmp.eq.s32.totalorder %s18, 1
      %p35 = por %p33, %p34
      %p36 = scmp.ne.s32.totalorder %s28, %s31
      %p37 = scmp.eq.s32.totalorder %s18, 0
      %p38 = por %p36, %p37
      %p39 = scmp.ne.s32.totalorder %s28, %s31
      %p40 = scmp.eq.s32.totalorder %s23, 1
      %p41 = por %p39, %p40
      %p42 = scmp.ne.s32.totalorder %s31, %s32
      %p43 = scmp.eq.s32.totalorder %s23, 0
      %p44 = por %p42, %p43
      %p45 = scmp.ne.s32.totalorder %s31, %s32
      %p46 = scmp.eq.s32.totalorder %s24, 1
      %p47 = por %p45, %p46
      %p49 = scmp.ne.s32.totalorder %s32, %s48
      %p50 = scmp.eq.s32.totalorder %s24, 0
      %p51 = por %p49, %p50
      %s53 = sadd.s32 %s52, 1
      %p56 = scmp.eq.s32.totalorder %s18, 1
      %p57 = scmp.ne.s32.totalorder %s52, %s54
      %p58 = scmp.eq.s32.totalorder %s18, 0
      %p59 = por %p57, %p58
      %p60 = scmp.ne.s32.totalorder %s52, %s54
      %p61 = scmp.eq.s32.totalorder %s23, 1
      %p62 = por %p60, %p61
      %p63 = scmp.ne.s32.totalorder %s54, %s55
      %p64 = scmp.eq.s32.totalorder %s23, 0
      %p65 = por %p63, %p64
      %p66 = scmp.ne.s32.totalorder %s54, %s55
      %p67 = scmp.eq.s32.totalorder %s24, 1
      %p68 = por %p66, %p67
      %p70 = scmp.ne.s32.totalorder %s55, %s69
      %p71 = scmp.eq.s32.totalorder %s24, 0
      %p72 = por %p70, %p71
      %s74 = sadd.s32 %s73, 1
      %p77 = scmp.eq.s32.totalorder %s18, 1
      %p78 = scmp.ne.s32.totalorder %s73, %s75
      %p79 = scmp.eq.s32.totalorder %s18, 0
      %p80 = por %p78, %p79
      %p81 = scmp.ne.s32.totalorder %s73, %s75
      %p82 = scmp.eq.s32.totalorder %s23, 1
      %p83 = por %p81, %p82
      %p84 = scmp.ne.s32.totalorder %s75, %s76
      %p85 = scmp.eq.s32.totalorder %s23, 0
      %p86 = por %p84, %p85
      %p87 = scmp.ne.s32.totalorder %s75, %s76
      %p88 = scmp.eq.s32.totalorder %s24, 1
      %p89 = por %p87, %p88
      %p91 = scmp.ne.s32.totalorder %s76, %s90
      %p92 = scmp.eq.s32.totalorder %s24, 0
      %p93 = por %p91, %p92
      %s95 = sadd.s32 %s94, 1
      %p98 = scmp.eq.s32.totalorder %s18, 1
      %p99 = scmp.ne.s32.totalorder %s94, %s96
      %p100 = scmp.eq.s32.totalorder %s18, 0
      %p101 = por %p99, %p100
      %p102 = scmp.ne.s32.totalorder %s94, %s96
      %p103 = scmp.eq.s32.totalorder %s23, 1
      %p104 = por %p102, %p103
      %p105 = scmp.ne.s32.totalorder %s96, %s97
      %p106 = scmp.eq.s32.totalorder %s23, 0
      %p107 = por %p105, %p106
      %p108 = scmp.ne.s32.totalorder %s96, %s97
      %p109 = scmp.eq.s32.totalorder %s24, 1
      %p110 = por %p108, %p109
      %p112 = scmp.ne.s32.totalorder %s97, %s111
      %p113 = scmp.eq.s32.totalorder %s24, 0
      %p114 = por %p112, %p113
      %s116 = sadd.s32 %s115, 1
      %p119 = scmp.eq.s32.totalorder %s18, 1
      %p120 = scmp.ne.s32.totalorder %s115, %s117
      %p121 = scmp.eq.s32.totalorder %s18, 0
      %p122 = por %p120, %p121
      %p123 = scmp.ne.s32.totalorder %s115, %s117
      %p124 = scmp.eq.s32.totalorder %s23, 1
      %p125 = por %p123, %p124
      %p126 = scmp.ne.s32.totalorder %s117, %s118
      %p127 = scmp.eq.s32.totalorder %s23, 0
      %p128 = por %p126, %p127
      %p129 = scmp.ne.s32.totalorder %s117, %s118
      %p130 = scmp.eq.s32.totalorder %s24, 1
      %p131 = por %p129, %p130
      %p133 = scmp.ne.s32.totalorder %s118, %s132
      %p134 = scmp.eq.s32.totalorder %s24, 0
      %p135 = por %p133, %p134
      %s137 = sadd.s32 %s136, 1
      %p140 = scmp.eq.s32.totalorder %s18, 1
      %p141 = scmp.ne.s32.totalorder %s136, %s138
      %p142 = scmp.eq.s32.totalorder %s18, 0
      %p143 = por %p141, %p142
      %p144 = scmp.ne.s32.totalorder %s136, %s138
      %p145 = scmp.eq.s32.totalorder %s23, 1
      %p146 = por %p144, %p145
      %p147 = scmp.ne.s32.totalorder %s138, %s139
      %p148 = scmp.eq.s32.totalorder %s23, 0
      %p149 = por %p147, %p148
      %p150 = scmp.ne.s32.totalorder %s138, %s139
      %p151 = scmp.eq.s32.totalorder %s24, 1
      %p152 = por %p150, %p151
      %p154 = scmp.ne.s32.totalorder %s139, %s153
      %p155 = scmp.eq.s32.totalorder %s24, 0
      %p156 = por %p154, %p155
      %s158 = sadd.s32 %s157, 1
      %p161 = scmp.eq.s32.totalorder %s18, 1
      %p162 = scmp.ne.s32.totalorder %s157, %s159
      %p163 = scmp.eq.s32.totalorder %s18, 0
      %p164 = por %p162, %p163
      %p165 = scmp.ne.s32.totalorder %s157, %s159
      %p166 = scmp.eq.s32.totalorder %s23, 1
      %p167 = por %p165, %p166
      %p168 = scmp.ne.s32.totalorder %s159, %s160
      %p169 = scmp.eq.s32.totalorder %s23, 0
      %p170 = por %p168, %p169
      %p171 = scmp.ne.s32.totalorder %s159, %s160
      %p172 = scmp.eq.s32.totalorder %s24, 1
      %p173 = por %p171, %p172
      %p175 = scmp.ne.s32.totalorder %s160, %s174
      %p176 = scmp.eq.s32.totalorder %s24, 0
      %p177 = por %p175, %p176
      %s179 = sadd.s32 %s178, 1
      %p182 = scmp.eq.s32.totalorder %s18, 1
      %p183 = scmp.ne.s32.totalorder %s178, %s180
      %p184 = scmp.eq.s32.totalorder %s18, 0
      %p185 = por %p183, %p184
      %p186 = scmp.ne.s32.totalorder %s178, %s180
      %p187 = scmp.eq.s32.totalorder %s23, 1
      %p188 = por %p186, %p187
      %p189 = scmp.ne.s32.totalorder %s180, %s181
      %p190 = scmp.eq.s32.totalorder %s23, 0
      %p191 = por %p189, %p190
      %p192 = scmp.ne.s32.totalorder %s180, %s181
      %p193 = scmp.eq.s32.totalorder %s24, 1
      %p194 = por %p192, %p193
      %p196 = scmp.ne.s32.totalorder %s181, %s195
      %p197 = scmp.eq.s32.totalorder %s24, 0
      %p198 = por %p196, %p197
      %s200 = sadd.s32 %s199, 1
      %p203 = scmp.eq.s32.totalorder %s18, 1
      %p204 = scmp.ne.s32.totalorder %s199, %s201
      %p205 = scmp.eq.s32.totalorder %s18, 0
      %p206 = por %p204, %p205
      %p207 = scmp.ne.s32.totalorder %s199, %s201
      %p208 = scmp.eq.s32.totalorder %s23, 1
      %p209 = por %p207, %p208
      %p210 = scmp.ne.s32.totalorder %s201, %s202
      %p211 = scmp.eq.s32.totalorder %s23, 0
      %p212 = por %p210, %p211
      %p213 = scmp.ne.s32.totalorder %s201, %s202
      %p214 = scmp.eq.s32.totalorder %s24, 1
      %p215 = por %p213, %p214
      %p217 = scmp.ne.s32.totalorder %s202, %s216
      %p218 = scmp.eq.s32.totalorder %s24, 0
      %p219 = por %p217, %p218
      %s220 = ssub.s32 %s18, %s25
      %p221 = scmp.eq.s32.totalorder %s220, 0
      %s223 = sadd.s32 %s222, 1
      %s224 = scalar_select %p221, %s222, %s223
      %p227 = pneg %p221
      %p228 = scmp.eq.s32.totalorder %s18, 1
      %p229 = por %p227, %p228
      %p230 = scmp.ne.s32.totalorder %s222, %s225
      %p231 = scmp.eq.s32.totalorder %s18, 0
      %p232 = por %p230, %p231
      %p233 = scmp.ne.s32.totalorder %s222, %s225
      %p234 = scmp.eq.s32.totalorder %s23, 1
      %p235 = por %p233, %p234
      %p236 = scmp.ne.s32.totalorder %s225, %s226
      %p237 = scmp.eq.s32.totalorder %s23, 0
      %p238 = por %p236, %p237
      %p239 = scmp.ne.s32.totalorder %s225, %s226
      %p240 = scmp.eq.s32.totalorder %s24, 1
      %p241 = por %p239, %p240
      %p243 = scmp.ne.s32.totalorder %s226, %s242
      %p244 = scmp.eq.s32.totalorder %s24, 0
      %p245 = por %p243, %p244
      %p246 = scmp.le.s32.totalorder 1, %s18
      %p247 = scmp.lt.s32.totalorder %s18, 3
      %p248 = pnand %p246, %p247
      %p249 = pneg %p248
      // Predicated region
      $region9: #{smallcnn_forward.1} parent=5 // pred_check
        _
      $region10: #{smallcnn_forward.1} parent=5 // pred_check_branch
        %251 = sbr.rel (%p248) target = $region12
      $region11: #{smallcnn_forward.1} parent=5 // pred_region
        %s252 = ssub.s32 %s18, 1
        // Predicated region
        $region13: #{smallcnn_forward.1} parent=11 // pred_check
          %p253 = pneg %p65
        $region14: #{smallcnn_forward.1} parent=11 // pred_check_branch
          %255 = sbr.rel (%p253) target = $region16
        $region15: #{smallcnn_forward.1} parent=11 // pred_region
          _
        $region16: #{smallcnn_forward.1} parent=11 // pred_fallthru
          _
        // Predicated region
        $region17: #{smallcnn_forward.1} parent=11 // pred_check
          %p256 = pneg %p86
        $region18: #{smallcnn_forward.1} parent=11 // pred_check_branch
          %258 = sbr.rel (%p256) target = $region20
        $region19: #{smallcnn_forward.1} parent=11 // pred_region
          _
        $region20: #{smallcnn_forward.1} parent=11 // pred_fallthru
          _
        // Predicated region
        $region21: #{smallcnn_forward.1} parent=11 // pred_check
          %p259 = pneg %p107
        $region22: #{smallcnn_forward.1} parent=11 // pred_check_branch
          %261 = sbr.rel (%p259) target = $region24
        $region23: #{smallcnn_forward.1} parent=11 // pred_region
          _
        $region24: #{smallcnn_forward.1} parent=11 // pred_fallthru
          _
        // Predicated region
        $region25: #{smallcnn_forward.1} parent=11 // pred_check
          %p262 = pneg %p128
        $region26: #{smallcnn_forward.1} parent=11 // pred_check_branch
          %264 = sbr.rel (%p262) target = $region28
        $region27: #{smallcnn_forward.1} parent=11 // pred_region
          _
        $region28: #{smallcnn_forward.1} parent=11 // pred_fallthru
          _
        // Predicated region
        $region29: #{smallcnn_forward.1} parent=11 // pred_check
          %p265 = pneg %p149
        $region30: #{smallcnn_forward.1} parent=11 // pred_check_branch
          %267 = sbr.rel (%p265) target = $region32
        $region31: #{smallcnn_forward.1} parent=11 // pred_region
          _
        $region32: #{smallcnn_forward.1} parent=11 // pred_fallthru
          _
        // Predicated region
        $region33: #{smallcnn_forward.1} parent=11 // pred_check
          %p268 = pneg %p170
        $region34: #{smallcnn_forward.1} parent=11 // pred_check_branch
          %270 = sbr.rel (%p268) target = $region36
        $region35: #{smallcnn_forward.1} parent=11 // pred_region
          _
        $region36: #{smallcnn_forward.1} parent=11 // pred_fallthru
          _
        // Predicated region
        $region37: #{smallcnn_forward.1} parent=11 // pred_check
          %p271 = pneg %p191
        $region38: #{smallcnn_forward.1} parent=11 // pred_check_branch
          %273 = sbr.rel (%p271) target = $region40
        $region39: #{smallcnn_forward.1} parent=11 // pred_region
          _
        $region40: #{smallcnn_forward.1} parent=11 // pred_fallthru
          _
        // Predicated region
        $region41: #{smallcnn_forward.1} parent=11 // pred_check
          %p274 = pneg %p212
        $region42: #{smallcnn_forward.1} parent=11 // pred_check_branch
          %276 = sbr.rel (%p274) target = $region44
        $region43: #{smallcnn_forward.1} parent=11 // pred_region
          _
        $region44: #{smallcnn_forward.1} parent=11 // pred_fallthru
          _
      $region12: #{smallcnn_forward.1} parent=5 // pred_fallthru
        _
      %p277 = scmp.lt.s32.totalorder %s18, 2
      // Predicated region
      $region45: #{smallcnn_forward.1} parent=5 // pred_check
        %p278 = pneg %p277
      $region46: #{smallcnn_forward.1} parent=5 // pred_check_branch
        %280 = sbr.rel (%p278) target = $region48
      $region47: #{smallcnn_forward.1} parent=5 // pred_region
        // Predicated region
        $region49: #{smallcnn_forward.1} parent=47 // pred_check
          %p281 = pneg %p38
        $region50: #{smallcnn_forward.1} parent=47 // pred_check_branch
          %283 = sbr.rel (%p281) target = $region52
        $region51: #{smallcnn_forward.1} parent=47 // pred_region
          %s284 = sand.u32 %s28, 1
          %s285 = sand.u32 %s28, 1
          %s286 = smul.addr %s285, 256
          %s287 = scalar_lea.vmem [#allocation4], %s286
          %s288 = smul.u32 4, %s18
          %s289 = smul.addr %s288, 4
          %s290 = smul.addr %s289, 4
          %s291 = scalar_lea.vmem %s0, %s290
          // Predicated region
          $region53: #{smallcnn_forward.1} parent=51 // pred_check
            _
          $region54: #{smallcnn_forward.1} parent=51 // pred_check_branch
            %293 = sbr.rel (0) target = $region56
          $region55: #{smallcnn_forward.1} parent=51 // pred_region
            // Predicated region
            $region57: #{smallcnn_forward.1} parent=55 // pred_check
              _
            $region58: #{smallcnn_forward.1} parent=55 // pred_check_branch
              %295 = sbr.rel (0) target = $region60
            $region59: #{smallcnn_forward.1} parent=55 // pred_region
              loop: start=0, step=1, limit=1
              $region61: #{smallcnn_forward.1} parent=59 // loop_pre_header
                _
              $region62: #{smallcnn_forward.1} parent=59 // loop_header
                %s297 = sphi 0, %s301
                %p298 = scmp.ge.s32.totalorder %s297, 1
                %s302 = sphi %s291, %s291
                %s303 = sphi %s287, %s287
              $region63: #{smallcnn_forward.1} parent=59 // loop_header_branch
                %300 = sbr.rel (%p298) target = $region67
              $region64: #{smallcnn_forward.1} parent=59 // loop_body
                %v304 = vld [vmem:[%s302] sm:$0xff]
                %305 = vst [vmem:[%s303] sm:$0xff] %v304
                %v306 = vld [vmem:[%s302 + $0x8] sm:$0xff]
                %307 = vst [vmem:[%s303 + $0x8] sm:$0xff] %v306
                %v308 = vld [vmem:[%s302 + $0x10] sm:$0xff]
                %309 = vst [vmem:[%s303 + $0x10] sm:$0xff] %v308
                %v310 = vld [vmem:[%s302 + $0x18] sm:$0xff]
                %311 = vst [vmem:[%s303 + $0x18] sm:$0xff] %v310
                %v312 = vld [vmem:[%s302 + $0x20] sm:$0xff]
                %313 = vst [vmem:[%s303 + $0x20] sm:$0xff] %v312
                %v314 = vld [vmem:[%s302 + $0x28] sm:$0xff]
                %315 = vst [vmem:[%s303 + $0x28] sm:$0xff] %v314
                %v316 = vld [vmem:[%s302 + $0x30] sm:$0xff]
                %317 = vst [vmem:[%s303 + $0x30] sm:$0xff] %v316
                %v318 = vld [vmem:[%s302 + $0x38] sm:$0xff]
                %319 = vst [vmem:[%s303 + $0x38] sm:$0xff] %v318
                %v320 = vld [vmem:[%s302 + $0x80] sm:$0xff]
                %321 = vst [vmem:[%s303 + $0x40] sm:$0xff] %v320
                %v322 = vld [vmem:[%s302 + $0x88] sm:$0xff]
                %323 = vst [vmem:[%s303 + $0x48] sm:$0xff] %v322
                %v324 = vld [vmem:[%s302 + $0x90] sm:$0xff]
                %325 = vst [vmem:[%s303 + $0x50] sm:$0xff] %v324
                %v326 = vld [vmem:[%s302 + $0x98] sm:$0xff]
                %327 = vst [vmem:[%s303 + $0x58] sm:$0xff] %v326
                %v328 = vld [vmem:[%s302 + $0xa0] sm:$0xff]
                %329 = vst [vmem:[%s303 + $0x60] sm:$0xff] %v328
                %v330 = vld [vmem:[%s302 + $0xa8] sm:$0xff]
                %331 = vst [vmem:[%s303 + $0x68] sm:$0xff] %v330
                %v332 = vld [vmem:[%s302 + $0xb0] sm:$0xff]
                %333 = vst [vmem:[%s303 + $0x70] sm:$0xff] %v332
                %v334 = vld [vmem:[%s302 + $0xb8] sm:$0xff]
                %335 = vst [vmem:[%s303 + $0x78] sm:$0xff] %v334
                %v336 = vld [vmem:[%s302 + $0x100] sm:$0xff]
                %337 = vst [vmem:[%s303 + $0x80] sm:$0xff] %v336
                %v338 = vld [vmem:[%s302 + $0x108] sm:$0xff]
                %339 = vst [vmem:[%s303 + $0x88] sm:$0xff] %v338
                %v340 = vld [vmem:[%s302 + $0x110] sm:$0xff]
                %341 = vst [vmem:[%s303 + $0x90] sm:$0xff] %v340
                %v342 = vld [vmem:[%s302 + $0x118] sm:$0xff]
                %343 = vst [vmem:[%s303 + $0x98] sm:$0xff] %v342
                %v344 = vld [vmem:[%s302 + $0x120] sm:$0xff]
                %345 = vst [vmem:[%s303 + $0xa0] sm:$0xff] %v344
                %v346 = vld [vmem:[%s302 + $0x128] sm:$0xff]
                %347 = vst [vmem:[%s303 + $0xa8] sm:$0xff] %v346
                %v348 = vld [vmem:[%s302 + $0x130] sm:$0xff]
                %349 = vst [vmem:[%s303 + $0xb0] sm:$0xff] %v348
                %v350 = vld [vmem:[%s302 + $0x138] sm:$0xff]
                %351 = vst [vmem:[%s303 + $0xb8] sm:$0xff] %v350
                %v352 = vld [vmem:[%s302 + $0x180] sm:$0xff]
                %353 = vst [vmem:[%s303 + $0xc0] sm:$0xff] %v352
                %v354 = vld [vmem:[%s302 + $0x188] sm:$0xff]
                %355 = vst [vmem:[%s303 + $0xc8] sm:$0xff] %v354
                %v356 = vld [vmem:[%s302 + $0x190] sm:$0xff]
                %357 = vst [vmem:[%s303 + $0xd0] sm:$0xff] %v356
                %v358 = vld [vmem:[%s302 + $0x198] sm:$0xff]
                %359 = vst [vmem:[%s303 + $0xd8] sm:$0xff] %v358
                %v360 = vld [vmem:[%s302 + $0x1a0] sm:$0xff]
                %361 = vst [vmem:[%s303 + $0xe0] sm:$0xff] %v360
                %v362 = vld [vmem:[%s302 + $0x1a8] sm:$0xff]
                %363 = vst [vmem:[%s303 + $0xe8] sm:$0xff] %v362
                %v364 = vld [vmem:[%s302 + $0x1b0] sm:$0xff]
                %365 = vst [vmem:[%s303 + $0xf0] sm:$0xff] %v364
                %v366 = vld [vmem:[%s302 + $0x1b8] sm:$0xff]
                %367 = vst [vmem:[%s303 + $0xf8] sm:$0xff] %v366
              $region65: #{smallcnn_forward.1} parent=59 // loop_footer
                %s301 = sadd.s32 1, %s297
              $region66: #{smallcnn_forward.1} parent=59 // loop_footer_branch
                %296 = sbr.rel target = $region62
              $region67: #{smallcnn_forward.1} parent=59 // loop_exit
                _
            $region60: #{smallcnn_forward.1} parent=55 // pred_fallthru
              _
            // Predicated region
            $region68: #{smallcnn_forward.1} parent=55 // pred_check
              _
            $region69: #{smallcnn_forward.1} parent=55 // pred_check_branch
              %369 = sbr.rel target = $region71
            $region70: #{smallcnn_forward.1} parent=55 // pred_region
              _
            $region71: #{smallcnn_forward.1} parent=55 // pred_fallthru
              _
          $region56: #{smallcnn_forward.1} parent=51 // pred_fallthru
            _
          %370 = vnop
        $region52: #{smallcnn_forward.1} parent=47 // pred_fallthru
          _
      $region48: #{smallcnn_forward.1} parent=5 // pred_fallthru
        _
      %p371 = scmp.le.s32.totalorder 1, %s18
      %p372 = scmp.lt.s32.totalorder %s18, 3
      %p373 = pnand %p371, %p372
      %p374 = pneg %p373
      // Predicated region
      $region72: #{smallcnn_forward.1} parent=5 // pred_check
        _
      $region73: #{smallcnn_forward.1} parent=5 // pred_check_branch
        %376 = sbr.rel (%p373) target = $region75
      $region74: #{smallcnn_forward.1} parent=5 // pred_region
        %s377 = ssub.s32 %s18, 1
        %s378 = sand.u32 %s31, 1
        %s379 = sand.u32 %s31, 1
        %s380 = smul.addr %s379, 256
        %s381 = scalar_lea.vmem [#allocation4], %s380
        // Predicated region
        $region76: #{smallcnn_forward.1} parent=74 // pred_check
          %p382 = pneg %p44
        $region77: #{smallcnn_forward.1} parent=74 // pred_check_branch
          %384 = sbr.rel (%p382) target = $region79
        $region78: #{smallcnn_forward.1} parent=74 // pred_region
          _
        $region79: #{smallcnn_forward.1} parent=74 // pred_fallthru
          _
        %s385 = sand.u32 %s31, 1
        %s386 = sand.u32 %s31, 1
        %s387 = smul.addr %s386, 256
        %s388 = scalar_lea.vmem [#allocation4], %s387
        %p389 = pneg %p44
        %p390 = pneg %p41
        %p391 = pneg %p65
        %p392 = pneg %p62
        %p393 = pneg %p86
        %p394 = pneg %p83
        %p395 = pneg %p107
        %p396 = pneg %p104
        %p397 = pneg %p128
        %p398 = pneg %p125
        %p399 = pneg %p149
        %p400 = pneg %p146
        %p401 = pneg %p170
        %p402 = pneg %p167
        %p403 = pneg %p191
        %p404 = pneg %p188
        %p405 = pneg %p212
        %p406 = pneg %p209
        %p407 = pneg %p238
        %p408 = pneg %p235
        %s409 = sand.u32 %s225, 1
        %s410 = scalar_lea.sflag [#allocation6], %s409
        %s411 = sand.u32 %s225, 1
        %s412 = smul.addr %s411, 4
        %s413 = scalar_lea.vmem [#allocation5], %s412
        %s414 = smul.u32 4, %s23
        %v416 = vld [vmem:[%s381] sm:$0xff]
        %v417 = vld [vmem:[%s381 + $0x8] sm:$0xff]
        %v418 = vld [vmem:[%s381 + $0x10] sm:$0xff]
        %v419 = vld [vmem:[%s381 + $0x18] sm:$0xff]
        %v420 = vld [vmem:[%s381 + $0x20] sm:$0xff]
        %v421 = vld [vmem:[%s381 + $0x28] sm:$0xff]
        %v422 = vld [vmem:[%s381 + $0x30] sm:$0xff]
        %v423 = vld [vmem:[%s381 + $0x38] sm:$0xff]
        %v424 = vld [vmem:[%s381 + $0x40] sm:$0xff]
        %v425 = vld [vmem:[%s381 + $0x48] sm:$0xff]
        %v426 = vld [vmem:[%s381 + $0x50] sm:$0xff]
        %v427 = vld [vmem:[%s381 + $0x58] sm:$0xff]
        %v428 = vld [vmem:[%s381 + $0x60] sm:$0xff]
        %v429 = vld [vmem:[%s381 + $0x68] sm:$0xff]
        %v430 = vld [vmem:[%s381 + $0x70] sm:$0xff]
        %v431 = vld [vmem:[%s381 + $0x78] sm:$0xff]
        %v432 = vld [vmem:[%s381 + $0x80] sm:$0xff]
        %v433 = vld [vmem:[%s381 + $0x88] sm:$0xff]
        %v434 = vld [vmem:[%s381 + $0x90] sm:$0xff]
        %v435 = vld [vmem:[%s381 + $0x98] sm:$0xff]
        %v436 = vld [vmem:[%s381 + $0xa0] sm:$0xff]
        %v437 = vld [vmem:[%s381 + $0xa8] sm:$0xff]
        %v438 = vld [vmem:[%s381 + $0xb0] sm:$0xff]
        %v439 = vld [vmem:[%s381 + $0xb8] sm:$0xff]
        %v440 = vld [vmem:[%s381 + $0xc0] sm:$0xff]
        %v441 = vld [vmem:[%s381 + $0xc8] sm:$0xff]
        %v442 = vld [vmem:[%s381 + $0xd0] sm:$0xff]
        %v443 = vld [vmem:[%s381 + $0xd8] sm:$0xff]
        %v444 = vld [vmem:[%s381 + $0xe0] sm:$0xff]
        %v445 = vld [vmem:[%s381 + $0xe8] sm:$0xff]
        %v446 = vld [vmem:[%s381 + $0xf0] sm:$0xff]
        %v447 = vld [vmem:[%s381 + $0xf8] sm:$0xff]
        %v448 = vld [vmem:[%s1] sm:$0xf]
        %v449 = vld [vmem:[%s1 + $0x4] sm:$0xf]
        %v450 = vld [vmem:[%s1 + $0x8] sm:$0xf]
        %v451 = vld [vmem:[%s1 + $0xc] sm:$0xf]
        %v452 = vld [vmem:[%s1 + $0x10] sm:$0xf]
        %v453 = vld [vmem:[%s1 + $0x14] sm:$0xf]
        %v454 = vld [vmem:[%s1 + $0x18] sm:$0xf]
        %v455 = vld [vmem:[%s1 + $0x1c] sm:$0xf]
        %v456 = vld [vmem:[%s1 + $0x20] sm:$0xf]
        %v457 = vld [vmem:[%s1 + $0x24] sm:$0xf]
        %v458 = vld [vmem:[%s1 + $0x28] sm:$0xf]
        %v459 = vld [vmem:[%s1 + $0x2c] sm:$0xf]
        %v460 = vld [vmem:[%s1 + $0x30] sm:$0xf]
        %v461 = vld [vmem:[%s1 + $0x34] sm:$0xf]
        %v462 = vld [vmem:[%s1 + $0x38] sm:$0xf]
        %v463 = vld [vmem:[%s1 + $0x3c] sm:$0xf]
        %v464 = vld [vmem:[%s1 + $0x40] sm:$0xf]
        %v465 = vld [vmem:[%s1 + $0x44] sm:$0xf]
        %v466 = vld [vmem:[%s1 + $0x48] sm:$0xf]
        %v467 = vld [vmem:[%s1 + $0x4c] sm:$0xf]
        %v468 = vld [vmem:[%s1 + $0x50] sm:$0xf]
        %v469 = vld [vmem:[%s1 + $0x54] sm:$0xf]
        %v470 = vld [vmem:[%s1 + $0x58] sm:$0xf]
        %v471 = vld [vmem:[%s1 + $0x5c] sm:$0xf]
        %v472 = vld [vmem:[%s1 + $0x60] sm:$0xf]
        %v473 = vld [vmem:[%s1 + $0x64] sm:$0xf]
        %v474 = vld [vmem:[%s1 + $0x68] sm:$0xf]
        %v475 = vld [vmem:[%s1 + $0x6c] sm:$0xf]
        %v476 = vld [vmem:[%s1 + $0x70] sm:$0xf]
        %v477 = vld [vmem:[%s1 + $0x74] sm:$0xf]
        %v478 = vld [vmem:[%s1 + $0x78] sm:$0xf]
        %v479 = vld [vmem:[%s1 + $0x7c] sm:$0xf]
        %v480 = vld [vmem:[%s1 + $0x80] sm:$0xf]
        %v481 = vld [vmem:[%s1 + $0x84] sm:$0xf]
        %v482 = vld [vmem:[%s1 + $0x88] sm:$0xf]
        %v483 = vld [vmem:[%s1 + $0x8c] sm:$0xf]
        %v484 = vld [vmem:[%s1 + $0x90] sm:$0xf]
        %v485 = vld [vmem:[%s1 + $0x94] sm:$0xf]
        %v486 = vld [vmem:[%s1 + $0x98] sm:$0xf]
        %v487 = vld [vmem:[%s1 + $0x9c] sm:$0xf]
        %v488 = vld [vmem:[%s1 + $0xa0] sm:$0xf]
        %v489 = vld [vmem:[%s1 + $0xa4] sm:$0xf]
        %v490 = vld [vmem:[%s1 + $0xa8] sm:$0xf]
        %v491 = vld [vmem:[%s1 + $0xac] sm:$0xf]
        %v492 = vld [vmem:[%s1 + $0xb0] sm:$0xf]
        %v493 = vld [vmem:[%s1 + $0xb4] sm:$0xf]
        %v494 = vld [vmem:[%s1 + $0xb8] sm:$0xf]
        %v495 = vld [vmem:[%s1 + $0xbc] sm:$0xf]
        %v496 = vld [vmem:[%s1 + $0xc0] sm:$0xf]
        %v497 = vld [vmem:[%s1 + $0xc4] sm:$0xf]
        %v498 = vld [vmem:[%s1 + $0xc8] sm:$0xf]
        %v499 = vld [vmem:[%s1 + $0xcc] sm:$0xf]
        %v500 = vld [vmem:[%s1 + $0xd0] sm:$0xf]
        %v501 = vld [vmem:[%s1 + $0xd4] sm:$0xf]
        %v502 = vld [vmem:[%s1 + $0xd8] sm:$0xf]
        %v503 = vld [vmem:[%s1 + $0xdc] sm:$0xf]
        %v504 = vld [vmem:[%s1 + $0xe0] sm:$0xf]
        %v505 = vld [vmem:[%s1 + $0xe4] sm:$0xf]
        %v506 = vld [vmem:[%s1 + $0xe8] sm:$0xf]
        %v507 = vld [vmem:[%s1 + $0xec] sm:$0xf]
        %v508 = vld [vmem:[%s1 + $0xf0] sm:$0xf]
        %v509 = vld [vmem:[%s1 + $0xf4] sm:$0xf]
        %v510 = vld [vmem:[%s1 + $0xf8] sm:$0xf]
        %v511 = vld [vmem:[%s1 + $0xfc] sm:$0xf]
        %v512 = vld [vmem:[%s2] sm:$0x1]
        %v514 = vlaneseq
        %v515 = vshrl.u32 %v514, 7
        %v516 = vsub.s32 0, %v515
        %v517 = vrot.slane %v512, %v516
        %v551 = vunpack.c.l.b16 %v416
        %v552 = vunpack.c.h.b16 %v416
        %v553 = vunpack.c.l.b16 %v417
        %v554 = vunpack.c.h.b16 %v417
        %v555 = vunpack.c.l.b16 %v418
        %v556 = vunpack.c.h.b16 %v418
        %v557 = vunpack.c.l.b16 %v419
        %v558 = vunpack.c.h.b16 %v419
        %v559 = vunpack.c.l.b16 %v420
        %v560 = vunpack.c.h.b16 %v420
        %v561 = vunpack.c.l.b16 %v421
        %v562 = vunpack.c.h.b16 %v421
        %v563 = vunpack.c.l.b16 %v422
        %v564 = vunpack.c.h.b16 %v422
        %v565 = vunpack.c.l.b16 %v423
        %v566 = vunpack.c.h.b16 %v423
        %v567 = vunpack.c.l.b16 %v424
        %v568 = vunpack.c.h.b16 %v424
        %v569 = vunpack.c.l.b16 %v425
        %v570 = vunpack.c.h.b16 %v425
        %v571 = vunpack.c.l.b16 %v426
        %v572 = vunpack.c.h.b16 %v426
        %v573 = vunpack.c.l.b16 %v427
        %v574 = vunpack.c.h.b16 %v427
        %v575 = vunpack.c.l.b16 %v428
        %v576 = vunpack.c.h.b16 %v428
        %v577 = vunpack.c.l.b16 %v429
        %v578 = vunpack.c.h.b16 %v429
        %v579 = vunpack.c.l.b16 %v430
        %v580 = vunpack.c.h.b16 %v430
        %v581 = vunpack.c.l.b16 %v431
        %v582 = vunpack.c.h.b16 %v431
        %v583 = vunpack.c.l.b16 %v432
        %v584 = vunpack.c.h.b16 %v432
        %v585 = vunpack.c.l.b16 %v433
        %v586 = vunpack.c.h.b16 %v433
        %v587 = vunpack.c.l.b16 %v434
        %v588 = vunpack.c.h.b16 %v434
        %v589 = vunpack.c.l.b16 %v435
        %v590 = vunpack.c.h.b16 %v435
        %v591 = vunpack.c.l.b16 %v436
        %v592 = vunpack.c.h.b16 %v436
        %v593 = vunpack.c.l.b16 %v437
        %v594 = vunpack.c.h.b16 %v437
        %v595 = vunpack.c.l.b16 %v438
        %v596 = vunpack.c.h.b16 %v438
        %v597 = vunpack.c.l.b16 %v439
        %v598 = vunpack.c.h.b16 %v439
        %v599 = vunpack.c.l.b16 %v440
        %v600 = vunpack.c.h.b16 %v440
        %v601 = vunpack.c.l.b16 %v441
        %v602 = vunpack.c.h.b16 %v441
        %v603 = vunpack.c.l.b16 %v442
        %v604 = vunpack.c.h.b16 %v442
        %v605 = vunpack.c.l.b16 %v443
        %v606 = vunpack.c.h.b16 %v443
        %v607 = vunpack.c.l.b16 %v444
        %v608 = vunpack.c.h.b16 %v444
        %v609 = vunpack.c.l.b16 %v445
        %v610 = vunpack.c.h.b16 %v445
        %v611 = vunpack.c.l.b16 %v446
        %v612 = vunpack.c.h.b16 %v446
        %v613 = vunpack.c.l.b16 %v447
        %v614 = vunpack.c.h.b16 %v447
        %v615 = vpack.c.b16 %v555, %v551
        %v616 = vpack.c.b16 %v556, %v552
        %v617 = vpack.c.b16 %v557, %v553
        %v618 = vpack.c.b16 %v558, %v554
        %v619 = vpack.c.b16 %v563, %v559
        %v620 = vpack.c.b16 %v564, %v560
        %v621 = vpack.c.b16 %v565, %v561
        %v622 = vpack.c.b16 %v566, %v562
        %v623 = vpack.c.b16 %v571, %v567
        %v624 = vpack.c.b16 %v572, %v568
        %v625 = vpack.c.b16 %v573, %v569
        %v626 = vpack.c.b16 %v574, %v570
        %v627 = vpack.c.b16 %v579, %v575
        %v628 = vpack.c.b16 %v580, %v576
        %v629 = vpack.c.b16 %v581, %v577
        %v630 = vpack.c.b16 %v582, %v578
        %v631 = vpack.c.b16 %v587, %v583
        %v632 = vpack.c.b16 %v588, %v584
        %v633 = vpack.c.b16 %v589, %v585
        %v634 = vpack.c.b16 %v590, %v586
        %v635 = vpack.c.b16 %v595, %v591
        %v636 = vpack.c.b16 %v596, %v592
        %v637 = vpack.c.b16 %v597, %v593
        %v638 = vpack.c.b16 %v598, %v594
        %v639 = vpack.c.b16 %v603, %v599
        %v640 = vpack.c.b16 %v604, %v600
        %v641 = vpack.c.b16 %v605, %v601
        %v642 = vpack.c.b16 %v606, %v602
        %v643 = vpack.c.b16 %v611, %v607
        %v644 = vpack.c.b16 %v612, %v608
        %v645 = vpack.c.b16 %v613, %v609
        %v646 = vpack.c.b16 %v614, %v610
        %v743 = vunpack.c.l.b16 %v448
        %v744 = vunpack.c.l.b16 %v449
        %v745 = vunpack.c.l.b16 %v450
        %v746 = vunpack.c.l.b16 %v451
        %v747 = vunpack.c.l.b16 %v452
        %v748 = vunpack.c.l.b16 %v453
        %v749 = vunpack.c.l.b16 %v454
        %v750 = vunpack.c.l.b16 %v455
        %v751 = vunpack.c.l.b16 %v456
        %v752 = vunpack.c.l.b16 %v457
        %v753 = vunpack.c.l.b16 %v458
        %v754 = vunpack.c.l.b16 %v459
        %v755 = vunpack.c.l.b16 %v460
        %v756 = vunpack.c.l.b16 %v461
        %v757 = vunpack.c.l.b16 %v462
        %v758 = vunpack.c.l.b16 %v463
        %v759 = vunpack.c.l.b16 %v464
        %v760 = vunpack.c.l.b16 %v465
        %v761 = vunpack.c.l.b16 %v466
        %v762 = vunpack.c.l.b16 %v467
        %v763 = vunpack.c.l.b16 %v468
        %v764 = vunpack.c.l.b16 %v469
        %v765 = vunpack.c.l.b16 %v470
        %v766 = vunpack.c.l.b16 %v471
        %v767 = vunpack.c.l.b16 %v472
        %v768 = vunpack.c.l.b16 %v473
        %v769 = vunpack.c.l.b16 %v474
        %v770 = vunpack.c.l.b16 %v475
        %v771 = vunpack.c.l.b16 %v476
        %v772 = vunpack.c.l.b16 %v477
        %v773 = vunpack.c.l.b16 %v478
        %v774 = vunpack.c.l.b16 %v479
        %v775 = vunpack.c.l.b16 %v480
        %v776 = vunpack.c.l.b16 %v481
        %v777 = vunpack.c.l.b16 %v482
        %v778 = vunpack.c.l.b16 %v483
        %v779 = vunpack.c.l.b16 %v484
        %v780 = vunpack.c.l.b16 %v485
        %v781 = vunpack.c.l.b16 %v486
        %v782 = vunpack.c.l.b16 %v487
        %v783 = vunpack.c.l.b16 %v488
        %v784 = vunpack.c.l.b16 %v489
        %v785 = vunpack.c.l.b16 %v490
        %v786 = vunpack.c.l.b16 %v491
        %v787 = vunpack.c.l.b16 %v492
        %v788 = vunpack.c.l.b16 %v493
        %v789 = vunpack.c.l.b16 %v494
        %v790 = vunpack.c.l.b16 %v495
        %v791 = vunpack.c.l.b16 %v496
        %v792 = vunpack.c.l.b16 %v497
        %v793 = vunpack.c.l.b16 %v498
        %v794 = vunpack.c.l.b16 %v499
        %v795 = vunpack.c.l.b16 %v500
        %v796 = vunpack.c.l.b16 %v501
        %v797 = vunpack.c.l.b16 %v502
        %v798 = vunpack.c.l.b16 %v503
        %v799 = vunpack.c.l.b16 %v504
        %v800 = vunpack.c.l.b16 %v505
        %v801 = vunpack.c.l.b16 %v506
        %v802 = vunpack.c.l.b16 %v507
        %v803 = vunpack.c.l.b16 %v508
        %v804 = vunpack.c.l.b16 %v509
        %v805 = vunpack.c.l.b16 %v510
        %v806 = vunpack.c.l.b16 %v511
        %v807 = vpack.c.b16 %v744, %v743
        %v808 = vpack.c.b16 %v746, %v745
        %v809 = vpack.c.b16 %v748, %v747
        %v810 = vpack.c.b16 %v750, %v749
        %v811 = vpack.c.b16 %v752, %v751
        %v812 = vpack.c.b16 %v754, %v753
        %v813 = vpack.c.b16 %v756, %v755
        %v814 = vpack.c.b16 %v758, %v757
        %v815 = vpack.c.b16 %v760, %v759
        %v816 = vpack.c.b16 %v762, %v761
        %v817 = vpack.c.b16 %v764, %v763
        %v818 = vpack.c.b16 %v766, %v765
        %v819 = vpack.c.b16 %v768, %v767
        %v820 = vpack.c.b16 %v770, %v769
        %v821 = vpack.c.b16 %v772, %v771
        %v822 = vpack.c.b16 %v774, %v773
        %v823 = vpack.c.b16 %v776, %v775
        %v824 = vpack.c.b16 %v778, %v777
        %v825 = vpack.c.b16 %v780, %v779
        %v826 = vpack.c.b16 %v782, %v781
        %v827 = vpack.c.b16 %v784, %v783
        %v828 = vpack.c.b16 %v786, %v785
        %v829 = vpack.c.b16 %v788, %v787
        %v830 = vpack.c.b16 %v790, %v789
        %v831 = vpack.c.b16 %v792, %v791
        %v832 = vpack.c.b16 %v794, %v793
        %v833 = vpack.c.b16 %v796, %v795
        %v834 = vpack.c.b16 %v798, %v797
        %v835 = vpack.c.b16 %v800, %v799
        %v836 = vpack.c.b16 %v802, %v801
        %v837 = vpack.c.b16 %v804, %v803
        %v838 = vpack.c.b16 %v806, %v805
        %871 = vmatprep.subr.bf16.mxu0 0
        %872 = vmatpush1.bf16.msra.mxu0 %v814
        %873 = vmatprep.subr.bf16.mxu0 0
        %874 = vmatpush1.bf16.msra.mxu0 %v813
        %875 = vmatprep.subr.bf16.mxu0 0
        %876 = vmatpush1.bf16.msra.mxu0 %v812
        %877 = vmatprep.subr.bf16.mxu0 0
        %878 = vmatpush1.bf16.msra.mxu0 %v811
        %879 = vmatprep.subr.bf16.mxu0 0
        %880 = vmatpush1.bf16.msra.mxu0 %v810
        %881 = vmatprep.subr.bf16.mxu0 0
        %882 = vmatpush1.bf16.msra.mxu0 %v809
        %883 = vmatprep.subr.bf16.mxu0 0
        %884 = vmatpush1.bf16.msra.mxu0 %v808
        %885 = vmatprep.subr.bf16.mxu0 0
        %886 = vmatpush1.bf16.msra.mxu0 %v807
        %887 = vmatprep.subr.bf16.mxu0 0
        %888 = vmatpush2.bf16.msra.mxu0 %v822
        %889 = vmatprep.subr.bf16.mxu0 0
        %890 = vmatpush2.bf16.msra.mxu0 %v821
        %891 = vmatprep.subr.bf16.mxu0 0
        %892 = vmatpush2.bf16.msra.mxu0 %v820
        %893 = vmatprep.subr.bf16.mxu0 0
        %894 = vmatpush2.bf16.msra.mxu0 %v819
        %895 = vmatprep.subr.bf16.mxu0 0
        %896 = vmatpush2.bf16.msra.mxu0 %v818
        %897 = vmatprep.subr.bf16.mxu0 0
        %898 = vmatpush2.bf16.msra.mxu0 %v817
        %899 = vmatprep.subr.bf16.mxu0 0
        %900 = vmatpush2.bf16.msra.mxu0 %v816
        %901 = vmatprep.subr.bf16.mxu0 0
        %902 = vmatpush2.bf16.msra.mxu0 %v815
        %903 = vmatprep.mubr.bf16.mxu0 %v616
        %904 = vmatmul.mubr.bf16.gmra.mxu0 %v615
        %v905 = vpop.f32.mrf.mxu0
        %v906 = vadd.f32 %v517, %v905
        %v907 = vpop.f32.mrf.mxu0
        %v908 = vpop.f32.mrf.mxu0
        %v909 = vadd.f32 %v517, %v908
        %v910 = vpop.f32.mrf.mxu0
        %911 = vmatprep.mubr.bf16.mxu0 %v620
        %912 = vmatmul.mubr.bf16.gmra.mxu0 %v619
        %v913 = vpop.f32.mrf.mxu0
        %v914 = vadd.f32 %v517, %v913
        %v915 = vpop.f32.mrf.mxu0
        %v916 = vpop.f32.mrf.mxu0
        %v917 = vadd.f32 %v517, %v916
        %v918 = vpop.f32.mrf.mxu0
        %919 = vmatprep.mubr.bf16.mxu0 %v624
        %920 = vmatmul.mubr.bf16.gmra.mxu0 %v623
        %v921 = vpop.f32.mrf.mxu0
        %v922 = vadd.f32 %v517, %v921
        %v923 = vpop.f32.mrf.mxu0
        %v924 = vpop.f32.mrf.mxu0
        %v925 = vadd.f32 %v517, %v924
        %v926 = vpop.f32.mrf.mxu0
        %927 = vmatprep.mubr.bf16.mxu0 %v628
        %928 = vmatmul.mubr.bf16.gmra.mxu0 %v627
        %v929 = vpop.f32.mrf.mxu0
        %v930 = vadd.f32 %v517, %v929
        %v931 = vpop.f32.mrf.mxu0
        %v932 = vpop.f32.mrf.mxu0
        %v933 = vadd.f32 %v517, %v932
        %v934 = vpop.f32.mrf.mxu0
        %935 = vmatprep.mubr.bf16.mxu0 %v632
        %936 = vmatmul.mubr.bf16.gmra.mxu0 %v631
        %v937 = vpop.f32.mrf.mxu0
        %v938 = vadd.f32 %v517, %v937
        %v939 = vpop.f32.mrf.mxu0
        %v940 = vpop.f32.mrf.mxu0
        %v941 = vadd.f32 %v517, %v940
        %v942 = vpop.f32.mrf.mxu0
        %943 = vmatprep.mubr.bf16.mxu0 %v636
        %944 = vmatmul.mubr.bf16.gmra.mxu0 %v635
        %v945 = vpop.f32.mrf.mxu0
        %v946 = vadd.f32 %v517, %v945
        %v947 = vpop.f32.mrf.mxu0
        %v948 = vpop.f32.mrf.mxu0
        %v949 = vadd.f32 %v517, %v948
        %v950 = vpop.f32.mrf.mxu0
        %951 = vmatprep.mubr.bf16.mxu0 %v640
        %952 = vmatmul.mubr.bf16.gmra.mxu0 %v639
        %v953 = vpop.f32.mrf.mxu0
        %v954 = vadd.f32 %v517, %v953
        %v955 = vpop.f32.mrf.mxu0
        %v956 = vpop.f32.mrf.mxu0
        %v957 = vadd.f32 %v517, %v956
        %v958 = vpop.f32.mrf.mxu0
        %959 = vmatprep.mubr.bf16.mxu0 %v644
        %960 = vmatmul.mubr.bf16.gmra.mxu0 %v643
        %v961 = vpop.f32.mrf.mxu0
        %v962 = vadd.f32 %v517, %v961
        %v963 = vpop.f32.mrf.mxu0
        %v964 = vpop.f32.mrf.mxu0
        %v965 = vadd.f32 %v517, %v964
        %v966 = vpop.f32.mrf.mxu0
        %967 = vdwg.mxu0
        %968 = vmatprep.subr.bf16.mxu0 0
        %969 = vmatpush1.bf16.msra.mxu0 %v830
        %970 = vmatprep.subr.bf16.mxu0 0
        %971 = vmatpush1.bf16.msra.mxu0 %v829
        %972 = vmatprep.subr.bf16.mxu0 0
        %973 = vmatpush1.bf16.msra.mxu0 %v828
        %974 = vmatprep.subr.bf16.mxu0 0
        %975 = vmatpush1.bf16.msra.mxu0 %v827
        %976 = vmatprep.subr.bf16.mxu0 0
        %977 = vmatpush1.bf16.msra.mxu0 %v826
        %978 = vmatprep.subr.bf16.mxu0 0
        %979 = vmatpush1.bf16.msra.mxu0 %v825
        %980 = vmatprep.subr.bf16.mxu0 0
        %981 = vmatpush1.bf16.msra.mxu0 %v824
        %982 = vmatprep.subr.bf16.mxu0 0
        %983 = vmatpush1.bf16.msra.mxu0 %v823
        %984 = vmatprep.subr.bf16.mxu0 0
        %985 = vmatpush2.bf16.msra.mxu0 %v838
        %986 = vmatprep.subr.bf16.mxu0 0
        %987 = vmatpush2.bf16.msra.mxu0 %v837
        %988 = vmatprep.subr.bf16.mxu0 0
        %989 = vmatpush2.bf16.msra.mxu0 %v836
        %990 = vmatprep.subr.bf16.mxu0 0
        %991 = vmatpush2.bf16.msra.mxu0 %v835
        %992 = vmatprep.subr.bf16.mxu0 0
        %993 = vmatpush2.bf16.msra.mxu0 %v834
        %994 = vmatprep.subr.bf16.mxu0 0
        %995 = vmatpush2.bf16.msra.mxu0 %v833
        %996 = vmatprep.subr.bf16.mxu0 0
        %997 = vmatpush2.bf16.msra.mxu0 %v832
        %998 = vmatprep.subr.bf16.mxu0 0
        %999 = vmatpush2.bf16.msra.mxu0 %v831
        %1000 = vmatprep.mubr.bf16.mxu0 %v618
        %1001 = vmatmul.mubr.bf16.gmra.mxu0 %v617
        %v1002 = vpop.f32.mrf.mxu0
        %v1003 = vadd.f32 %v906, %v1002
        %v1004 = vpop.f32.mrf.mxu0
        %v1005 = vpop.f32.mrf.mxu0
        %v1006 = vadd.f32 %v909, %v1005
        %v1007 = vpop.f32.mrf.mxu0
        %1008 = vmatprep.mubr.bf16.mxu0 %v622
        %1009 = vmatmul.mubr.bf16.gmra.mxu0 %v621
        %v1010 = vpop.f32.mrf.mxu0
        %v1011 = vadd.f32 %v914, %v1010
        %v1012 = vpop.f32.mrf.mxu0
        %v1013 = vpop.f32.mrf.mxu0
        %v1014 = vadd.f32 %v917, %v1013
        %v1015 = vpop.f32.mrf.mxu0
        %1016 = vmatprep.mubr.bf16.mxu0 %v626
        %1017 = vmatmul.mubr.bf16.gmra.mxu0 %v625
        %v1018 = vpop.f32.mrf.mxu0
        %v1019 = vadd.f32 %v922, %v1018
        %v1020 = vpop.f32.mrf.mxu0
        %v1021 = vpop.f32.mrf.mxu0
        %v1022 = vadd.f32 %v925, %v1021
        %v1023 = vpop.f32.mrf.mxu0
        %1024 = vmatprep.mubr.bf16.mxu0 %v630
        %1025 = vmatmul.mubr.bf16.gmra.mxu0 %v629
        %v1026 = vpop.f32.mrf.mxu0
        %v1027 = vadd.f32 %v930, %v1026
        %v1028 = vpop.f32.mrf.mxu0
        %v1029 = vpop.f32.mrf.mxu0
        %v1030 = vadd.f32 %v933, %v1029
        %v1031 = vpop.f32.mrf.mxu0
        %1032 = vmatprep.mubr.bf16.mxu0 %v634
        %1033 = vmatmul.mubr.bf16.gmra.mxu0 %v633
        %v1034 = vpop.f32.mrf.mxu0
        %v1035 = vadd.f32 %v938, %v1034
        %v1036 = vpop.f32.mrf.mxu0
        %v1037 = vpop.f32.mrf.mxu0
        %v1038 = vadd.f32 %v941, %v1037
        %v1039 = vpop.f32.mrf.mxu0
        %1040 = vmatprep.mubr.bf16.mxu0 %v638
        %1041 = vmatmul.mubr.bf16.gmra.mxu0 %v637
        %v1042 = vpop.f32.mrf.mxu0
        %v1043 = vadd.f32 %v946, %v1042
        %v1044 = vpop.f32.mrf.mxu0
        %v1045 = vpop.f32.mrf.mxu0
        %v1046 = vadd.f32 %v949, %v1045
        %v1047 = vpop.f32.mrf.mxu0
        %1048 = vmatprep.mubr.bf16.mxu0 %v642
        %1049 = vmatmul.mubr.bf16.gmra.mxu0 %v641
        %v1050 = vpop.f32.mrf.mxu0
        %v1051 = vadd.f32 %v954, %v1050
        %v1052 = vpop.f32.mrf.mxu0
        %v1053 = vpop.f32.mrf.mxu0
        %v1054 = vadd.f32 %v957, %v1053
        %v1055 = vpop.f32.mrf.mxu0
        %1056 = vmatprep.mubr.bf16.mxu0 %v646
        %1057 = vmatmul.mubr.bf16.gmra.mxu0 %v645
        %v1058 = vpop.f32.mrf.mxu0
        %v1059 = vadd.f32 %v962, %v1058
        %v1060 = vpop.f32.mrf.mxu0
        %v1061 = vpop.f32.mrf.mxu0
        %v1062 = vadd.f32 %v965, %v1061
        %v1063 = vpop.f32.mrf.mxu0
        %1064 = vdwg.mxu0
        %v1065 = vmax.f32 %v1003, 0.0
        %v1066 = vmax.f32 %v1006, 0.0
        %v1067 = vmax.f32 %v1011, 0.0
        %v1068 = vmax.f32 %v1014, 0.0
        %v1069 = vmax.f32 %v1019, 0.0
        %v1070 = vmax.f32 %v1022, 0.0
        %v1071 = vmax.f32 %v1027, 0.0
        %v1072 = vmax.f32 %v1030, 0.0
        %v1073 = vmax.f32 %v1035, 0.0
        %v1074 = vmax.f32 %v1038, 0.0
        %v1075 = vmax.f32 %v1043, 0.0
        %v1076 = vmax.f32 %v1046, 0.0
        %v1077 = vmax.f32 %v1051, 0.0
        %v1078 = vmax.f32 %v1054, 0.0
        %v1079 = vmax.f32 %v1059, 0.0
        %v1080 = vmax.f32 %v1062, 0.0
        %1081 = vst [vmem:[#allocation2] sm:$0xff] %v1065
        %1082 = vst [vmem:[#allocation2 + $0x8] sm:$0xff] %v1066
        %1083 = vst [vmem:[#allocation2 + $0x10] sm:$0xff] %v1067
        %1084 = vst [vmem:[#allocation2 + $0x18] sm:$0xff] %v1068
        %1085 = vst [vmem:[#allocation2 + $0x20] sm:$0xff] %v1069
        %1086 = vst [vmem:[#allocation2 + $0x28] sm:$0xff] %v1070
        %1087 = vst [vmem:[#allocation2 + $0x30] sm:$0xff] %v1071
        %1088 = vst [vmem:[#allocation2 + $0x38] sm:$0xff] %v1072
        %1089 = vst [vmem:[#allocation2 + $0x40] sm:$0xff] %v1073
        %1090 = vst [vmem:[#allocation2 + $0x48] sm:$0xff] %v1074
        %1091 = vst [vmem:[#allocation2 + $0x50] sm:$0xff] %v1075
        %1092 = vst [vmem:[#allocation2 + $0x58] sm:$0xff] %v1076
        %1093 = vst [vmem:[#allocation2 + $0x60] sm:$0xff] %v1077
        %1094 = vst [vmem:[#allocation2 + $0x68] sm:$0xff] %v1078
        %1095 = vst [vmem:[#allocation2 + $0x70] sm:$0xff] %v1079
        %1096 = vst [vmem:[#allocation2 + $0x78] sm:$0xff] %v1080
        %1097 = vst [vmem:[#allocation3] sm:$0xe0] 0.0
        %1098 = vst [vmem:[#allocation3 + $0x8] sm:$0xe0] 0.0
        %1099 = vst [vmem:[#allocation3 + $0x10] sm:$0xe0] 0.0
        %1100 = vst [vmem:[#allocation3 + $0x18] sm:$0xe0] 0.0
        %1101 = vst [vmem:[#allocation3 + $0x20] sm:$0xe0] 0.0
        %1102 = vst [vmem:[#allocation3 + $0x28] sm:$0xe0] 0.0
        %1103 = vst [vmem:[#allocation3 + $0x30] sm:$0xe0] 0.0
        %1104 = vst [vmem:[#allocation3 + $0x38] sm:$0xe0] 0.0
        %1105 = vst [vmem:[#allocation3 + $0x40] sm:$0xe0] 0.0
        %1106 = vst [vmem:[#allocation3 + $0x48] sm:$0xe0] 0.0
        %1107 = vst [vmem:[#allocation3 + $0x50] sm:$0xe0] 0.0
        %1108 = vst [vmem:[#allocation3 + $0x58] sm:$0xe0] 0.0
        %1109 = vst [vmem:[#allocation3 + $0x60] sm:$0xe0] 0.0
        %1110 = vst [vmem:[#allocation3 + $0x68] sm:$0xe0] 0.0
        %1111 = vst [vmem:[#allocation3 + $0x70] sm:$0xe0] 0.0
        %1112 = vst [vmem:[#allocation3 + $0x78] sm:$0xe0] 0.0
        %1113 = vst [vmem:[#allocation3 + $0x80] sm:$0xe0] 0.0
        %1114 = vst [vmem:[#allocation3 + $0x88] sm:$0xe0] 0.0
        %1115 = vst [vmem:[#allocation3 + $0x90] sm:$0xe0] 0.0
        %1116 = vst [vmem:[#allocation3 + $0x98] sm:$0xe0] 0.0
        %1117 = vst [vmem:[#allocation3 + $0xa0] sm:$0xe0] 0.0
        %1118 = vst [vmem:[#allocation3 + $0xa8] sm:$0xe0] 0.0
        %1119 = vst [vmem:[#allocation3 + $0xb0] sm:$0xe0] 0.0
        %1120 = vst [vmem:[#allocation3 + $0xb8] sm:$0xe0] 0.0
        %1121 = vst [vmem:[#allocation3 + $0xc0] sm:$0xe0] 0.0
        %1122 = vst [vmem:[#allocation3 + $0xc8] sm:$0xe0] 0.0
        %1123 = vst [vmem:[#allocation3 + $0xd0] sm:$0xe0] 0.0
        %1124 = vst [vmem:[#allocation3 + $0xd8] sm:$0xe0] 0.0
        %1125 = vst [vmem:[#allocation3 + $0xe0] sm:$0xe0] 0.0
        %1126 = vst [vmem:[#allocation3 + $0xe8] sm:$0xe0] 0.0
        %1127 = vst [vmem:[#allocation3 + $0xf0] sm:$0xe0] 0.0
        %1128 = vst [vmem:[#allocation3 + $0xf8] sm:$0xe0] 0.0
        %1129 = vst [vmem:[#allocation3 + $0x100] sm:$0xe0] 0.0
        %1130 = vst [vmem:[#allocation3 + $0x108] sm:$0xe0] 0.0
        %1131 = vst [vmem:[#allocation3 + $0x110] sm:$0xe0] 0.0
        %1132 = vst [vmem:[#allocation3 + $0x118] sm:$0xe0] 0.0
        %1133 = vst [vmem:[#allocation3 + $0x120] sm:$0xe0] 0.0
        %1134 = vst [vmem:[#allocation3 + $0x128] sm:$0xe0] 0.0
        %1135 = vst [vmem:[#allocation3 + $0x130] sm:$0xe0] 0.0
        %1136 = vst [vmem:[#allocation3 + $0x138] sm:$0xe0] 0.0
        %v1137 = vld [vmem:[#allocation2] sm:$0x1f]
        %v1138 = vld [vmem:[#allocation2 + $0x8] sm:$0x1f]
        %v1139 = vld [vmem:[#allocation2 + $0x10] sm:$0x1f]
        %v1140 = vld [vmem:[#allocation2 + $0x18] sm:$0x1f]
        %s1141 = scalar_lea.vmem [#allocation2], 32
        %v1142 = vld [vmem:[%s1141] sm:$0x1f]
        %v1143 = vld [vmem:[%s1141 + $0x8] sm:$0x1f]
        %v1144 = vld [vmem:[%s1141 + $0x10] sm:$0x1f]
        %v1145 = vld [vmem:[%s1141 + $0x18] sm:$0x1f]
        %v1146 = vmax.f32 %v1137, %v1142
        %v1147 = vmax.f32 %v1138, %v1143
        %v1148 = vmax.f32 %v1139, %v1144
        %v1149 = vmax.f32 %v1140, %v1145
        %s1150 = scalar_lea.vmem [#allocation2], 64
        %v1151 = vld [vmem:[%s1150] sm:$0x1f]
        %v1152 = vld [vmem:[%s1150 + $0x8] sm:$0x1f]
        %v1153 = vld [vmem:[%s1150 + $0x10] sm:$0x1f]
        %v1154 = vld [vmem:[%s1150 + $0x18] sm:$0x1f]
        %v1155 = vmax.f32 %v1146, %v1151
        %v1156 = vmax.f32 %v1147, %v1152
        %v1157 = vmax.f32 %v1148, %v1153
        %v1158 = vmax.f32 %v1149, %v1154
        %s1159 = scalar_lea.vmem [#allocation2], 96
        %v1160 = vld [vmem:[%s1159] sm:$0x1f]
        %v1161 = vld [vmem:[%s1159 + $0x8] sm:$0x1f]
        %v1162 = vld [vmem:[%s1159 + $0x10] sm:$0x1f]
        %v1163 = vld [vmem:[%s1159 + $0x18] sm:$0x1f]
        %v1164 = vmax.f32 %v1155, %v1160
        %v1165 = vmax.f32 %v1156, %v1161
        %v1166 = vmax.f32 %v1157, %v1162
        %v1167 = vmax.f32 %v1158, %v1163
        %1172 = vrot.lane.b32.xlu0 %v1137, 112
        %v1173 = vpop.permute.xlu0 %1172
        %1174 = vrot.lane.b32.xlu0 %v1138, 112
        %v1175 = vpop.permute.xlu0 %1174
        %1176 = vrot.lane.b32.xlu0 %v1139, 112
        %v1177 = vpop.permute.xlu0 %1176
        %1178 = vrot.lane.b32.xlu0 %v1140, 112
        %v1179 = vpop.permute.xlu0 %1178
        %v1184 = vmax.f32 %v1142, %v1173
        %v1185 = vmax.f32 %v1143, %v1175
        %v1186 = vmax.f32 %v1144, %v1177
        %v1187 = vmax.f32 %v1145, %v1179
        %v1188 = vmax.f32 %v1184, %v1160
        %v1189 = vmax.f32 %v1185, %v1161
        %v1190 = vmax.f32 %v1186, %v1162
        %v1191 = vmax.f32 %v1187, %v1163
        %1196 = vrot.lane.b32.xlu0 %v1151, 112
        %v1197 = vpop.permute.xlu0 %1196
        %1198 = vrot.lane.b32.xlu0 %v1152, 112
        %v1199 = vpop.permute.xlu0 %1198
        %1200 = vrot.lane.b32.xlu0 %v1153, 112
        %v1201 = vpop.permute.xlu0 %1200
        %1202 = vrot.lane.b32.xlu0 %v1154, 112
        %v1203 = vpop.permute.xlu0 %1202
        %v1208 = vmax.f32 %v1188, %v1197
        %v1209 = vmax.f32 %v1189, %v1199
        %v1210 = vmax.f32 %v1190, %v1201
        %v1211 = vmax.f32 %v1191, %v1203
        %v1212 = vmax.f32 %v1151, %v1160
        %v1213 = vmax.f32 %v1152, %v1161
        %v1214 = vmax.f32 %v1153, %v1162
        %v1215 = vmax.f32 %v1154, %v1163
        %v1216 = vld [vmem:[#allocation2 + $0x1] sm:$0x1f]
        %v1217 = vld [vmem:[#allocation2 + $0x9] sm:$0x1f]
        %v1218 = vld [vmem:[#allocation2 + $0x11] sm:$0x1f]
        %v1219 = vld [vmem:[#allocation2 + $0x19] sm:$0x1f]
        %v1220 = vmax.f32 %v1212, %v1216
        %v1221 = vmax.f32 %v1213, %v1217
        %v1222 = vmax.f32 %v1214, %v1218
        %v1223 = vmax.f32 %v1215, %v1219
        %v1224 = vld [vmem:[%s1141 + $0x1] sm:$0x1f]
        %v1225 = vld [vmem:[%s1141 + $0x9] sm:$0x1f]
        %v1226 = vld [vmem:[%s1141 + $0x11] sm:$0x1f]
        %v1227 = vld [vmem:[%s1141 + $0x19] sm:$0x1f]
        %v1228 = vmax.f32 %v1220, %v1224
        %v1229 = vmax.f32 %v1221, %v1225
        %v1230 = vmax.f32 %v1222, %v1226
        %v1231 = vmax.f32 %v1223, %v1227
        %v1232 = vmax.f32 %v1160, %v1197
        %v1233 = vmax.f32 %v1161, %v1199
        %v1234 = vmax.f32 %v1162, %v1201
        %v1235 = vmax.f32 %v1163, %v1203
        %v1236 = vmax.f32 %v1232, %v1224
        %v1237 = vmax.f32 %v1233, %v1225
        %v1238 = vmax.f32 %v1234, %v1226
        %v1239 = vmax.f32 %v1235, %v1227
        %1244 = vrot.lane.b32.xlu0 %v1216, 112
        %v1245 = vpop.permute.xlu0 %1244
        %1246 = vrot.lane.b32.xlu0 %v1217, 112
        %v1247 = vpop.permute.xlu0 %1246
        %1248 = vrot.lane.b32.xlu0 %v1218, 112
        %v1249 = vpop.permute.xlu0 %1248
        %1250 = vrot.lane.b32.xlu0 %v1219, 112
        %v1251 = vpop.permute.xlu0 %1250
        %v1256 = vmax.f32 %v1236, %v1245
        %v1257 = vmax.f32 %v1237, %v1247
        %v1258 = vmax.f32 %v1238, %v1249
        %v1259 = vmax.f32 %v1239, %v1251
        %1264 = vrot.lane.b32.xlu0 %v1208, 80
        %v1265 = vpop.permute.xlu0 %1264
        %1266 = vrot.lane.b32.xlu0 %v1209, 80
        %v1267 = vpop.permute.xlu0 %1266
        %1268 = vrot.lane.b32.xlu0 %v1210, 80
        %v1269 = vpop.permute.xlu0 %1268
        %1270 = vrot.lane.b32.xlu0 %v1211, 80
        %v1271 = vpop.permute.xlu0 %1270
        %1280 = vrot.lane.b32.xlu0 %v1164, 16
        %v1281 = vpop.permute.xlu0 %1280
        %1282 = vrot.lane.b32.xlu0 %v1165, 16
        %v1283 = vpop.permute.xlu0 %1282
        %1284 = vrot.lane.b32.xlu0 %v1166, 16
        %v1285 = vpop.permute.xlu0 %1284
        %1286 = vrot.lane.b32.xlu0 %v1167, 16
        %v1287 = vpop.permute.xlu0 %1286
        %1292 = vrot.lane.b32.xlu0 %v1208, 96
        %v1293 = vpop.permute.xlu0 %1292
        %1294 = vrot.lane.b32.xlu0 %v1209, 96
        %v1295 = vpop.permute.xlu0 %1294
        %1296 = vrot.lane.b32.xlu0 %v1210, 96
        %v1297 = vpop.permute.xlu0 %1296
        %1298 = vrot.lane.b32.xlu0 %v1211, 96
        %v1299 = vpop.permute.xlu0 %1298
        %1308 = vrot.lane.b32.xlu0 %v1228, 64
        %v1309 = vpop.permute.xlu0 %1308
        %1310 = vrot.lane.b32.xlu0 %v1229, 64
        %v1311 = vpop.permute.xlu0 %1310
        %1312 = vrot.lane.b32.xlu0 %v1230, 64
        %v1313 = vpop.permute.xlu0 %1312
        %1314 = vrot.lane.b32.xlu0 %v1231, 64
        %v1315 = vpop.permute.xlu0 %1314
        %1324 = vrot.lane.b32.xlu0 %v1256, 16
        %v1325 = vpop.permute.xlu0 %1324
        %1326 = vrot.lane.b32.xlu0 %v1257, 16
        %v1327 = vpop.permute.xlu0 %1326
        %1328 = vrot.lane.b32.xlu0 %v1258, 16
        %v1329 = vpop.permute.xlu0 %1328
        %1330 = vrot.lane.b32.xlu0 %v1259, 16
        %v1331 = vpop.permute.xlu0 %1330
        %1336 = vrot.lane.b32.xlu0 %v1228, 80
        %v1337 = vpop.permute.xlu0 %1336
        %1338 = vrot.lane.b32.xlu0 %v1229, 80
        %v1339 = vpop.permute.xlu0 %1338
        %1340 = vrot.lane.b32.xlu0 %v1230, 80
        %v1341 = vpop.permute.xlu0 %1340
        %1342 = vrot.lane.b32.xlu0 %v1231, 80
        %v1343 = vpop.permute.xlu0 %1342
        %1348 = vrot.lane.b32.xlu0 %v1256, 32
        %v1349 = vpop.permute.xlu0 %1348
        %1350 = vrot.lane.b32.xlu0 %v1257, 32
        %v1351 = vpop.permute.xlu0 %1350
        %1352 = vrot.lane.b32.xlu0 %v1258, 32
        %v1353 = vpop.permute.xlu0 %1352
        %1354 = vrot.lane.b32.xlu0 %v1259, 32
        %v1355 = vpop.permute.xlu0 %1354
        %vm1360 = vcmask 654336
        %v1361 = vsel %vm1360, %v1164, %v1265
        %v1362 = vsel %vm1360, %v1165, %v1267
        %v1363 = vsel %vm1360, %v1166, %v1269
        %v1364 = vsel %vm1360, %v1167, %v1271
        %vm1365 = vcmask 261120
        %v1366 = vsel %vm1365, %v1265, %v1281
        %v1367 = vsel %vm1365, %v1267, %v1283
        %v1368 = vsel %vm1365, %v1269, %v1285
        %v1369 = vsel %vm1365, %v1271, %v1287
        %vm1370 = vcmask 916480
        %v1371 = vsel %vm1370, %v1366, %v1293
        %v1372 = vsel %vm1370, %v1367, %v1295
        %v1373 = vsel %vm1370, %v1368, %v1297
        %v1374 = vsel %vm1370, %v1369, %v1299
        %vm1375 = vcmask 523264
        %v1376 = vsel %vm1375, %v1293, %v1309
        %v1377 = vsel %vm1375, %v1295, %v1311
        %v1378 = vsel %vm1375, %v1297, %v1313
        %v1379 = vsel %vm1375, %v1299, %v1315
        %vm1380 = vcmask 130048
        %v1381 = vsel %vm1380, %v1309, %v1325
        %v1382 = vsel %vm1380, %v1311, %v1327
        %v1383 = vsel %vm1380, %v1313, %v1329
        %v1384 = vsel %vm1380, %v1315, %v1331
        %vm1385 = vcmask 785408
        %v1386 = vsel %vm1385, %v1381, %v1337
        %v1387 = vsel %vm1385, %v1382, %v1339
        %v1388 = vsel %vm1385, %v1383, %v1341
        %v1389 = vsel %vm1385, %v1384, %v1343
        %vm1390 = vcmask 392192
        %v1391 = vsel %vm1390, %v1337, %v1349
        %v1392 = vsel %vm1390, %v1339, %v1351
        %v1393 = vsel %vm1390, %v1341, %v1353
        %v1394 = vsel %vm1390, %v1343, %v1355
        %1395 = vst [vmem:[#allocation3] sm:$0x1f] %v1361
        %1396 = vst [vmem:[#allocation3 + $0x8] sm:$0x1f] %v1371
        %1397 = vst [vmem:[#allocation3 + $0x10] sm:$0x1f] %v1376
        %1398 = vst [vmem:[#allocation3 + $0x18] sm:$0x1f] %v1386
        %1399 = vst [vmem:[#allocation3 + $0x20] sm:$0x1f] %v1391
        %1400 = vst [vmem:[#allocation3 + $0x50] sm:$0x1f] %v1362
        %1401 = vst [vmem:[#allocation3 + $0x58] sm:$0x1f] %v1372
        %1402 = vst [vmem:[#allocation3 + $0x60] sm:$0x1f] %v1377
        %1403 = vst [vmem:[#allocation3 + $0x68] sm:$0x1f] %v1387
        %1404 = vst [vmem:[#allocation3 + $0x70] sm:$0x1f] %v1392
        %1405 = vst [vmem:[#allocation3 + $0xa0] sm:$0x1f] %v1363
        %1406 = vst [vmem:[#allocation3 + $0xa8] sm:$0x1f] %v1373
        %1407 = vst [vmem:[#allocation3 + $0xb0] sm:$0x1f] %v1378
        %1408 = vst [vmem:[#allocation3 + $0xb8] sm:$0x1f] %v1388
        %1409 = vst [vmem:[#allocation3 + $0xc0] sm:$0x1f] %v1393
        %1410 = vst [vmem:[#allocation3 + $0xf0] sm:$0x1f] %v1364
        %1411 = vst [vmem:[#allocation3 + $0xf8] sm:$0x1f] %v1374
        %1412 = vst [vmem:[#allocation3 + $0x100] sm:$0x1f] %v1379
        %1413 = vst [vmem:[#allocation3 + $0x108] sm:$0x1f] %v1389
        %1414 = vst [vmem:[#allocation3 + $0x110] sm:$0x1f] %v1394
        %v1415 = vld [vmem:[#allocation2 + $0x1] sm:$0x1f]
        %v1416 = vld [vmem:[#allocation2 + $0x9] sm:$0x1f]
        %v1417 = vld [vmem:[#allocation2 + $0x11] sm:$0x1f]
        %v1418 = vld [vmem:[#allocation2 + $0x19] sm:$0x1f]
        %v1419 = vld [vmem:[%s1141 + $0x1] sm:$0x1f]
        %v1420 = vld [vmem:[%s1141 + $0x9] sm:$0x1f]
        %v1421 = vld [vmem:[%s1141 + $0x11] sm:$0x1f]
        %v1422 = vld [vmem:[%s1141 + $0x19] sm:$0x1f]
        %v1423 = vmax.f32 %v1415, %v1419
        %v1424 = vmax.f32 %v1416, %v1420
        %v1425 = vmax.f32 %v1417, %v1421
        %v1426 = vmax.f32 %v1418, %v1422
        %v1427 = vld [vmem:[%s1150 + $0x1] sm:$0x1f]
        %v1428 = vld [vmem:[%s1150 + $0x9] sm:$0x1f]
        %v1429 = vld [vmem:[%s1150 + $0x11] sm:$0x1f]
        %v1430 = vld [vmem:[%s1150 + $0x19] sm:$0x1f]
        %v1431 = vmax.f32 %v1423, %v1427
        %v1432 = vmax.f32 %v1424, %v1428
        %v1433 = vmax.f32 %v1425, %v1429
        %v1434 = vmax.f32 %v1426, %v1430
        %v1435 = vld [vmem:[%s1159 + $0x1] sm:$0x1f]
        %v1436 = vld [vmem:[%s1159 + $0x9] sm:$0x1f]
        %v1437 = vld [vmem:[%s1159 + $0x11] sm:$0x1f]
        %v1438 = vld [vmem:[%s1159 + $0x19] sm:$0x1f]
        %v1439 = vmax.f32 %v1431, %v1435
        %v1440 = vmax.f32 %v1432, %v1436
        %v1441 = vmax.f32 %v1433, %v1437
        %v1442 = vmax.f32 %v1434, %v1438
        %1447 = vrot.lane.b32.xlu0 %v1415, 112
        %v1448 = vpop.permute.xlu0 %1447
        %1449 = vrot.lane.b32.xlu0 %v1416, 112
        %v1450 = vpop.permute.xlu0 %1449
        %1451 = vrot.lane.b32.xlu0 %v1417, 112
        %v1452 = vpop.permute.xlu0 %1451
        %1453 = vrot.lane.b32.xlu0 %v1418, 112
        %v1454 = vpop.permute.xlu0 %1453
        %v1459 = vmax.f32 %v1419, %v1448
        %v1460 = vmax.f32 %v1420, %v1450
        %v1461 = vmax.f32 %v1421, %v1452
        %v1462 = vmax.f32 %v1422, %v1454
        %v1463 = vmax.f32 %v1459, %v1435
        %v1464 = vmax.f32 %v1460, %v1436
        %v1465 = vmax.f32 %v1461, %v1437
        %v1466 = vmax.f32 %v1462, %v1438
        %1471 = vrot.lane.b32.xlu0 %v1427, 112
        %v1472 = vpop.permute.xlu0 %1471
        %1473 = vrot.lane.b32.xlu0 %v1428, 112
        %v1474 = vpop.permute.xlu0 %1473
        %1475 = vrot.lane.b32.xlu0 %v1429, 112
        %v1476 = vpop.permute.xlu0 %1475
        %1477 = vrot.lane.b32.xlu0 %v1430, 112
        %v1478 = vpop.permute.xlu0 %1477
        %v1483 = vmax.f32 %v1463, %v1472
        %v1484 = vmax.f32 %v1464, %v1474
        %v1485 = vmax.f32 %v1465, %v1476
        %v1486 = vmax.f32 %v1466, %v1478
        %v1487 = vmax.f32 %v1427, %v1435
        %v1488 = vmax.f32 %v1428, %v1436
        %v1489 = vmax.f32 %v1429, %v1437
        %v1490 = vmax.f32 %v1430, %v1438
        %v1491 = vld [vmem:[#allocation2 + $0x2] sm:$0x1f]
        %v1492 = vld [vmem:[#allocation2 + $0xa] sm:$0x1f]
        %v1493 = vld [vmem:[#allocation2 + $0x12] sm:$0x1f]
        %v1494 = vld [vmem:[#allocation2 + $0x1a] sm:$0x1f]
        %v1495 = vmax.f32 %v1487, %v1491
        %v1496 = vmax.f32 %v1488, %v1492
        %v1497 = vmax.f32 %v1489, %v1493
        %v1498 = vmax.f32 %v1490, %v1494
        %v1499 = vld [vmem:[%s1141 + $0x2] sm:$0x1f]
        %v1500 = vld [vmem:[%s1141 + $0xa] sm:$0x1f]
        %v1501 = vld [vmem:[%s1141 + $0x12] sm:$0x1f]
        %v1502 = vld [vmem:[%s1141 + $0x1a] sm:$0x1f]
        %v1503 = vmax.f32 %v1495, %v1499
        %v1504 = vmax.f32 %v1496, %v1500
        %v1505 = vmax.f32 %v1497, %v1501
        %v1506 = vmax.f32 %v1498, %v1502
        %v1507 = vmax.f32 %v1435, %v1472
        %v1508 = vmax.f32 %v1436, %v1474
        %v1509 = vmax.f32 %v1437, %v1476
        %v1510 = vmax.f32 %v1438, %v1478
        %v1511 = vmax.f32 %v1507, %v1499
        %v1512 = vmax.f32 %v1508, %v1500
        %v1513 = vmax.f32 %v1509, %v1501
        %v1514 = vmax.f32 %v1510, %v1502
        %1519 = vrot.lane.b32.xlu0 %v1491, 112
        %v1520 = vpop.permute.xlu0 %1519
        %1521 = vrot.lane.b32.xlu0 %v1492, 112
        %v1522 = vpop.permute.xlu0 %1521
        %1523 = vrot.lane.b32.xlu0 %v1493, 112
        %v1524 = vpop.permute.xlu0 %1523
        %1525 = vrot.lane.b32.xlu0 %v1494, 112
        %v1526 = vpop.permute.xlu0 %1525
        %v1531 = vmax.f32 %v1511, %v1520
        %v1532 = vmax.f32 %v1512, %v1522
        %v1533 = vmax.f32 %v1513, %v1524
        %v1534 = vmax.f32 %v1514, %v1526
        %1539 = vrot.lane.b32.xlu0 %v1483, 80
        %v1540 = vpop.permute.xlu0 %1539
        %1541 = vrot.lane.b32.xlu0 %v1484, 80
        %v1542 = vpop.permute.xlu0 %1541
        %1543 = vrot.lane.b32.xlu0 %v1485, 80
        %v1544 = vpop.permute.xlu0 %1543
        %1545 = vrot.lane.b32.xlu0 %v1486, 80
        %v1546 = vpop.permute.xlu0 %1545
        %1555 = vrot.lane.b32.xlu0 %v1439, 16
        %v1556 = vpop.permute.xlu0 %1555
        %1557 = vrot.lane.b32.xlu0 %v1440, 16
        %v1558 = vpop.permute.xlu0 %1557
        %1559 = vrot.lane.b32.xlu0 %v1441, 16
        %v1560 = vpop.permute.xlu0 %1559
        %1561 = vrot.lane.b32.xlu0 %v1442, 16
        %v1562 = vpop.permute.xlu0 %1561
        %1567 = vrot.lane.b32.xlu0 %v1483, 96
        %v1568 = vpop.permute.xlu0 %1567
        %1569 = vrot.lane.b32.xlu0 %v1484, 96
        %v1570 = vpop.permute.xlu0 %1569
        %1571 = vrot.lane.b32.xlu0 %v1485, 96
        %v1572 = vpop.permute.xlu0 %1571
        %1573 = vrot.lane.b32.xlu0 %v1486, 96
        %v1574 = vpop.permute.xlu0 %1573
        %1583 = vrot.lane.b32.xlu0 %v1503, 64
        %v1584 = vpop.permute.xlu0 %1583
        %1585 = vrot.lane.b32.xlu0 %v1504, 64
        %v1586 = vpop.permute.xlu0 %1585
        %1587 = vrot.lane.b32.xlu0 %v1505, 64
        %v1588 = vpop.permute.xlu0 %1587
        %1589 = vrot.lane.b32.xlu0 %v1506, 64
        %v1590 = vpop.permute.xlu0 %1589
        %1599 = vrot.lane.b32.xlu0 %v1531, 16
        %v1600 = vpop.permute.xlu0 %1599
        %1601 = vrot.lane.b32.xlu0 %v1532, 16
        %v1602 = vpop.permute.xlu0 %1601
        %1603 = vrot.lane.b32.xlu0 %v1533, 16
        %v1604 = vpop.permute.xlu0 %1603
        %1605 = vrot.lane.b32.xlu0 %v1534, 16
        %v1606 = vpop.permute.xlu0 %1605
        %1611 = vrot.lane.b32.xlu0 %v1503, 80
        %v1612 = vpop.permute.xlu0 %1611
        %1613 = vrot.lane.b32.xlu0 %v1504, 80
        %v1614 = vpop.permute.xlu0 %1613
        %1615 = vrot.lane.b32.xlu0 %v1505, 80
        %v1616 = vpop.permute.xlu0 %1615
        %1617 = vrot.lane.b32.xlu0 %v1506, 80
        %v1618 = vpop.permute.xlu0 %1617
        %1623 = vrot.lane.b32.xlu0 %v1531, 32
        %v1624 = vpop.permute.xlu0 %1623
        %1625 = vrot.lane.b32.xlu0 %v1532, 32
        %v1626 = vpop.permute.xlu0 %1625
        %1627 = vrot.lane.b32.xlu0 %v1533, 32
        %v1628 = vpop.permute.xlu0 %1627
        %1629 = vrot.lane.b32.xlu0 %v1534, 32
        %v1630 = vpop.permute.xlu0 %1629
        %v1635 = vsel %vm1360, %v1439, %v1540
        %v1636 = vsel %vm1360, %v1440, %v1542
        %v1637 = vsel %vm1360, %v1441, %v1544
        %v1638 = vsel %vm1360, %v1442, %v1546
        %v1639 = vsel %vm1365, %v1540, %v1556
        %v1640 = vsel %vm1365, %v1542, %v1558
        %v1641 = vsel %vm1365, %v1544, %v1560
        %v1642 = vsel %vm1365, %v1546, %v1562
        %v1643 = vsel %vm1370, %v1639, %v1568
        %v1644 = vsel %vm1370, %v1640, %v1570
        %v1645 = vsel %vm1370, %v1641, %v1572
        %v1646 = vsel %vm1370, %v1642, %v1574
        %v1647 = vsel %vm1375, %v1568, %v1584
        %v1648 = vsel %vm1375, %v1570, %v1586
        %v1649 = vsel %vm1375, %v1572, %v1588
        %v1650 = vsel %vm1375, %v1574, %v1590
        %v1651 = vsel %vm1380, %v1584, %v1600
        %v1652 = vsel %vm1380, %v1586, %v1602
        %v1653 = vsel %vm1380, %v1588, %v1604
        %v1654 = vsel %vm1380, %v1590, %v1606
        %v1655 = vsel %vm1385, %v1651, %v1612
        %v1656 = vsel %vm1385, %v1652, %v1614
        %v1657 = vsel %vm1385, %v1653, %v1616
        %v1658 = vsel %vm1385, %v1654, %v1618
        %v1659 = vsel %vm1390, %v1612, %v1624
        %v1660 = vsel %vm1390, %v1614, %v1626
        %v1661 = vsel %vm1390, %v1616, %v1628
        %v1662 = vsel %vm1390, %v1618, %v1630
        %1663 = vst [vmem:[#allocation3 + $0x28] sm:$0x1f] %v1635
        %1664 = vst [vmem:[#allocation3 + $0x30] sm:$0x1f] %v1643
        %1665 = vst [vmem:[#allocation3 + $0x38] sm:$0x1f] %v1647
        %1666 = vst [vmem:[#allocation3 + $0x40] sm:$0x1f] %v1655
        %1667 = vst [vmem:[#allocation3 + $0x48] sm:$0x1f] %v1659
        %1668 = vst [vmem:[#allocation3 + $0x78] sm:$0x1f] %v1636
        %1669 = vst [vmem:[#allocation3 + $0x80] sm:$0x1f] %v1644
        %1670 = vst [vmem:[#allocation3 + $0x88] sm:$0x1f] %v1648
        %1671 = vst [vmem:[#allocation3 + $0x90] sm:$0x1f] %v1656
        %1672 = vst [vmem:[#allocation3 + $0x98] sm:$0x1f] %v1660
        %1673 = vst [vmem:[#allocation3 + $0xc8] sm:$0x1f] %v1637
        %1674 = vst [vmem:[#allocation3 + $0xd0] sm:$0x1f] %v1645
        %1675 = vst [vmem:[#allocation3 + $0xd8] sm:$0x1f] %v1649
        %1676 = vst [vmem:[#allocation3 + $0xe0] sm:$0x1f] %v1657
        %1677 = vst [vmem:[#allocation3 + $0xe8] sm:$0x1f] %v1661
        %1678 = vst [vmem:[#allocation3 + $0x118] sm:$0x1f] %v1638
        %1679 = vst [vmem:[#allocation3 + $0x120] sm:$0x1f] %v1646
        %1680 = vst [vmem:[#allocation3 + $0x128] sm:$0x1f] %v1650
        %1681 = vst [vmem:[#allocation3 + $0x130] sm:$0x1f] %v1658
        %1682 = vst [vmem:[#allocation3 + $0x138] sm:$0x1f] %v1662
        %v1683 = vld [vmem:[#allocation3] sm:$0xff]
        %v1684 = vld [vmem:[#allocation3 + $0x8] sm:$0xff]
        %v1685 = vld [vmem:[#allocation3 + $0x10] sm:$0xff]
        %v1686 = vld [vmem:[#allocation3 + $0x18] sm:$0xff]
        %v1687 = vld [vmem:[#allocation3 + $0x20] sm:$0xff]
        %v1688 = vld [vmem:[#allocation3 + $0x28] sm:$0xff]
        %v1689 = vld [vmem:[#allocation3 + $0x30] sm:$0xff]
        %v1690 = vld [vmem:[#allocation3 + $0x38] sm:$0xff]
        %v1691 = vld [vmem:[#allocation3 + $0x40] sm:$0xff]
        %v1692 = vld [vmem:[#allocation3 + $0x48] sm:$0xff]
        %v1693 = vld [vmem:[#allocation3 + $0x50] sm:$0xff]
        %v1694 = vld [vmem:[#allocation3 + $0x58] sm:$0xff]
        %v1695 = vld [vmem:[#allocation3 + $0x60] sm:$0xff]
        %v1696 = vld [vmem:[#allocation3 + $0x68] sm:$0xff]
        %v1697 = vld [vmem:[#allocation3 + $0x70] sm:$0xff]
        %v1698 = vld [vmem:[#allocation3 + $0x78] sm:$0xff]
        %v1699 = vld [vmem:[#allocation3 + $0x80] sm:$0xff]
        %v1700 = vld [vmem:[#allocation3 + $0x88] sm:$0xff]
        %v1701 = vld [vmem:[#allocation3 + $0x90] sm:$0xff]
        %v1702 = vld [vmem:[#allocation3 + $0x98] sm:$0xff]
        %v1703 = vld [vmem:[#allocation3 + $0xa0] sm:$0xff]
        %v1704 = vld [vmem:[#allocation3 + $0xa8] sm:$0xff]
        %v1705 = vld [vmem:[#allocation3 + $0xb0] sm:$0xff]
        %v1706 = vld [vmem:[#allocation3 + $0xb8] sm:$0xff]
        %v1707 = vld [vmem:[#allocation3 + $0xc0] sm:$0xff]
        %v1708 = vld [vmem:[#allocation3 + $0xc8] sm:$0xff]
        %v1709 = vld [vmem:[#allocation3 + $0xd0] sm:$0xff]
        %v1710 = vld [vmem:[#allocation3 + $0xd8] sm:$0xff]
        %v1711 = vld [vmem:[#allocation3 + $0xe0] sm:$0xff]
        %v1712 = vld [vmem:[#allocation3 + $0xe8] sm:$0xff]
        %v1713 = vld [vmem:[#allocation3 + $0xf0] sm:$0xff]
        %v1714 = vld [vmem:[#allocation3 + $0xf8] sm:$0xff]
        %v1715 = vld [vmem:[#allocation3 + $0x100] sm:$0xff]
        %v1716 = vld [vmem:[#allocation3 + $0x108] sm:$0xff]
        %v1717 = vld [vmem:[#allocation3 + $0x110] sm:$0xff]
        %v1718 = vld [vmem:[#allocation3 + $0x118] sm:$0xff]
        %v1719 = vld [vmem:[#allocation3 + $0x120] sm:$0xff]
        %v1720 = vld [vmem:[#allocation3 + $0x128] sm:$0xff]
        %v1721 = vld [vmem:[#allocation3 + $0x130] sm:$0xff]
        %v1722 = vld [vmem:[#allocation3 + $0x138] sm:$0xff]
        %v1723 = vpack.c.bf16 %v1693, %v1683
        %v1724 = vpack.c.bf16 %v1694, %v1684
        %v1725 = vpack.c.bf16 %v1695, %v1685
        %v1726 = vpack.c.bf16 %v1696, %v1686
        %v1727 = vpack.c.bf16 %v1697, %v1687
        %v1728 = vpack.c.bf16 %v1698, %v1688
        %v1729 = vpack.c.bf16 %v1699, %v1689
        %v1730 = vpack.c.bf16 %v1700, %v1690
        %v1731 = vpack.c.bf16 %v1701, %v1691
        %v1732 = vpack.c.bf16 %v1702, %v1692
        %v1733 = vpack.c.bf16 %v1713, %v1703
        %v1734 = vpack.c.bf16 %v1714, %v1704
        %v1735 = vpack.c.bf16 %v1715, %v1705
        %v1736 = vpack.c.bf16 %v1716, %v1706
        %v1737 = vpack.c.bf16 %v1717, %v1707
        %v1738 = vpack.c.bf16 %v1718, %v1708
        %v1739 = vpack.c.bf16 %v1719, %v1709
        %v1740 = vpack.c.bf16 %v1720, %v1710
        %v1741 = vpack.c.bf16 %v1721, %v1711
        %v1742 = vpack.c.bf16 %v1722, %v1712
        %v1743 = vld [vmem:[%s3] sm:$0xff]
        %v1744 = vld [vmem:[%s3 + $0x8] sm:$0xff]
        %v1745 = vld [vmem:[%s3 + $0x10] sm:$0xff]
        %v1746 = vld [vmem:[%s3 + $0x18] sm:$0xff]
        %v1747 = vld [vmem:[%s3 + $0x20] sm:$0xff]
        %v1748 = vld [vmem:[%s3 + $0x28] sm:$0xff]
        %v1749 = vld [vmem:[%s3 + $0x30] sm:$0xff]
        %v1750 = vld [vmem:[%s3 + $0x38] sm:$0xff]
        %v1751 = vld [vmem:[%s3 + $0x40] sm:$0xff]
        %v1752 = vld [vmem:[%s3 + $0x48] sm:$0xff]
        %v1753 = vld [vmem:[%s3 + $0x50] sm:$0xff]
        %v1754 = vld [vmem:[%s3 + $0x58] sm:$0xff]
        %v1755 = vld [vmem:[%s3 + $0x60] sm:$0xff]
        %v1756 = vld [vmem:[%s3 + $0x68] sm:$0xff]
        %v1757 = vld [vmem:[%s3 + $0x70] sm:$0xff]
        %v1758 = vld [vmem:[%s3 + $0x78] sm:$0xff]
        %v1759 = vld [vmem:[%s3 + $0x80] sm:$0xff]
        %v1760 = vld [vmem:[%s3 + $0x88] sm:$0xff]
        %v1761 = vld [vmem:[%s3 + $0x90] sm:$0xff]
        %v1762 = vld [vmem:[%s3 + $0x98] sm:$0xff]
        %v1763 = vld [vmem:[%s3 + $0xa0] sm:$0xff]
        %v1764 = vld [vmem:[%s3 + $0xa8] sm:$0xff]
        %v1765 = vld [vmem:[%s3 + $0xb0] sm:$0xff]
        %v1766 = vld [vmem:[%s3 + $0xb8] sm:$0xff]
        %v1767 = vld [vmem:[%s3 + $0xc0] sm:$0xff]
        %v1768 = vld [vmem:[%s3 + $0xc8] sm:$0xff]
        %v1769 = vld [vmem:[%s3 + $0xd0] sm:$0xff]
        %v1770 = vld [vmem:[%s3 + $0xd8] sm:$0xff]
        %v1771 = vld [vmem:[%s3 + $0xe0] sm:$0xff]
        %v1772 = vld [vmem:[%s3 + $0xe8] sm:$0xff]
        %v1773 = vld [vmem:[%s3 + $0xf0] sm:$0xff]
        %v1774 = vld [vmem:[%s3 + $0xf8] sm:$0xff]
        %v1775 = vld [vmem:[%s3 + $0x100] sm:$0xff]
        %v1776 = vld [vmem:[%s3 + $0x108] sm:$0xff]
        %v1777 = vld [vmem:[%s3 + $0x110] sm:$0xff]
        %v1778 = vld [vmem:[%s3 + $0x118] sm:$0xff]
        %v1779 = vld [vmem:[%s3 + $0x120] sm:$0xff]
        %v1780 = vld [vmem:[%s3 + $0x128] sm:$0xff]
        %v1781 = vld [vmem:[%s3 + $0x130] sm:$0xff]
        %v1782 = vld [vmem:[%s3 + $0x138] sm:$0xff]
        %v1783 = vld [vmem:[%s3 + $0x140] sm:$0xff]
        %v1784 = vld [vmem:[%s3 + $0x148] sm:$0xff]
        %v1785 = vld [vmem:[%s3 + $0x150] sm:$0xff]
        %v1786 = vld [vmem:[%s3 + $0x158] sm:$0xff]
        %v1787 = vld [vmem:[%s3 + $0x160] sm:$0xff]
        %v1788 = vld [vmem:[%s3 + $0x168] sm:$0xff]
        %v1789 = vld [vmem:[%s3 + $0x170] sm:$0xff]
        %v1790 = vld [vmem:[%s3 + $0x178] sm:$0xff]
        %v1791 = vld [vmem:[%s3 + $0x180] sm:$0xff]
        %v1792 = vld [vmem:[%s3 + $0x188] sm:$0xff]
        %v1793 = vld [vmem:[%s3 + $0x190] sm:$0xff]
        %v1794 = vld [vmem:[%s3 + $0x198] sm:$0xff]
        %v1795 = vld [vmem:[%s3 + $0x1a0] sm:$0xff]
        %v1796 = vld [vmem:[%s3 + $0x1a8] sm:$0xff]
        %v1797 = vld [vmem:[%s3 + $0x1b0] sm:$0xff]
        %v1798 = vld [vmem:[%s3 + $0x1b8] sm:$0xff]
        %v1799 = vld [vmem:[%s3 + $0x1c0] sm:$0xff]
        %v1800 = vld [vmem:[%s3 + $0x1c8] sm:$0xff]
        %v1801 = vld [vmem:[%s3 + $0x1d0] sm:$0xff]
        %v1802 = vld [vmem:[%s3 + $0x1d8] sm:$0xff]
        %v1803 = vld [vmem:[%s3 + $0x1e0] sm:$0xff]
        %v1804 = vld [vmem:[%s3 + $0x1e8] sm:$0xff]
        %v1805 = vld [vmem:[%s3 + $0x1f0] sm:$0xff]
        %v1806 = vld [vmem:[%s3 + $0x1f8] sm:$0xff]
        %v1807 = vld [vmem:[%s3 + $0x200] sm:$0xff]
        %v1808 = vld [vmem:[%s3 + $0x208] sm:$0xff]
        %v1809 = vld [vmem:[%s3 + $0x210] sm:$0xff]
        %v1810 = vld [vmem:[%s3 + $0x218] sm:$0xff]
        %v1811 = vld [vmem:[%s3 + $0x220] sm:$0xff]
        %v1812 = vld [vmem:[%s3 + $0x228] sm:$0xff]
        %v1813 = vld [vmem:[%s3 + $0x230] sm:$0xff]
        %v1814 = vld [vmem:[%s3 + $0x238] sm:$0xff]
        %v1815 = vld [vmem:[%s3 + $0x240] sm:$0xff]
        %v1816 = vld [vmem:[%s3 + $0x248] sm:$0xff]
        %v1817 = vld [vmem:[%s3 + $0x250] sm:$0xff]
        %v1818 = vld [vmem:[%s3 + $0x258] sm:$0xff]
        %v1819 = vld [vmem:[%s3 + $0x260] sm:$0xff]
        %v1820 = vld [vmem:[%s3 + $0x268] sm:$0xff]
        %v1821 = vld [vmem:[%s3 + $0x270] sm:$0xff]
        %v1822 = vld [vmem:[%s3 + $0x278] sm:$0xff]
        %v1823 = vld [vmem:[%s3 + $0x280] sm:$0xff]
        %v1824 = vld [vmem:[%s3 + $0x288] sm:$0xff]
        %v1825 = vld [vmem:[%s3 + $0x290] sm:$0xff]
        %v1826 = vld [vmem:[%s3 + $0x298] sm:$0xff]
        %v1827 = vld [vmem:[%s3 + $0x2a0] sm:$0xff]
        %v1828 = vld [vmem:[%s3 + $0x2a8] sm:$0xff]
        %v1829 = vld [vmem:[%s3 + $0x2b0] sm:$0xff]
        %v1830 = vld [vmem:[%s3 + $0x2b8] sm:$0xff]
        %v1831 = vld [vmem:[%s3 + $0x2c0] sm:$0xff]
        %v1832 = vld [vmem:[%s3 + $0x2c8] sm:$0xff]
        %v1833 = vld [vmem:[%s3 + $0x2d0] sm:$0xff]
        %v1834 = vld [vmem:[%s3 + $0x2d8] sm:$0xff]
        %v1835 = vld [vmem:[%s3 + $0x2e0] sm:$0xff]
        %v1836 = vld [vmem:[%s3 + $0x2e8] sm:$0xff]
        %v1837 = vld [vmem:[%s3 + $0x2f0] sm:$0xff]
        %v1838 = vld [vmem:[%s3 + $0x2f8] sm:$0xff]
        %v1839 = vld [vmem:[%s3 + $0x300] sm:$0xff]
        %v1840 = vld [vmem:[%s3 + $0x308] sm:$0xff]
        %v1841 = vld [vmem:[%s3 + $0x310] sm:$0xff]
        %v1842 = vld [vmem:[%s3 + $0x318] sm:$0xff]
        %v1843 = vld [vmem:[%s3 + $0x320] sm:$0xff]
        %v1844 = vld [vmem:[%s3 + $0x328] sm:$0xff]
        %v1845 = vld [vmem:[%s3 + $0x330] sm:$0xff]
        %v1846 = vld [vmem:[%s3 + $0x338] sm:$0xff]
        %v1847 = vld [vmem:[%s3 + $0x340] sm:$0xff]
        %v1848 = vld [vmem:[%s3 + $0x348] sm:$0xff]
        %v1849 = vld [vmem:[%s3 + $0x350] sm:$0xff]
        %v1850 = vld [vmem:[%s3 + $0x358] sm:$0xff]
        %v1851 = vld [vmem:[%s3 + $0x360] sm:$0xff]
        %v1852 = vld [vmem:[%s3 + $0x368] sm:$0xff]
        %v1853 = vld [vmem:[%s3 + $0x370] sm:$0xff]
        %v1854 = vld [vmem:[%s3 + $0x378] sm:$0xff]
        %v1855 = vld [vmem:[%s3 + $0x380] sm:$0xff]
        %v1856 = vld [vmem:[%s3 + $0x388] sm:$0xff]
        %v1857 = vld [vmem:[%s3 + $0x390] sm:$0xff]
        %v1858 = vld [vmem:[%s3 + $0x398] sm:$0xff]
        %v1859 = vld [vmem:[%s3 + $0x3a0] sm:$0xff]
        %v1860 = vld [vmem:[%s3 + $0x3a8] sm:$0xff]
        %v1861 = vld [vmem:[%s3 + $0x3b0] sm:$0xff]
        %v1862 = vld [vmem:[%s3 + $0x3b8] sm:$0xff]
        %v1863 = vld [vmem:[%s3 + $0x3c0] sm:$0xff]
        %v1864 = vld [vmem:[%s3 + $0x3c8] sm:$0xff]
        %v1865 = vld [vmem:[%s3 + $0x3d0] sm:$0xff]
        %v1866 = vld [vmem:[%s3 + $0x3d8] sm:$0xff]
        %v1867 = vld [vmem:[%s3 + $0x3e0] sm:$0xff]
        %v1868 = vld [vmem:[%s3 + $0x3e8] sm:$0xff]
        %v1869 = vld [vmem:[%s3 + $0x3f0] sm:$0xff]
        %v1870 = vld [vmem:[%s3 + $0x3f8] sm:$0xff]
        %v1871 = vld [vmem:[%s3 + $0x400] sm:$0xff]
        %v1872 = vld [vmem:[%s3 + $0x408] sm:$0xff]
        %v1873 = vld [vmem:[%s3 + $0x410] sm:$0xff]
        %v1874 = vld [vmem:[%s3 + $0x418] sm:$0xff]
        %v1875 = vld [vmem:[%s3 + $0x420] sm:$0xff]
        %v1876 = vld [vmem:[%s3 + $0x428] sm:$0xff]
        %v1877 = vld [vmem:[%s3 + $0x430] sm:$0xff]
        %v1878 = vld [vmem:[%s3 + $0x438] sm:$0xff]
        %v1879 = vld [vmem:[%s3 + $0x440] sm:$0xff]
        %v1880 = vld [vmem:[%s3 + $0x448] sm:$0xff]
        %v1881 = vld [vmem:[%s3 + $0x450] sm:$0xff]
        %v1882 = vld [vmem:[%s3 + $0x458] sm:$0xff]
        %v1883 = vld [vmem:[%s3 + $0x460] sm:$0xff]
        %v1884 = vld [vmem:[%s3 + $0x468] sm:$0xff]
        %v1885 = vld [vmem:[%s3 + $0x470] sm:$0xff]
        %v1886 = vld [vmem:[%s3 + $0x478] sm:$0xff]
        %v1887 = vld [vmem:[%s3 + $0x480] sm:$0xff]
        %v1888 = vld [vmem:[%s3 + $0x488] sm:$0xff]
        %v1889 = vld [vmem:[%s3 + $0x490] sm:$0xff]
        %v1890 = vld [vmem:[%s3 + $0x498] sm:$0xff]
        %v1891 = vld [vmem:[%s3 + $0x4a0] sm:$0xff]
        %v1892 = vld [vmem:[%s3 + $0x4a8] sm:$0xff]
        %v1893 = vld [vmem:[%s3 + $0x4b0] sm:$0xff]
        %v1894 = vld [vmem:[%s3 + $0x4b8] sm:$0xff]
        %v1895 = vld [vmem:[%s3 + $0x4c0] sm:$0xff]
        %v1896 = vld [vmem:[%s3 + $0x4c8] sm:$0xff]
        %v1897 = vld [vmem:[%s3 + $0x4d0] sm:$0xff]
        %v1898 = vld [vmem:[%s3 + $0x4d8] sm:$0xff]
        %v1899 = vld [vmem:[%s3 + $0x4e0] sm:$0xff]
        %v1900 = vld [vmem:[%s3 + $0x4e8] sm:$0xff]
        %v1901 = vld [vmem:[%s3 + $0x4f0] sm:$0xff]
        %v1902 = vld [vmem:[%s3 + $0x4f8] sm:$0xff]
        %v1903 = vld [vmem:[%s4] sm:$0x3]
        %v1905 = vlaneseq
        %v1906 = vshrl.u32 %v1905, 7
        %v1907 = vsub.s32 0, %v1906
        %v1908 = vrot.slane %v1903, %v1907
        %v1909 = vlaneseq
        %v1910 = vshrl.u32 %v1909, 7
        %v1911 = vsub.s32 1, %v1910
        %v1912 = vrot.slane %v1903, %v1911
        %v2075 = vunpack.c.l.b16 %v1743
        %v2076 = vunpack.c.h.b16 %v1743
        %v2077 = vunpack.c.l.b16 %v1744
        %v2078 = vunpack.c.h.b16 %v1744
        %v2079 = vunpack.c.l.b16 %v1745
        %v2080 = vunpack.c.h.b16 %v1745
        %v2081 = vunpack.c.l.b16 %v1746
        %v2082 = vunpack.c.h.b16 %v1746
        %v2083 = vunpack.c.l.b16 %v1747
        %v2084 = vunpack.c.h.b16 %v1747
        %v2085 = vunpack.c.l.b16 %v1748
        %v2086 = vunpack.c.h.b16 %v1748
        %v2087 = vunpack.c.l.b16 %v1749
        %v2088 = vunpack.c.h.b16 %v1749
        %v2089 = vunpack.c.l.b16 %v1750
        %v2090 = vunpack.c.h.b16 %v1750
        %v2091 = vunpack.c.l.b16 %v1751
        %v2092 = vunpack.c.h.b16 %v1751
        %v2093 = vunpack.c.l.b16 %v1752
        %v2094 = vunpack.c.h.b16 %v1752
        %v2095 = vunpack.c.l.b16 %v1753
        %v2096 = vunpack.c.h.b16 %v1753
        %v2097 = vunpack.c.l.b16 %v1754
        %v2098 = vunpack.c.h.b16 %v1754
        %v2099 = vunpack.c.l.b16 %v1755
        %v2100 = vunpack.c.h.b16 %v1755
        %v2101 = vunpack.c.l.b16 %v1756
        %v2102 = vunpack.c.h.b16 %v1756
        %v2103 = vunpack.c.l.b16 %v1757
        %v2104 = vunpack.c.h.b16 %v1757
        %v2105 = vunpack.c.l.b16 %v1758
        %v2106 = vunpack.c.h.b16 %v1758
        %v2107 = vunpack.c.l.b16 %v1759
        %v2108 = vunpack.c.h.b16 %v1759
        %v2109 = vunpack.c.l.b16 %v1760
        %v2110 = vunpack.c.h.b16 %v1760
        %v2111 = vunpack.c.l.b16 %v1761
        %v2112 = vunpack.c.h.b16 %v1761
        %v2113 = vunpack.c.l.b16 %v1762
        %v2114 = vunpack.c.h.b16 %v1762
        %v2115 = vunpack.c.l.b16 %v1763
        %v2116 = vunpack.c.h.b16 %v1763
        %v2117 = vunpack.c.l.b16 %v1764
        %v2118 = vunpack.c.h.b16 %v1764
        %v2119 = vunpack.c.l.b16 %v1765
        %v2120 = vunpack.c.h.b16 %v1765
        %v2121 = vunpack.c.l.b16 %v1766
        %v2122 = vunpack.c.h.b16 %v1766
        %v2123 = vunpack.c.l.b16 %v1767
        %v2124 = vunpack.c.h.b16 %v1767
        %v2125 = vunpack.c.l.b16 %v1768
        %v2126 = vunpack.c.h.b16 %v1768
        %v2127 = vunpack.c.l.b16 %v1769
        %v2128 = vunpack.c.h.b16 %v1769
        %v2129 = vunpack.c.l.b16 %v1770
        %v2130 = vunpack.c.h.b16 %v1770
        %v2131 = vunpack.c.l.b16 %v1771
        %v2132 = vunpack.c.h.b16 %v1771
        %v2133 = vunpack.c.l.b16 %v1772
        %v2134 = vunpack.c.h.b16 %v1772
        %v2135 = vunpack.c.l.b16 %v1773
        %v2136 = vunpack.c.h.b16 %v1773
        %v2137 = vunpack.c.l.b16 %v1774
        %v2138 = vunpack.c.h.b16 %v1774
        %v2139 = vunpack.c.l.b16 %v1775
        %v2140 = vunpack.c.h.b16 %v1775
        %v2141 = vunpack.c.l.b16 %v1776
        %v2142 = vunpack.c.h.b16 %v1776
        %v2143 = vunpack.c.l.b16 %v1777
        %v2144 = vunpack.c.h.b16 %v1777
        %v2145 = vunpack.c.l.b16 %v1778
        %v2146 = vunpack.c.h.b16 %v1778
        %v2147 = vunpack.c.l.b16 %v1779
        %v2148 = vunpack.c.h.b16 %v1779
        %v2149 = vunpack.c.l.b16 %v1780
        %v2150 = vunpack.c.h.b16 %v1780
        %v2151 = vunpack.c.l.b16 %v1781
        %v2152 = vunpack.c.h.b16 %v1781
        %v2153 = vunpack.c.l.b16 %v1782
        %v2154 = vunpack.c.h.b16 %v1782
        %v2155 = vunpack.c.l.b16 %v1783
        %v2156 = vunpack.c.h.b16 %v1783
        %v2157 = vunpack.c.l.b16 %v1784
        %v2158 = vunpack.c.h.b16 %v1784
        %v2159 = vunpack.c.l.b16 %v1785
        %v2160 = vunpack.c.h.b16 %v1785
        %v2161 = vunpack.c.l.b16 %v1786
        %v2162 = vunpack.c.h.b16 %v1786
        %v2163 = vunpack.c.l.b16 %v1787
        %v2164 = vunpack.c.h.b16 %v1787
        %v2165 = vunpack.c.l.b16 %v1788
        %v2166 = vunpack.c.h.b16 %v1788
        %v2167 = vunpack.c.l.b16 %v1789
        %v2168 = vunpack.c.h.b16 %v1789
        %v2169 = vunpack.c.l.b16 %v1790
        %v2170 = vunpack.c.h.b16 %v1790
        %v2171 = vunpack.c.l.b16 %v1791
        %v2172 = vunpack.c.h.b16 %v1791
        %v2173 = vunpack.c.l.b16 %v1792
        %v2174 = vunpack.c.h.b16 %v1792
        %v2175 = vunpack.c.l.b16 %v1793
        %v2176 = vunpack.c.h.b16 %v1793
        %v2177 = vunpack.c.l.b16 %v1794
        %v2178 = vunpack.c.h.b16 %v1794
        %v2179 = vunpack.c.l.b16 %v1795
        %v2180 = vunpack.c.h.b16 %v1795
        %v2181 = vunpack.c.l.b16 %v1796
        %v2182 = vunpack.c.h.b16 %v1796
        %v2183 = vunpack.c.l.b16 %v1797
        %v2184 = vunpack.c.h.b16 %v1797
        %v2185 = vunpack.c.l.b16 %v1798
        %v2186 = vunpack.c.h.b16 %v1798
        %v2187 = vunpack.c.l.b16 %v1799
        %v2188 = vunpack.c.h.b16 %v1799
        %v2189 = vunpack.c.l.b16 %v1800
        %v2190 = vunpack.c.h.b16 %v1800
        %v2191 = vunpack.c.l.b16 %v1801
        %v2192 = vunpack.c.h.b16 %v1801
        %v2193 = vunpack.c.l.b16 %v1802
        %v2194 = vunpack.c.h.b16 %v1802
        %v2195 = vunpack.c.l.b16 %v1803
        %v2196 = vunpack.c.h.b16 %v1803
        %v2197 = vunpack.c.l.b16 %v1804
        %v2198 = vunpack.c.h.b16 %v1804
        %v2199 = vunpack.c.l.b16 %v1805
        %v2200 = vunpack.c.h.b16 %v1805
        %v2201 = vunpack.c.l.b16 %v1806
        %v2202 = vunpack.c.h.b16 %v1806
        %v2203 = vunpack.c.l.b16 %v1807
        %v2204 = vunpack.c.h.b16 %v1807
        %v2205 = vunpack.c.l.b16 %v1808
        %v2206 = vunpack.c.h.b16 %v1808
        %v2207 = vunpack.c.l.b16 %v1809
        %v2208 = vunpack.c.h.b16 %v1809
        %v2209 = vunpack.c.l.b16 %v1810
        %v2210 = vunpack.c.h.b16 %v1810
        %v2211 = vunpack.c.l.b16 %v1811
        %v2212 = vunpack.c.h.b16 %v1811
        %v2213 = vunpack.c.l.b16 %v1812
        %v2214 = vunpack.c.h.b16 %v1812
        %v2215 = vunpack.c.l.b16 %v1813
        %v2216 = vunpack.c.h.b16 %v1813
        %v2217 = vunpack.c.l.b16 %v1814
        %v2218 = vunpack.c.h.b16 %v1814
        %v2219 = vunpack.c.l.b16 %v1815
        %v2220 = vunpack.c.h.b16 %v1815
        %v2221 = vunpack.c.l.b16 %v1816
        %v2222 = vunpack.c.h.b16 %v1816
        %v2223 = vunpack.c.l.b16 %v1817
        %v2224 = vunpack.c.h.b16 %v1817
        %v2225 = vunpack.c.l.b16 %v1818
        %v2226 = vunpack.c.h.b16 %v1818
        %v2227 = vunpack.c.l.b16 %v1819
        %v2228 = vunpack.c.h.b16 %v1819
        %v2229 = vunpack.c.l.b16 %v1820
        %v2230 = vunpack.c.h.b16 %v1820
        %v2231 = vunpack.c.l.b16 %v1821
        %v2232 = vunpack.c.h.b16 %v1821
        %v2233 = vunpack.c.l.b16 %v1822
        %v2234 = vunpack.c.h.b16 %v1822
        %v2235 = vunpack.c.l.b16 %v1823
        %v2236 = vunpack.c.h.b16 %v1823
        %v2237 = vunpack.c.l.b16 %v1824
        %v2238 = vunpack.c.h.b16 %v1824
        %v2239 = vunpack.c.l.b16 %v1825
        %v2240 = vunpack.c.h.b16 %v1825
        %v2241 = vunpack.c.l.b16 %v1826
        %v2242 = vunpack.c.h.b16 %v1826
        %v2243 = vunpack.c.l.b16 %v1827
        %v2244 = vunpack.c.h.b16 %v1827
        %v2245 = vunpack.c.l.b16 %v1828
        %v2246 = vunpack.c.h.b16 %v1828
        %v2247 = vunpack.c.l.b16 %v1829
        %v2248 = vunpack.c.h.b16 %v1829
        %v2249 = vunpack.c.l.b16 %v1830
        %v2250 = vunpack.c.h.b16 %v1830
        %v2251 = vunpack.c.l.b16 %v1831
        %v2252 = vunpack.c.h.b16 %v1831
        %v2253 = vunpack.c.l.b16 %v1832
        %v2254 = vunpack.c.h.b16 %v1832
        %v2255 = vunpack.c.l.b16 %v1833
        %v2256 = vunpack.c.h.b16 %v1833
        %v2257 = vunpack.c.l.b16 %v1834
        %v2258 = vunpack.c.h.b16 %v1834
        %v2259 = vunpack.c.l.b16 %v1835
        %v2260 = vunpack.c.h.b16 %v1835
        %v2261 = vunpack.c.l.b16 %v1836
        %v2262 = vunpack.c.h.b16 %v1836
        %v2263 = vunpack.c.l.b16 %v1837
        %v2264 = vunpack.c.h.b16 %v1837
        %v2265 = vunpack.c.l.b16 %v1838
        %v2266 = vunpack.c.h.b16 %v1838
        %v2267 = vunpack.c.l.b16 %v1839
        %v2268 = vunpack.c.h.b16 %v1839
        %v2269 = vunpack.c.l.b16 %v1840
        %v2270 = vunpack.c.h.b16 %v1840
        %v2271 = vunpack.c.l.b16 %v1841
        %v2272 = vunpack.c.h.b16 %v1841
        %v2273 = vunpack.c.l.b16 %v1842
        %v2274 = vunpack.c.h.b16 %v1842
        %v2275 = vunpack.c.l.b16 %v1843
        %v2276 = vunpack.c.h.b16 %v1843
        %v2277 = vunpack.c.l.b16 %v1844
        %v2278 = vunpack.c.h.b16 %v1844
        %v2279 = vunpack.c.l.b16 %v1845
        %v2280 = vunpack.c.h.b16 %v1845
        %v2281 = vunpack.c.l.b16 %v1846
        %v2282 = vunpack.c.h.b16 %v1846
        %v2283 = vunpack.c.l.b16 %v1847
        %v2284 = vunpack.c.h.b16 %v1847
        %v2285 = vunpack.c.l.b16 %v1848
        %v2286 = vunpack.c.h.b16 %v1848
        %v2287 = vunpack.c.l.b16 %v1849
        %v2288 = vunpack.c.h.b16 %v1849
        %v2289 = vunpack.c.l.b16 %v1850
        %v2290 = vunpack.c.h.b16 %v1850
        %v2291 = vunpack.c.l.b16 %v1851
        %v2292 = vunpack.c.h.b16 %v1851
        %v2293 = vunpack.c.l.b16 %v1852
        %v2294 = vunpack.c.h.b16 %v1852
        %v2295 = vunpack.c.l.b16 %v1853
        %v2296 = vunpack.c.h.b16 %v1853
        %v2297 = vunpack.c.l.b16 %v1854
        %v2298 = vunpack.c.h.b16 %v1854
        %v2299 = vunpack.c.l.b16 %v1855
        %v2300 = vunpack.c.h.b16 %v1855
        %v2301 = vunpack.c.l.b16 %v1856
        %v2302 = vunpack.c.h.b16 %v1856
        %v2303 = vunpack.c.l.b16 %v1857
        %v2304 = vunpack.c.h.b16 %v1857
        %v2305 = vunpack.c.l.b16 %v1858
        %v2306 = vunpack.c.h.b16 %v1858
        %v2307 = vunpack.c.l.b16 %v1859
        %v2308 = vunpack.c.h.b16 %v1859
        %v2309 = vunpack.c.l.b16 %v1860
        %v2310 = vunpack.c.h.b16 %v1860
        %v2311 = vunpack.c.l.b16 %v1861
        %v2312 = vunpack.c.h.b16 %v1861
        %v2313 = vunpack.c.l.b16 %v1862
        %v2314 = vunpack.c.h.b16 %v1862
        %v2315 = vunpack.c.l.b16 %v1863
        %v2316 = vunpack.c.h.b16 %v1863
        %v2317 = vunpack.c.l.b16 %v1864
        %v2318 = vunpack.c.h.b16 %v1864
        %v2319 = vunpack.c.l.b16 %v1865
        %v2320 = vunpack.c.h.b16 %v1865
        %v2321 = vunpack.c.l.b16 %v1866
        %v2322 = vunpack.c.h.b16 %v1866
        %v2323 = vunpack.c.l.b16 %v1867
        %v2324 = vunpack.c.h.b16 %v1867
        %v2325 = vunpack.c.l.b16 %v1868
        %v2326 = vunpack.c.h.b16 %v1868
        %v2327 = vunpack.c.l.b16 %v1869
        %v2328 = vunpack.c.h.b16 %v1869
        %v2329 = vunpack.c.l.b16 %v1870
        %v2330 = vunpack.c.h.b16 %v1870
        %v2331 = vunpack.c.l.b16 %v1871
        %v2332 = vunpack.c.h.b16 %v1871
        %v2333 = vunpack.c.l.b16 %v1872
        %v2334 = vunpack.c.h.b16 %v1872
        %v2335 = vunpack.c.l.b16 %v1873
        %v2336 = vunpack.c.h.b16 %v1873
        %v2337 = vunpack.c.l.b16 %v1874
        %v2338 = vunpack.c.h.b16 %v1874
        %v2339 = vunpack.c.l.b16 %v1875
        %v2340 = vunpack.c.h.b16 %v1875
        %v2341 = vunpack.c.l.b16 %v1876
        %v2342 = vunpack.c.h.b16 %v1876
        %v2343 = vunpack.c.l.b16 %v1877
        %v2344 = vunpack.c.h.b16 %v1877
        %v2345 = vunpack.c.l.b16 %v1878
        %v2346 = vunpack.c.h.b16 %v1878
        %v2347 = vunpack.c.l.b16 %v1879
        %v2348 = vunpack.c.h.b16 %v1879
        %v2349 = vunpack.c.l.b16 %v1880
        %v2350 = vunpack.c.h.b16 %v1880
        %v2351 = vunpack.c.l.b16 %v1881
        %v2352 = vunpack.c.h.b16 %v1881
        %v2353 = vunpack.c.l.b16 %v1882
        %v2354 = vunpack.c.h.b16 %v1882
        %v2355 = vunpack.c.l.b16 %v1883
        %v2356 = vunpack.c.h.b16 %v1883
        %v2357 = vunpack.c.l.b16 %v1884
        %v2358 = vunpack.c.h.b16 %v1884
        %v2359 = vunpack.c.l.b16 %v1885
        %v2360 = vunpack.c.h.b16 %v1885
        %v2361 = vunpack.c.l.b16 %v1886
        %v2362 = vunpack.c.h.b16 %v1886
        %v2363 = vunpack.c.l.b16 %v1887
        %v2364 = vunpack.c.h.b16 %v1887
        %v2365 = vunpack.c.l.b16 %v1888
        %v2366 = vunpack.c.h.b16 %v1888
        %v2367 = vunpack.c.l.b16 %v1889
        %v2368 = vunpack.c.h.b16 %v1889
        %v2369 = vunpack.c.l.b16 %v1890
        %v2370 = vunpack.c.h.b16 %v1890
        %v2371 = vunpack.c.l.b16 %v1891
        %v2372 = vunpack.c.h.b16 %v1891
        %v2373 = vunpack.c.l.b16 %v1892
        %v2374 = vunpack.c.h.b16 %v1892
        %v2375 = vunpack.c.l.b16 %v1893
        %v2376 = vunpack.c.h.b16 %v1893
        %v2377 = vunpack.c.l.b16 %v1894
        %v2378 = vunpack.c.h.b16 %v1894
        %v2379 = vunpack.c.l.b16 %v1895
        %v2380 = vunpack.c.h.b16 %v1895
        %v2381 = vunpack.c.l.b16 %v1896
        %v2382 = vunpack.c.h.b16 %v1896
        %v2383 = vunpack.c.l.b16 %v1897
        %v2384 = vunpack.c.h.b16 %v1897
        %v2385 = vunpack.c.l.b16 %v1898
        %v2386 = vunpack.c.h.b16 %v1898
        %v2387 = vunpack.c.l.b16 %v1899
        %v2388 = vunpack.c.h.b16 %v1899
        %v2389 = vunpack.c.l.b16 %v1900
        %v2390 = vunpack.c.h.b16 %v1900
        %v2391 = vunpack.c.l.b16 %v1901
        %v2392 = vunpack.c.h.b16 %v1901
        %v2393 = vunpack.c.l.b16 %v1902
        %v2394 = vunpack.c.h.b16 %v1902
        %v2395 = vpack.c.b16 %v2077, %v2075
        %v2396 = vpack.c.b16 %v2078, %v2076
        %v2397 = vpack.c.b16 %v2081, %v2079
        %v2398 = vpack.c.b16 %v2082, %v2080
        %v2399 = vpack.c.b16 %v2085, %v2083
        %v2400 = vpack.c.b16 %v2086, %v2084
        %v2401 = vpack.c.b16 %v2089, %v2087
        %v2402 = vpack.c.b16 %v2090, %v2088
        %v2403 = vpack.c.b16 %v2093, %v2091
        %v2404 = vpack.c.b16 %v2094, %v2092
        %v2405 = vpack.c.b16 %v2097, %v2095
        %v2406 = vpack.c.b16 %v2098, %v2096
        %v2407 = vpack.c.b16 %v2101, %v2099
        %v2408 = vpack.c.b16 %v2102, %v2100
        %v2409 = vpack.c.b16 %v2105, %v2103
        %v2410 = vpack.c.b16 %v2106, %v2104
        %v2411 = vpack.c.b16 %v2109, %v2107
        %v2412 = vpack.c.b16 %v2110, %v2108
        %v2413 = vpack.c.b16 %v2113, %v2111
        %v2414 = vpack.c.b16 %v2114, %v2112
        %v2415 = vpack.c.b16 %v2117, %v2115
        %v2416 = vpack.c.b16 %v2118, %v2116
        %v2417 = vpack.c.b16 %v2121, %v2119
        %v2418 = vpack.c.b16 %v2122, %v2120
        %v2419 = vpack.c.b16 %v2125, %v2123
        %v2420 = vpack.c.b16 %v2126, %v2124
        %v2421 = vpack.c.b16 %v2129, %v2127
        %v2422 = vpack.c.b16 %v2130, %v2128
        %v2423 = vpack.c.b16 %v2133, %v2131
        %v2424 = vpack.c.b16 %v2134, %v2132
        %v2425 = vpack.c.b16 %v2137, %v2135
        %v2426 = vpack.c.b16 %v2138, %v2136
        %v2427 = vpack.c.b16 %v2141, %v2139
        %v2428 = vpack.c.b16 %v2142, %v2140
        %v2429 = vpack.c.b16 %v2145, %v2143
        %v2430 = vpack.c.b16 %v2146, %v2144
        %v2431 = vpack.c.b16 %v2149, %v2147
        %v2432 = vpack.c.b16 %v2150, %v2148
        %v2433 = vpack.c.b16 %v2153, %v2151
        %v2434 = vpack.c.b16 %v2154, %v2152
        %v2435 = vpack.c.b16 %v2157, %v2155
        %v2436 = vpack.c.b16 %v2158, %v2156
        %v2437 = vpack.c.b16 %v2161, %v2159
        %v2438 = vpack.c.b16 %v2162, %v2160
        %v2439 = vpack.c.b16 %v2165, %v2163
        %v2440 = vpack.c.b16 %v2166, %v2164
        %v2441 = vpack.c.b16 %v2169, %v2167
        %v2442 = vpack.c.b16 %v2170, %v2168
        %v2443 = vpack.c.b16 %v2173, %v2171
        %v2444 = vpack.c.b16 %v2174, %v2172
        %v2445 = vpack.c.b16 %v2177, %v2175
        %v2446 = vpack.c.b16 %v2178, %v2176
        %v2447 = vpack.c.b16 %v2181, %v2179
        %v2448 = vpack.c.b16 %v2182, %v2180
        %v2449 = vpack.c.b16 %v2185, %v2183
        %v2450 = vpack.c.b16 %v2186, %v2184
        %v2451 = vpack.c.b16 %v2189, %v2187
        %v2452 = vpack.c.b16 %v2190, %v2188
        %v2453 = vpack.c.b16 %v2193, %v2191
        %v2454 = vpack.c.b16 %v2194, %v2192
        %v2455 = vpack.c.b16 %v2197, %v2195
        %v2456 = vpack.c.b16 %v2198, %v2196
        %v2457 = vpack.c.b16 %v2201, %v2199
        %v2458 = vpack.c.b16 %v2202, %v2200
        %v2459 = vpack.c.b16 %v2205, %v2203
        %v2460 = vpack.c.b16 %v2206, %v2204
        %v2461 = vpack.c.b16 %v2209, %v2207
        %v2462 = vpack.c.b16 %v2210, %v2208
        %v2463 = vpack.c.b16 %v2213, %v2211
        %v2464 = vpack.c.b16 %v2214, %v2212
        %v2465 = vpack.c.b16 %v2217, %v2215
        %v2466 = vpack.c.b16 %v2218, %v2216
        %v2467 = vpack.c.b16 %v2221, %v2219
        %v2468 = vpack.c.b16 %v2222, %v2220
        %v2469 = vpack.c.b16 %v2225, %v2223
        %v2470 = vpack.c.b16 %v2226, %v2224
        %v2471 = vpack.c.b16 %v2229, %v2227
        %v2472 = vpack.c.b16 %v2230, %v2228
        %v2473 = vpack.c.b16 %v2233, %v2231
        %v2474 = vpack.c.b16 %v2234, %v2232
        %v2475 = vpack.c.b16 %v2237, %v2235
        %v2476 = vpack.c.b16 %v2238, %v2236
        %v2477 = vpack.c.b16 %v2241, %v2239
        %v2478 = vpack.c.b16 %v2242, %v2240
        %v2479 = vpack.c.b16 %v2245, %v2243
        %v2480 = vpack.c.b16 %v2246, %v2244
        %v2481 = vpack.c.b16 %v2249, %v2247
        %v2482 = vpack.c.b16 %v2250, %v2248
        %v2483 = vpack.c.b16 %v2253, %v2251
        %v2484 = vpack.c.b16 %v2254, %v2252
        %v2485 = vpack.c.b16 %v2257, %v2255
        %v2486 = vpack.c.b16 %v2258, %v2256
        %v2487 = vpack.c.b16 %v2261, %v2259
        %v2488 = vpack.c.b16 %v2262, %v2260
        %v2489 = vpack.c.b16 %v2265, %v2263
        %v2490 = vpack.c.b16 %v2266, %v2264
        %v2491 = vpack.c.b16 %v2269, %v2267
        %v2492 = vpack.c.b16 %v2270, %v2268
        %v2493 = vpack.c.b16 %v2273, %v2271
        %v2494 = vpack.c.b16 %v2274, %v2272
        %v2495 = vpack.c.b16 %v2277, %v2275
        %v2496 = vpack.c.b16 %v2278, %v2276
        %v2497 = vpack.c.b16 %v2281, %v2279
        %v2498 = vpack.c.b16 %v2282, %v2280
        %v2499 = vpack.c.b16 %v2285, %v2283
        %v2500 = vpack.c.b16 %v2286, %v2284
        %v2501 = vpack.c.b16 %v2289, %v2287
        %v2502 = vpack.c.b16 %v2290, %v2288
        %v2503 = vpack.c.b16 %v2293, %v2291
        %v2504 = vpack.c.b16 %v2294, %v2292
        %v2505 = vpack.c.b16 %v2297, %v2295
        %v2506 = vpack.c.b16 %v2298, %v2296
        %v2507 = vpack.c.b16 %v2301, %v2299
        %v2508 = vpack.c.b16 %v2302, %v2300
        %v2509 = vpack.c.b16 %v2305, %v2303
        %v2510 = vpack.c.b16 %v2306, %v2304
        %v2511 = vpack.c.b16 %v2309, %v2307
        %v2512 = vpack.c.b16 %v2310, %v2308
        %v2513 = vpack.c.b16 %v2313, %v2311
        %v2514 = vpack.c.b16 %v2314, %v2312
        %v2515 = vpack.c.b16 %v2317, %v2315
        %v2516 = vpack.c.b16 %v2318, %v2316
        %v2517 = vpack.c.b16 %v2321, %v2319
        %v2518 = vpack.c.b16 %v2322, %v2320
        %v2519 = vpack.c.b16 %v2325, %v2323
        %v2520 = vpack.c.b16 %v2326, %v2324
        %v2521 = vpack.c.b16 %v2329, %v2327
        %v2522 = vpack.c.b16 %v2330, %v2328
        %v2523 = vpack.c.b16 %v2333, %v2331
        %v2524 = vpack.c.b16 %v2334, %v2332
        %v2525 = vpack.c.b16 %v2337, %v2335
        %v2526 = vpack.c.b16 %v2338, %v2336
        %v2527 = vpack.c.b16 %v2341, %v2339
        %v2528 = vpack.c.b16 %v2342, %v2340
        %v2529 = vpack.c.b16 %v2345, %v2343
        %v2530 = vpack.c.b16 %v2346, %v2344
        %v2531 = vpack.c.b16 %v2349, %v2347
        %v2532 = vpack.c.b16 %v2350, %v2348
        %v2533 = vpack.c.b16 %v2353, %v2351
        %v2534 = vpack.c.b16 %v2354, %v2352
        %v2535 = vpack.c.b16 %v2357, %v2355
        %v2536 = vpack.c.b16 %v2358, %v2356
        %v2537 = vpack.c.b16 %v2361, %v2359
        %v2538 = vpack.c.b16 %v2362, %v2360
        %v2539 = vpack.c.b16 %v2365, %v2363
        %v2540 = vpack.c.b16 %v2366, %v2364
        %v2541 = vpack.c.b16 %v2369, %v2367
        %v2542 = vpack.c.b16 %v2370, %v2368
        %v2543 = vpack.c.b16 %v2373, %v2371
        %v2544 = vpack.c.b16 %v2374, %v2372
        %v2545 = vpack.c.b16 %v2377, %v2375
        %v2546 = vpack.c.b16 %v2378, %v2376
        %v2547 = vpack.c.b16 %v2381, %v2379
        %v2548 = vpack.c.b16 %v2382, %v2380
        %v2549 = vpack.c.b16 %v2385, %v2383
        %v2550 = vpack.c.b16 %v2386, %v2384
        %v2551 = vpack.c.b16 %v2389, %v2387
        %v2552 = vpack.c.b16 %v2390, %v2388
        %v2553 = vpack.c.b16 %v2393, %v2391
        %v2554 = vpack.c.b16 %v2394, %v2392
        %2715 = vmatprep.subr.bf16.mxu0 %v2410
        %2716 = vmatpush1.bf16.msra.mxu0 %v2409
        %2717 = vmatprep.subr.bf16.mxu0 %v2408
        %2718 = vmatpush1.bf16.msra.mxu0 %v2407
        %2719 = vmatprep.subr.bf16.mxu0 %v2406
        %2720 = vmatpush1.bf16.msra.mxu0 %v2405
        %2721 = vmatprep.subr.bf16.mxu0 %v2404
        %2722 = vmatpush1.bf16.msra.mxu0 %v2403
        %2723 = vmatprep.subr.bf16.mxu0 %v2402
        %2724 = vmatpush1.bf16.msra.mxu0 %v2401
        %2725 = vmatprep.subr.bf16.mxu0 %v2400
        %2726 = vmatpush1.bf16.msra.mxu0 %v2399
        %2727 = vmatprep.subr.bf16.mxu0 %v2398
        %2728 = vmatpush1.bf16.msra.mxu0 %v2397
        %2729 = vmatprep.subr.bf16.mxu0 %v2396
        %2730 = vmatpush1.bf16.msra.mxu0 %v2395
        %2731 = vmatprep.subr.bf16.mxu0 %v2426
        %2732 = vmatpush2.bf16.msra.mxu0 %v2425
        %2733 = vmatprep.subr.bf16.mxu0 %v2424
        %2734 = vmatpush2.bf16.msra.mxu0 %v2423
        %2735 = vmatprep.subr.bf16.mxu0 %v2422
        %2736 = vmatpush2.bf16.msra.mxu0 %v2421
        %2737 = vmatprep.subr.bf16.mxu0 %v2420
        %2738 = vmatpush2.bf16.msra.mxu0 %v2419
        %2739 = vmatprep.subr.bf16.mxu0 %v2418
        %2740 = vmatpush2.bf16.msra.mxu0 %v2417
        %2741 = vmatprep.subr.bf16.mxu0 %v2416
        %2742 = vmatpush2.bf16.msra.mxu0 %v2415
        %2743 = vmatprep.subr.bf16.mxu0 %v2414
        %2744 = vmatpush2.bf16.msra.mxu0 %v2413
        %2745 = vmatprep.subr.bf16.mxu0 %v2412
        %2746 = vmatpush2.bf16.msra.mxu0 %v2411
        %2747 = vmatprep.mubr.bf16.mxu0 %v1724
        %2748 = vmatmul.mubr.bf16.gmra.mxu0 %v1723
        %v2749 = vpop.f32.mrf.mxu0
        %v2750 = vadd.f32 %v1908, %v2749
        %v2751 = vpop.f32.mrf.mxu0
        %v2752 = vadd.f32 %v1912, %v2751
        %v2753 = vpop.f32.mrf.mxu0
        %v2754 = vadd.f32 %v1908, %v2753
        %v2755 = vpop.f32.mrf.mxu0
        %v2756 = vadd.f32 %v1912, %v2755
        %2757 = vmatprep.mubr.bf16.mxu0 %v1734
        %2758 = vmatmul.mubr.bf16.gmra.mxu0 %v1733
        %v2759 = vpop.f32.mrf.mxu0
        %v2760 = vadd.f32 %v1908, %v2759
        %v2761 = vpop.f32.mrf.mxu0
        %v2762 = vadd.f32 %v1912, %v2761
        %v2763 = vpop.f32.mrf.mxu0
        %v2764 = vadd.f32 %v1908, %v2763
        %v2765 = vpop.f32.mrf.mxu0
        %v2766 = vadd.f32 %v1912, %v2765
        %2767 = vdwg.mxu0
        %2768 = vmatprep.subr.bf16.mxu0 %v2442
        %2769 = vmatpush1.bf16.msra.mxu0 %v2441
        %2770 = vmatprep.subr.bf16.mxu0 %v2440
        %2771 = vmatpush1.bf16.msra.mxu0 %v2439
        %2772 = vmatprep.subr.bf16.mxu0 %v2438
        %2773 = vmatpush1.bf16.msra.mxu0 %v2437
        %2774 = vmatprep.subr.bf16.mxu0 %v2436
        %2775 = vmatpush1.bf16.msra.mxu0 %v2435
        %2776 = vmatprep.subr.bf16.mxu0 %v2434
        %2777 = vmatpush1.bf16.msra.mxu0 %v2433
        %2778 = vmatprep.subr.bf16.mxu0 %v2432
        %2779 = vmatpush1.bf16.msra.mxu0 %v2431
        %2780 = vmatprep.subr.bf16.mxu0 %v2430
        %2781 = vmatpush1.bf16.msra.mxu0 %v2429
        %2782 = vmatprep.subr.bf16.mxu0 %v2428
        %2783 = vmatpush1.bf16.msra.mxu0 %v2427
        %2784 = vmatprep.subr.bf16.mxu0 %v2458
        %2785 = vmatpush2.bf16.msra.mxu0 %v2457
        %2786 = vmatprep.subr.bf16.mxu0 %v2456
        %2787 = vmatpush2.bf16.msra.mxu0 %v2455
        %2788 = vmatprep.subr.bf16.mxu0 %v2454
        %2789 = vmatpush2.bf16.msra.mxu0 %v2453
        %2790 = vmatprep.subr.bf16.mxu0 %v2452
        %2791 = vmatpush2.bf16.msra.mxu0 %v2451
        %2792 = vmatprep.subr.bf16.mxu0 %v2450
        %2793 = vmatpush2.bf16.msra.mxu0 %v2449
        %2794 = vmatprep.subr.bf16.mxu0 %v2448
        %2795 = vmatpush2.bf16.msra.mxu0 %v2447
        %2796 = vmatprep.subr.bf16.mxu0 %v2446
        %2797 = vmatpush2.bf16.msra.mxu0 %v2445
        %2798 = vmatprep.subr.bf16.mxu0 %v2444
        %2799 = vmatpush2.bf16.msra.mxu0 %v2443
        %2800 = vmatprep.mubr.bf16.mxu0 %v1726
        %2801 = vmatmul.mubr.bf16.gmra.mxu0 %v1725
        %v2802 = vpop.f32.mrf.mxu0
        %v2803 = vadd.f32 %v2750, %v2802
        %v2804 = vpop.f32.mrf.mxu0
        %v2805 = vadd.f32 %v2752, %v2804
        %v2806 = vpop.f32.mrf.mxu0
        %v2807 = vadd.f32 %v2754, %v2806
        %v2808 = vpop.f32.mrf.mxu0
        %v2809 = vadd.f32 %v2756, %v2808
        %2810 = vmatprep.mubr.bf16.mxu0 %v1736
        %2811 = vmatmul.mubr.bf16.gmra.mxu0 %v1735
        %v2812 = vpop.f32.mrf.mxu0
        %v2813 = vadd.f32 %v2760, %v2812
        %v2814 = vpop.f32.mrf.mxu0
        %v2815 = vadd.f32 %v2762, %v2814
        %v2816 = vpop.f32.mrf.mxu0
        %v2817 = vadd.f32 %v2764, %v2816
        %v2818 = vpop.f32.mrf.mxu0
        %v2819 = vadd.f32 %v2766, %v2818
        %2820 = vdwg.mxu0
        %2821 = vmatprep.subr.bf16.mxu0 %v2474
        %2822 = vmatpush1.bf16.msra.mxu0 %v2473
        %2823 = vmatprep.subr.bf16.mxu0 %v2472
        %2824 = vmatpush1.bf16.msra.mxu0 %v2471
        %2825 = vmatprep.subr.bf16.mxu0 %v2470
        %2826 = vmatpush1.bf16.msra.mxu0 %v2469
        %2827 = vmatprep.subr.bf16.mxu0 %v2468
        %2828 = vmatpush1.bf16.msra.mxu0 %v2467
        %2829 = vmatprep.subr.bf16.mxu0 %v2466
        %2830 = vmatpush1.bf16.msra.mxu0 %v2465
        %2831 = vmatprep.subr.bf16.mxu0 %v2464
        %2832 = vmatpush1.bf16.msra.mxu0 %v2463
        %2833 = vmatprep.subr.bf16.mxu0 %v2462
        %2834 = vmatpush1.bf16.msra.mxu0 %v2461
        %2835 = vmatprep.subr.bf16.mxu0 %v2460
        %2836 = vmatpush1.bf16.msra.mxu0 %v2459
        %2837 = vmatprep.subr.bf16.mxu0 %v2490
        %2838 = vmatpush2.bf16.msra.mxu0 %v2489
        %2839 = vmatprep.subr.bf16.mxu0 %v2488
        %2840 = vmatpush2.bf16.msra.mxu0 %v2487
        %2841 = vmatprep.subr.bf16.mxu0 %v2486
        %2842 = vmatpush2.bf16.msra.mxu0 %v2485
        %2843 = vmatprep.subr.bf16.mxu0 %v2484
        %2844 = vmatpush2.bf16.msra.mxu0 %v2483
        %2845 = vmatprep.subr.bf16.mxu0 %v2482
        %2846 = vmatpush2.bf16.msra.mxu0 %v2481
        %2847 = vmatprep.subr.bf16.mxu0 %v2480
        %2848 = vmatpush2.bf16.msra.mxu0 %v2479
        %2849 = vmatprep.subr.bf16.mxu0 %v2478
        %2850 = vmatpush2.bf16.msra.mxu0 %v2477
        %2851 = vmatprep.subr.bf16.mxu0 %v2476
        %2852 = vmatpush2.bf16.msra.mxu0 %v2475
        %2853 = vmatprep.mubr.bf16.mxu0 %v1728
        %2854 = vmatmul.mubr.bf16.gmra.mxu0 %v1727
        %v2855 = vpop.f32.mrf.mxu0
        %v2856 = vadd.f32 %v2803, %v2855
        %v2857 = vpop.f32.mrf.mxu0
        %v2858 = vadd.f32 %v2805, %v2857
        %v2859 = vpop.f32.mrf.mxu0
        %v2860 = vadd.f32 %v2807, %v2859
        %v2861 = vpop.f32.mrf.mxu0
        %v2862 = vadd.f32 %v2809, %v2861
        %2863 = vmatprep.mubr.bf16.mxu0 %v1738
        %2864 = vmatmul.mubr.bf16.gmra.mxu0 %v1737
        %v2865 = vpop.f32.mrf.mxu0
        %v2866 = vadd.f32 %v2813, %v2865
        %v2867 = vpop.f32.mrf.mxu0
        %v2868 = vadd.f32 %v2815, %v2867
        %v2869 = vpop.f32.mrf.mxu0
        %v2870 = vadd.f32 %v2817, %v2869
        %v2871 = vpop.f32.mrf.mxu0
        %v2872 = vadd.f32 %v2819, %v2871
        %2873 = vdwg.mxu0
        %2874 = vmatprep.subr.bf16.mxu0 %v2506
        %2875 = vmatpush1.bf16.msra.mxu0 %v2505
        %2876 = vmatprep.subr.bf16.mxu0 %v2504
        %2877 = vmatpush1.bf16.msra.mxu0 %v2503
        %2878 = vmatprep.subr.bf16.mxu0 %v2502
        %2879 = vmatpush1.bf16.msra.mxu0 %v2501
        %2880 = vmatprep.subr.bf16.mxu0 %v2500
        %2881 = vmatpush1.bf16.msra.mxu0 %v2499
        %2882 = vmatprep.subr.bf16.mxu0 %v2498
        %2883 = vmatpush1.bf16.msra.mxu0 %v2497
        %2884 = vmatprep.subr.bf16.mxu0 %v2496
        %2885 = vmatpush1.bf16.msra.mxu0 %v2495
        %2886 = vmatprep.subr.bf16.mxu0 %v2494
        %2887 = vmatpush1.bf16.msra.mxu0 %v2493
        %2888 = vmatprep.subr.bf16.mxu0 %v2492
        %2889 = vmatpush1.bf16.msra.mxu0 %v2491
        %2890 = vmatprep.subr.bf16.mxu0 %v2522
        %2891 = vmatpush2.bf16.msra.mxu0 %v2521
        %2892 = vmatprep.subr.bf16.mxu0 %v2520
        %2893 = vmatpush2.bf16.msra.mxu0 %v2519
        %2894 = vmatprep.subr.bf16.mxu0 %v2518
        %2895 = vmatpush2.bf16.msra.mxu0 %v2517
        %2896 = vmatprep.subr.bf16.mxu0 %v2516
        %2897 = vmatpush2.bf16.msra.mxu0 %v2515
        %2898 = vmatprep.subr.bf16.mxu0 %v2514
        %2899 = vmatpush2.bf16.msra.mxu0 %v2513
        %2900 = vmatprep.subr.bf16.mxu0 %v2512
        %2901 = vmatpush2.bf16.msra.mxu0 %v2511
        %2902 = vmatprep.subr.bf16.mxu0 %v2510
        %2903 = vmatpush2.bf16.msra.mxu0 %v2509
        %2904 = vmatprep.subr.bf16.mxu0 %v2508
        %2905 = vmatpush2.bf16.msra.mxu0 %v2507
        %2906 = vmatprep.mubr.bf16.mxu0 %v1730
        %2907 = vmatmul.mubr.bf16.gmra.mxu0 %v1729
        %v2908 = vpop.f32.mrf.mxu0
        %v2909 = vadd.f32 %v2856, %v2908
        %v2910 = vpop.f32.mrf.mxu0
        %v2911 = vadd.f32 %v2858, %v2910
        %v2912 = vpop.f32.mrf.mxu0
        %v2913 = vadd.f32 %v2860, %v2912
        %v2914 = vpop.f32.mrf.mxu0
        %v2915 = vadd.f32 %v2862, %v2914
        %2916 = vmatprep.mubr.bf16.mxu0 %v1740
        %2917 = vmatmul.mubr.bf16.gmra.mxu0 %v1739
        %v2918 = vpop.f32.mrf.mxu0
        %v2919 = vadd.f32 %v2866, %v2918
        %v2920 = vpop.f32.mrf.mxu0
        %v2921 = vadd.f32 %v2868, %v2920
        %v2922 = vpop.f32.mrf.mxu0
        %v2923 = vadd.f32 %v2870, %v2922
        %v2924 = vpop.f32.mrf.mxu0
        %v2925 = vadd.f32 %v2872, %v2924
        %2926 = vdwg.mxu0
        %2927 = vmatprep.subr.bf16.mxu0 %v2538
        %2928 = vmatpush1.bf16.msra.mxu0 %v2537
        %2929 = vmatprep.subr.bf16.mxu0 %v2536
        %2930 = vmatpush1.bf16.msra.mxu0 %v2535
        %2931 = vmatprep.subr.bf16.mxu0 %v2534
        %2932 = vmatpush1.bf16.msra.mxu0 %v2533
        %2933 = vmatprep.subr.bf16.mxu0 %v2532
        %2934 = vmatpush1.bf16.msra.mxu0 %v2531
        %2935 = vmatprep.subr.bf16.mxu0 %v2530
        %2936 = vmatpush1.bf16.msra.mxu0 %v2529
        %2937 = vmatprep.subr.bf16.mxu0 %v2528
        %2938 = vmatpush1.bf16.msra.mxu0 %v2527
        %2939 = vmatprep.subr.bf16.mxu0 %v2526
        %2940 = vmatpush1.bf16.msra.mxu0 %v2525
        %2941 = vmatprep.subr.bf16.mxu0 %v2524
        %2942 = vmatpush1.bf16.msra.mxu0 %v2523
        %2943 = vmatprep.subr.bf16.mxu0 %v2554
        %2944 = vmatpush2.bf16.msra.mxu0 %v2553
        %2945 = vmatprep.subr.bf16.mxu0 %v2552
        %2946 = vmatpush2.bf16.msra.mxu0 %v2551
        %2947 = vmatprep.subr.bf16.mxu0 %v2550
        %2948 = vmatpush2.bf16.msra.mxu0 %v2549
        %2949 = vmatprep.subr.bf16.mxu0 %v2548
        %2950 = vmatpush2.bf16.msra.mxu0 %v2547
        %2951 = vmatprep.subr.bf16.mxu0 %v2546
        %2952 = vmatpush2.bf16.msra.mxu0 %v2545
        %2953 = vmatprep.subr.bf16.mxu0 %v2544
        %2954 = vmatpush2.bf16.msra.mxu0 %v2543
        %2955 = vmatprep.subr.bf16.mxu0 %v2542
        %2956 = vmatpush2.bf16.msra.mxu0 %v2541
        %2957 = vmatprep.subr.bf16.mxu0 %v2540
        %2958 = vmatpush2.bf16.msra.mxu0 %v2539
        %2959 = vmatprep.mubr.bf16.mxu0 %v1732
        %2960 = vmatmul.mubr.bf16.gmra.mxu0 %v1731
        %v2961 = vpop.f32.mrf.mxu0
        %v2962 = vadd.f32 %v2909, %v2961
        %v2963 = vpop.f32.mrf.mxu0
        %v2964 = vadd.f32 %v2911, %v2963
        %v2965 = vpop.f32.mrf.mxu0
        %v2966 = vadd.f32 %v2913, %v2965
        %v2967 = vpop.f32.mrf.mxu0
        %v2968 = vadd.f32 %v2915, %v2967
        %2969 = vmatprep.mubr.bf16.mxu0 %v1742
        %2970 = vmatmul.mubr.bf16.gmra.mxu0 %v1741
        %v2971 = vpop.f32.mrf.mxu0
        %v2972 = vadd.f32 %v2919, %v2971
        %v2973 = vpop.f32.mrf.mxu0
        %v2974 = vadd.f32 %v2921, %v2973
        %v2975 = vpop.f32.mrf.mxu0
        %v2976 = vadd.f32 %v2923, %v2975
        %v2977 = vpop.f32.mrf.mxu0
        %v2978 = vadd.f32 %v2925, %v2977
        %2979 = vdwg.mxu0
        %v2980 = vmax.f32 %v2962, 0.0
        %v2981 = vmax.f32 %v2964, 0.0
        %v2982 = vmax.f32 %v2966, 0.0
        %v2983 = vmax.f32 %v2968, 0.0
        %v2984 = vmax.f32 %v2972, 0.0
        %v2985 = vmax.f32 %v2974, 0.0
        %v2986 = vmax.f32 %v2976, 0.0
        %v2987 = vmax.f32 %v2978, 0.0
        %2996 = vrot.lane.b32.xlu0 %v2980, 96
        %v2997 = vpop.permute.xlu0 %2996
        %2998 = vrot.lane.b32.xlu0 %v2981, 96
        %v2999 = vpop.permute.xlu0 %2998
        %3000 = vrot.lane.b32.xlu0 %v2982, 96
        %v3001 = vpop.permute.xlu0 %3000
        %3002 = vrot.lane.b32.xlu0 %v2983, 96
        %v3003 = vpop.permute.xlu0 %3002
        %3004 = vrot.lane.b32.xlu0 %v2984, 96
        %v3005 = vpop.permute.xlu0 %3004
        %3006 = vrot.lane.b32.xlu0 %v2985, 96
        %v3007 = vpop.permute.xlu0 %3006
        %3008 = vrot.lane.b32.xlu0 %v2986, 96
        %v3009 = vpop.permute.xlu0 %3008
        %3010 = vrot.lane.b32.xlu0 %v2987, 96
        %v3011 = vpop.permute.xlu0 %3010
        %v3012 = vsel %vm1385, %v2997, %v2999
        %v3013 = vsel %vm1385, %v3001, %v3003
        %v3014 = vsel %vm1385, %v3005, %v3007
        %v3015 = vsel %vm1385, %v3009, %v3011
        %v3020 = vmax.f32 %v2980, %v3012
        %v3021 = vmax.f32 %v2982, %v3013
        %v3022 = vmax.f32 %v2984, %v3014
        %v3023 = vmax.f32 %v2986, %v3015
        %v3028 = vrot.slane %v3020, 1
        %v3029 = vrot.slane %v3021, 1
        %v3030 = vrot.slane %v3022, 1
        %v3031 = vrot.slane %v3023, 1
        %v3036 = vmax.f32 %v3020, %v3028
        %v3037 = vmax.f32 %v3021, %v3029
        %v3038 = vmax.f32 %v3022, %v3030
        %v3039 = vmax.f32 %v3023, %v3031
        %v3040 = vpack.c.bf16 %v3036, %v3036
        %v3041 = vpack.c.bf16 %v3037, %v3037
        %v3042 = vpack.c.bf16 %v3038, %v3038
        %v3043 = vpack.c.bf16 %v3039, %v3039
        %v3044 = vld [vmem:[%s5] sm:$0xf]
        %v3045 = vld [vmem:[%s5 + $0x4] sm:$0xf]
        %v3046 = vld [vmem:[%s5 + $0x8] sm:$0xf]
        %v3047 = vld [vmem:[%s5 + $0xc] sm:$0xf]
        %v3048 = vld [vmem:[%s5 + $0x10] sm:$0xf]
        %v3049 = vld [vmem:[%s5 + $0x14] sm:$0xf]
        %v3050 = vld [vmem:[%s5 + $0x18] sm:$0xf]
        %v3051 = vld [vmem:[%s5 + $0x1c] sm:$0xf]
        %v3052 = vld [vmem:[%s5 + $0x20] sm:$0xf]
        %v3053 = vld [vmem:[%s5 + $0x24] sm:$0xf]
        %v3054 = vld [vmem:[%s5 + $0x28] sm:$0xf]
        %v3055 = vld [vmem:[%s5 + $0x2c] sm:$0xf]
        %v3056 = vld [vmem:[%s5 + $0x30] sm:$0xf]
        %v3057 = vld [vmem:[%s5 + $0x34] sm:$0xf]
        %v3058 = vld [vmem:[%s5 + $0x38] sm:$0xf]
        %v3059 = vld [vmem:[%s5 + $0x3c] sm:$0xf]
        %s3060 = scalar_lea.vmem %s5, 64
        %v3061 = vld [vmem:[%s3060] sm:$0xf]
        %v3062 = vld [vmem:[%s3060 + $0x4] sm:$0xf]
        %v3063 = vld [vmem:[%s3060 + $0x8] sm:$0xf]
        %v3064 = vld [vmem:[%s3060 + $0xc] sm:$0xf]
        %v3065 = vld [vmem:[%s3060 + $0x10] sm:$0xf]
        %v3066 = vld [vmem:[%s3060 + $0x14] sm:$0xf]
        %v3067 = vld [vmem:[%s3060 + $0x18] sm:$0xf]
        %v3068 = vld [vmem:[%s3060 + $0x1c] sm:$0xf]
        %v3069 = vld [vmem:[%s3060 + $0x20] sm:$0xf]
        %v3070 = vld [vmem:[%s3060 + $0x24] sm:$0xf]
        %v3071 = vld [vmem:[%s3060 + $0x28] sm:$0xf]
        %v3072 = vld [vmem:[%s3060 + $0x2c] sm:$0xf]
        %v3073 = vld [vmem:[%s3060 + $0x30] sm:$0xf]
        %v3074 = vld [vmem:[%s3060 + $0x34] sm:$0xf]
        %v3075 = vld [vmem:[%s3060 + $0x38] sm:$0xf]
        %v3076 = vld [vmem:[%s3060 + $0x3c] sm:$0xf]
        %v3081 = vunpack.c.l.b16 %v3040
        %v3082 = vunpack.c.l.b16 %v3041
        %v3083 = vunpack.c.l.b16 %v3042
        %v3084 = vunpack.c.l.b16 %v3043
        %v3085 = vrot.slane %v3081, 1
        %vm3086 = vcmask 1041409
        %v3087 = vsel %vm3086, %v3082, %v3085
        %v3088 = vrot.slane %v3083, 7
        %vm3089 = vcmask 1042434
        %v3090 = vsel %vm3089, %v3088, %v3087
        %v3091 = vrot.slane %v3084, 6
        %vm3092 = vcmask 1043459
        %v3093 = vsel %vm3092, %v3091, %v3090
        %v3094 = vpack.c.b16 %v3093, %v3093
        %v3112 = vunpack.c.l.b16 %v3061
        %v3113 = vunpack.c.l.b16 %v3062
        %v3114 = vunpack.c.l.b16 %v3063
        %v3115 = vunpack.c.l.b16 %v3064
        %v3116 = vunpack.c.l.b16 %v3065
        %v3117 = vunpack.c.l.b16 %v3066
        %v3118 = vunpack.c.l.b16 %v3067
        %v3119 = vunpack.c.l.b16 %v3068
        %v3120 = vunpack.c.l.b16 %v3069
        %v3121 = vunpack.c.l.b16 %v3070
        %v3122 = vunpack.c.l.b16 %v3071
        %v3123 = vunpack.c.l.b16 %v3072
        %v3124 = vunpack.c.l.b16 %v3073
        %v3125 = vunpack.c.l.b16 %v3074
        %v3126 = vunpack.c.l.b16 %v3075
        %v3127 = vunpack.c.l.b16 %v3076
        %v3128 = vpack.c.b16 %v3113, %v3112
        %v3129 = vpack.c.b16 %v3115, %v3114
        %v3130 = vpack.c.b16 %v3117, %v3116
        %v3131 = vpack.c.b16 %v3119, %v3118
        %v3132 = vpack.c.b16 %v3121, %v3120
        %v3133 = vpack.c.b16 %v3123, %v3122
        %v3134 = vpack.c.b16 %v3125, %v3124
        %v3135 = vpack.c.b16 %v3127, %v3126
        %3144 = vmatprep.subr.bf16.mxu0 0
        %3145 = vmatpush1.bf16.msra.mxu0 %v3135
        %3146 = vmatprep.subr.bf16.mxu0 0
        %3147 = vmatpush1.bf16.msra.mxu0 %v3134
        %3148 = vmatprep.subr.bf16.mxu0 0
        %3149 = vmatpush1.bf16.msra.mxu0 %v3133
        %3150 = vmatprep.subr.bf16.mxu0 0
        %3151 = vmatpush1.bf16.msra.mxu0 %v3132
        %3152 = vmatprep.subr.bf16.mxu0 0
        %3153 = vmatpush1.bf16.msra.mxu0 %v3131
        %3154 = vmatprep.subr.bf16.mxu0 0
        %3155 = vmatpush1.bf16.msra.mxu0 %v3130
        %3156 = vmatprep.subr.bf16.mxu0 0
        %3157 = vmatpush1.bf16.msra.mxu0 %v3129
        %3158 = vmatprep.subr.bf16.mxu0 0
        %3159 = vmatpush1.bf16.msra.mxu0 %v3128
        %3160 = vmatprep.subr.bf16.mxu0 0
        %3161 = vmatpush2.bf16.msra.mxu0 0
        %3162 = vmatprep.subr.bf16.mxu0 0
        %3163 = vmatpush2.bf16.msra.mxu0 0
        %3164 = vmatprep.subr.bf16.mxu0 0
        %3165 = vmatpush2.bf16.msra.mxu0 0
        %3166 = vmatprep.subr.bf16.mxu0 0
        %3167 = vmatpush2.bf16.msra.mxu0 0
        %3168 = vmatprep.subr.bf16.mxu0 0
        %3169 = vmatpush2.bf16.msra.mxu0 0
        %3170 = vmatprep.subr.bf16.mxu0 0
        %3171 = vmatpush2.bf16.msra.mxu0 0
        %3172 = vmatprep.subr.bf16.mxu0 0
        %3173 = vmatpush2.bf16.msra.mxu0 0
        %3174 = vmatprep.subr.bf16.mxu0 0
        %3175 = vmatpush2.bf16.msra.mxu0 0
        %3176 = vmatprep.mubr.bf16.mxu0 0
        %3177 = vmatmul.mubr.bf16.gmra.mxu0 %v3094
        %v3178 = vpop.f32.mrf.mxu0
        %v3179 = vadd.f32 0.0, %v3178
        %v3180 = vpop.f32.mrf.mxu0
        %v3181 = vpop.f32.mrf.mxu0
        %v3182 = vpop.f32.mrf.mxu0
        %3183 = vdwg.mxu0
        %v3184 = vrot.slane %v3082, 7
        %v3185 = vsel %vm3086, %v3184, %v3081
        %v3186 = vrot.slane %v3083, 6
        %v3187 = vsel %vm3089, %v3186, %v3185
        %v3188 = vrot.slane %v3084, 5
        %v3189 = vsel %vm3092, %v3188, %v3187
        %v3190 = vpack.c.b16 %v3189, %v3189
        %v3208 = vunpack.c.l.b16 %v3044
        %v3209 = vunpack.c.l.b16 %v3045
        %v3210 = vunpack.c.l.b16 %v3046
        %v3211 = vunpack.c.l.b16 %v3047
        %v3212 = vunpack.c.l.b16 %v3048
        %v3213 = vunpack.c.l.b16 %v3049
        %v3214 = vunpack.c.l.b16 %v3050
        %v3215 = vunpack.c.l.b16 %v3051
        %v3216 = vunpack.c.l.b16 %v3052
        %v3217 = vunpack.c.l.b16 %v3053
        %v3218 = vunpack.c.l.b16 %v3054
        %v3219 = vunpack.c.l.b16 %v3055
        %v3220 = vunpack.c.l.b16 %v3056
        %v3221 = vunpack.c.l.b16 %v3057
        %v3222 = vunpack.c.l.b16 %v3058
        %v3223 = vunpack.c.l.b16 %v3059
        %v3224 = vpack.c.b16 %v3209, %v3208
        %v3225 = vpack.c.b16 %v3211, %v3210
        %v3226 = vpack.c.b16 %v3213, %v3212
        %v3227 = vpack.c.b16 %v3215, %v3214
        %v3228 = vpack.c.b16 %v3217, %v3216
        %v3229 = vpack.c.b16 %v3219, %v3218
        %v3230 = vpack.c.b16 %v3221, %v3220
        %v3231 = vpack.c.b16 %v3223, %v3222
        %3240 = vmatprep.subr.bf16.mxu0 0
        %3241 = vmatpush1.bf16.msra.mxu0 %v3231
        %3242 = vmatprep.subr.bf16.mxu0 0
        %3243 = vmatpush1.bf16.msra.mxu0 %v3230
        %3244 = vmatprep.subr.bf16.mxu0 0
        %3245 = vmatpush1.bf16.msra.mxu0 %v3229
        %3246 = vmatprep.subr.bf16.mxu0 0
        %3247 = vmatpush1.bf16.msra.mxu0 %v3228
        %3248 = vmatprep.subr.bf16.mxu0 0
        %3249 = vmatpush1.bf16.msra.mxu0 %v3227
        %3250 = vmatprep.subr.bf16.mxu0 0
        %3251 = vmatpush1.bf16.msra.mxu0 %v3226
        %3252 = vmatprep.subr.bf16.mxu0 0
        %3253 = vmatpush1.bf16.msra.mxu0 %v3225
        %3254 = vmatprep.subr.bf16.mxu0 0
        %3255 = vmatpush1.bf16.msra.mxu0 %v3224
        %3256 = vmatprep.subr.bf16.mxu0 0
        %3257 = vmatpush2.bf16.msra.mxu0 0
        %3258 = vmatprep.subr.bf16.mxu0 0
        %3259 = vmatpush2.bf16.msra.mxu0 0
        %3260 = vmatprep.subr.bf16.mxu0 0
        %3261 = vmatpush2.bf16.msra.mxu0 0
        %3262 = vmatprep.subr.bf16.mxu0 0
        %3263 = vmatpush2.bf16.msra.mxu0 0
        %3264 = vmatprep.subr.bf16.mxu0 0
        %3265 = vmatpush2.bf16.msra.mxu0 0
        %3266 = vmatprep.subr.bf16.mxu0 0
        %3267 = vmatpush2.bf16.msra.mxu0 0
        %3268 = vmatprep.subr.bf16.mxu0 0
        %3269 = vmatpush2.bf16.msra.mxu0 0
        %3270 = vmatprep.subr.bf16.mxu0 0
        %3271 = vmatpush2.bf16.msra.mxu0 0
        %3272 = vmatprep.mubr.bf16.mxu0 0
        %3273 = vmatmul.mubr.bf16.gmra.mxu0 %v3190
        %v3274 = vpop.f32.mrf.mxu0
        %v3275 = vadd.f32 %v3179, %v3274
        %v3276 = vpop.f32.mrf.mxu0
        %v3277 = vpop.f32.mrf.mxu0
        %v3278 = vpop.f32.mrf.mxu0
        %3279 = vdwg.mxu0
        %s3280 = scalar_lea.vmem %s5, 128
        %v3281 = vld [vmem:[%s3280] sm:$0xf]
        %v3282 = vld [vmem:[%s3280 + $0x4] sm:$0xf]
        %v3283 = vld [vmem:[%s3280 + $0x8] sm:$0xf]
        %v3284 = vld [vmem:[%s3280 + $0xc] sm:$0xf]
        %v3285 = vld [vmem:[%s3280 + $0x10] sm:$0xf]
        %v3286 = vld [vmem:[%s3280 + $0x14] sm:$0xf]
        %v3287 = vld [vmem:[%s3280 + $0x18] sm:$0xf]
        %v3288 = vld [vmem:[%s3280 + $0x1c] sm:$0xf]
        %v3289 = vld [vmem:[%s3280 + $0x20] sm:$0xf]
        %v3290 = vld [vmem:[%s3280 + $0x24] sm:$0xf]
        %v3291 = vld [vmem:[%s3280 + $0x28] sm:$0xf]
        %v3292 = vld [vmem:[%s3280 + $0x2c] sm:$0xf]
        %v3293 = vld [vmem:[%s3280 + $0x30] sm:$0xf]
        %v3294 = vld [vmem:[%s3280 + $0x34] sm:$0xf]
        %v3295 = vld [vmem:[%s3280 + $0x38] sm:$0xf]
        %v3296 = vld [vmem:[%s3280 + $0x3c] sm:$0xf]
        %v3297 = vrot.slane %v3081, 2
        %v3298 = vrot.slane %v3082, 1
        %v3299 = vsel %vm3086, %v3298, %v3297
        %v3300 = vsel %vm3089, %v3083, %v3299
        %v3301 = vrot.slane %v3084, 7
        %v3302 = vsel %vm3092, %v3301, %v3300
        %v3303 = vpack.c.b16 %v3302, %v3302
        %v3321 = vunpack.c.l.b16 %v3281
        %v3322 = vunpack.c.l.b16 %v3282
        %v3323 = vunpack.c.l.b16 %v3283
        %v3324 = vunpack.c.l.b16 %v3284
        %v3325 = vunpack.c.l.b16 %v3285
        %v3326 = vunpack.c.l.b16 %v3286
        %v3327 = vunpack.c.l.b16 %v3287
        %v3328 = vunpack.c.l.b16 %v3288
        %v3329 = vunpack.c.l.b16 %v3289
        %v3330 = vunpack.c.l.b16 %v3290
        %v3331 = vunpack.c.l.b16 %v3291
        %v3332 = vunpack.c.l.b16 %v3292
        %v3333 = vunpack.c.l.b16 %v3293
        %v3334 = vunpack.c.l.b16 %v3294
        %v3335 = vunpack.c.l.b16 %v3295
        %v3336 = vunpack.c.l.b16 %v3296
        %v3337 = vpack.c.b16 %v3322, %v3321
        %v3338 = vpack.c.b16 %v3324, %v3323
        %v3339 = vpack.c.b16 %v3326, %v3325
        %v3340 = vpack.c.b16 %v3328, %v3327
        %v3341 = vpack.c.b16 %v3330, %v3329
        %v3342 = vpack.c.b16 %v3332, %v3331
        %v3343 = vpack.c.b16 %v3334, %v3333
        %v3344 = vpack.c.b16 %v3336, %v3335
        %3353 = vmatprep.subr.bf16.mxu0 0
        %3354 = vmatpush1.bf16.msra.mxu0 %v3344
        %3355 = vmatprep.subr.bf16.mxu0 0
        %3356 = vmatpush1.bf16.msra.mxu0 %v3343
        %3357 = vmatprep.subr.bf16.mxu0 0
        %3358 = vmatpush1.bf16.msra.mxu0 %v3342
        %3359 = vmatprep.subr.bf16.mxu0 0
        %3360 = vmatpush1.bf16.msra.mxu0 %v3341
        %3361 = vmatprep.subr.bf16.mxu0 0
        %3362 = vmatpush1.bf16.msra.mxu0 %v3340
        %3363 = vmatprep.subr.bf16.mxu0 0
        %3364 = vmatpush1.bf16.msra.mxu0 %v3339
        %3365 = vmatprep.subr.bf16.mxu0 0
        %3366 = vmatpush1.bf16.msra.mxu0 %v3338
        %3367 = vmatprep.subr.bf16.mxu0 0
        %3368 = vmatpush1.bf16.msra.mxu0 %v3337
        %3369 = vmatprep.subr.bf16.mxu0 0
        %3370 = vmatpush2.bf16.msra.mxu0 0
        %3371 = vmatprep.subr.bf16.mxu0 0
        %3372 = vmatpush2.bf16.msra.mxu0 0
        %3373 = vmatprep.subr.bf16.mxu0 0
        %3374 = vmatpush2.bf16.msra.mxu0 0
        %3375 = vmatprep.subr.bf16.mxu0 0
        %3376 = vmatpush2.bf16.msra.mxu0 0
        %3377 = vmatprep.subr.bf16.mxu0 0
        %3378 = vmatpush2.bf16.msra.mxu0 0
        %3379 = vmatprep.subr.bf16.mxu0 0
        %3380 = vmatpush2.bf16.msra.mxu0 0
        %3381 = vmatprep.subr.bf16.mxu0 0
        %3382 = vmatpush2.bf16.msra.mxu0 0
        %3383 = vmatprep.subr.bf16.mxu0 0
        %3384 = vmatpush2.bf16.msra.mxu0 0
        %3385 = vmatprep.mubr.bf16.mxu0 0
        %3386 = vmatmul.mubr.bf16.gmra.mxu0 %v3303
        %v3387 = vpop.f32.mrf.mxu0
        %v3388 = vadd.f32 0.0, %v3387
        %v3389 = vpop.f32.mrf.mxu0
        %v3390 = vpop.f32.mrf.mxu0
        %v3391 = vpop.f32.mrf.mxu0
        %3392 = vdwg.mxu0
        %v3393 = vadd.f32 %v3275, %v3388
        %s3394 = scalar_lea.vmem %s5, 192
        %v3395 = vld [vmem:[%s3394] sm:$0xf]
        %v3396 = vld [vmem:[%s3394 + $0x4] sm:$0xf]
        %v3397 = vld [vmem:[%s3394 + $0x8] sm:$0xf]
        %v3398 = vld [vmem:[%s3394 + $0xc] sm:$0xf]
        %v3399 = vld [vmem:[%s3394 + $0x10] sm:$0xf]
        %v3400 = vld [vmem:[%s3394 + $0x14] sm:$0xf]
        %v3401 = vld [vmem:[%s3394 + $0x18] sm:$0xf]
        %v3402 = vld [vmem:[%s3394 + $0x1c] sm:$0xf]
        %v3403 = vld [vmem:[%s3394 + $0x20] sm:$0xf]
        %v3404 = vld [vmem:[%s3394 + $0x24] sm:$0xf]
        %v3405 = vld [vmem:[%s3394 + $0x28] sm:$0xf]
        %v3406 = vld [vmem:[%s3394 + $0x2c] sm:$0xf]
        %v3407 = vld [vmem:[%s3394 + $0x30] sm:$0xf]
        %v3408 = vld [vmem:[%s3394 + $0x34] sm:$0xf]
        %v3409 = vld [vmem:[%s3394 + $0x38] sm:$0xf]
        %v3410 = vld [vmem:[%s3394 + $0x3c] sm:$0xf]
        %v3411 = vrot.slane %v3081, 3
        %v3412 = vrot.slane %v3082, 2
        %v3413 = vsel %vm3086, %v3412, %v3411
        %v3414 = vrot.slane %v3083, 1
        %v3415 = vsel %vm3089, %v3414, %v3413
        %v3416 = vsel %vm3092, %v3084, %v3415
        %v3417 = vpack.c.b16 %v3416, %v3416
        %v3435 = vunpack.c.l.b16 %v3395
        %v3436 = vunpack.c.l.b16 %v3396
        %v3437 = vunpack.c.l.b16 %v3397
        %v3438 = vunpack.c.l.b16 %v3398
        %v3439 = vunpack.c.l.b16 %v3399
        %v3440 = vunpack.c.l.b16 %v3400
        %v3441 = vunpack.c.l.b16 %v3401
        %v3442 = vunpack.c.l.b16 %v3402
        %v3443 = vunpack.c.l.b16 %v3403
        %v3444 = vunpack.c.l.b16 %v3404
        %v3445 = vunpack.c.l.b16 %v3405
        %v3446 = vunpack.c.l.b16 %v3406
        %v3447 = vunpack.c.l.b16 %v3407
        %v3448 = vunpack.c.l.b16 %v3408
        %v3449 = vunpack.c.l.b16 %v3409
        %v3450 = vunpack.c.l.b16 %v3410
        %v3451 = vpack.c.b16 %v3436, %v3435
        %v3452 = vpack.c.b16 %v3438, %v3437
        %v3453 = vpack.c.b16 %v3440, %v3439
        %v3454 = vpack.c.b16 %v3442, %v3441
        %v3455 = vpack.c.b16 %v3444, %v3443
        %v3456 = vpack.c.b16 %v3446, %v3445
        %v3457 = vpack.c.b16 %v3448, %v3447
        %v3458 = vpack.c.b16 %v3450, %v3449
        %3467 = vmatprep.subr.bf16.mxu0 0
        %3468 = vmatpush1.bf16.msra.mxu0 %v3458
        %3469 = vmatprep.subr.bf16.mxu0 0
        %3470 = vmatpush1.bf16.msra.mxu0 %v3457
        %3471 = vmatprep.subr.bf16.mxu0 0
        %3472 = vmatpush1.bf16.msra.mxu0 %v3456
        %3473 = vmatprep.subr.bf16.mxu0 0
        %3474 = vmatpush1.bf16.msra.mxu0 %v3455
        %3475 = vmatprep.subr.bf16.mxu0 0
        %3476 = vmatpush1.bf16.msra.mxu0 %v3454
        %3477 = vmatprep.subr.bf16.mxu0 0
        %3478 = vmatpush1.bf16.msra.mxu0 %v3453
        %3479 = vmatprep.subr.bf16.mxu0 0
        %3480 = vmatpush1.bf16.msra.mxu0 %v3452
        %3481 = vmatprep.subr.bf16.mxu0 0
        %3482 = vmatpush1.bf16.msra.mxu0 %v3451
        %3483 = vmatprep.subr.bf16.mxu0 0
        %3484 = vmatpush2.bf16.msra.mxu0 0
        %3485 = vmatprep.subr.bf16.mxu0 0
        %3486 = vmatpush2.bf16.msra.mxu0 0
        %3487 = vmatprep.subr.bf16.mxu0 0
        %3488 = vmatpush2.bf16.msra.mxu0 0
        %3489 = vmatprep.subr.bf16.mxu0 0
        %3490 = vmatpush2.bf16.msra.mxu0 0
        %3491 = vmatprep.subr.bf16.mxu0 0
        %3492 = vmatpush2.bf16.msra.mxu0 0
        %3493 = vmatprep.subr.bf16.mxu0 0
        %3494 = vmatpush2.bf16.msra.mxu0 0
        %3495 = vmatprep.subr.bf16.mxu0 0
        %3496 = vmatpush2.bf16.msra.mxu0 0
        %3497 = vmatprep.subr.bf16.mxu0 0
        %3498 = vmatpush2.bf16.msra.mxu0 0
        %3499 = vmatprep.mubr.bf16.mxu0 0
        %3500 = vmatmul.mubr.bf16.gmra.mxu0 %v3417
        %v3501 = vpop.f32.mrf.mxu0
        %v3502 = vadd.f32 0.0, %v3501
        %v3503 = vpop.f32.mrf.mxu0
        %v3504 = vpop.f32.mrf.mxu0
        %v3505 = vpop.f32.mrf.mxu0
        %3506 = vdwg.mxu0
        %v3507 = vadd.f32 %v3393, %v3502
        %v3508 = vld [vmem:[%s6] sm:$0x1]
        %v3510 = vlaneseq
        %v3511 = vshrl.u32 %v3510, 7
        %v3512 = vsub.s32 0, %v3511
        %v3513 = vrot.slane %v3508, %v3512
        %v3515 = vadd.f32 %v3507, %v3513
        %v3516 = vmax.f32 %v3515, 0.0
        %v3517 = vpack.c.bf16 %v3516, %v3516
        %v3518 = vld [vmem:[%s7] sm:$0xf]
        %v3519 = vld [vmem:[%s7 + $0x4] sm:$0xf]
        %v3520 = vld [vmem:[%s7 + $0x8] sm:$0xf]
        %v3521 = vld [vmem:[%s7 + $0xc] sm:$0xf]
        %v3522 = vld [vmem:[%s8] sm:$0x1]
        %v3524 = vlaneseq
        %v3525 = vshrl.u32 %v3524, 7
        %v3526 = vsub.s32 0, %v3525
        %v3527 = vrot.slane %v3522, %v3526
        %v3533 = vunpack.c.l.b16 %v3518
        %v3534 = vunpack.c.l.b16 %v3519
        %v3535 = vunpack.c.l.b16 %v3520
        %v3536 = vunpack.c.l.b16 %v3521
        %v3537 = vpack.c.b16 %v3534, %v3533
        %v3538 = vpack.c.b16 %v3536, %v3535
        %v3542 = vsel %vm1365, %v3517, 0
        %3544 = vmatprep.subr.bf16.mxu0 0
        %3545 = vmatpush1.bf16.msra.mxu0 0
        %3546 = vmatprep.subr.bf16.mxu0 0
        %3547 = vmatpush1.bf16.msra.mxu0 0
        %3548 = vmatprep.subr.bf16.mxu0 0
        %3549 = vmatpush1.bf16.msra.mxu0 0
        %3550 = vmatprep.subr.bf16.mxu0 0
        %3551 = vmatpush1.bf16.msra.mxu0 0
        %3552 = vmatprep.subr.bf16.mxu0 0
        %3553 = vmatpush1.bf16.msra.mxu0 0
        %3554 = vmatprep.subr.bf16.mxu0 0
        %3555 = vmatpush1.bf16.msra.mxu0 0
        %3556 = vmatprep.subr.bf16.mxu0 0
        %3557 = vmatpush1.bf16.msra.mxu0 %v3538
        %3558 = vmatprep.subr.bf16.mxu0 0
        %3559 = vmatpush1.bf16.msra.mxu0 %v3537
        %3560 = vmatprep.subr.bf16.mxu0 0
        %3561 = vmatpush2.bf16.msra.mxu0 0
        %3562 = vmatprep.subr.bf16.mxu0 0
        %3563 = vmatpush2.bf16.msra.mxu0 0
        %3564 = vmatprep.subr.bf16.mxu0 0
        %3565 = vmatpush2.bf16.msra.mxu0 0
        %3566 = vmatprep.subr.bf16.mxu0 0
        %3567 = vmatpush2.bf16.msra.mxu0 0
        %3568 = vmatprep.subr.bf16.mxu0 0
        %3569 = vmatpush2.bf16.msra.mxu0 0
        %3570 = vmatprep.subr.bf16.mxu0 0
        %3571 = vmatpush2.bf16.msra.mxu0 0
        %3572 = vmatprep.subr.bf16.mxu0 0
        %3573 = vmatpush2.bf16.msra.mxu0 0
        %3574 = vmatprep.subr.bf16.mxu0 0
        %3575 = vmatpush2.bf16.msra.mxu0 0
        %3576 = vmatprep.mubr.bf16.mxu0 0
        %3577 = vmatmul.mubr.bf16.gmra.mxu0 %v3542
        %v3578 = vpop.f32.mrf.mxu0
        %v3579 = vadd.f32 %v3527, %v3578
        %v3580 = vpop.f32.mrf.mxu0
        %v3581 = vpop.f32.mrf.mxu0
        %v3582 = vpop.f32.mrf.mxu0
        %3583 = vdwg.mxu0
        %vm3584 = vcmask 76800
        %3585 = vst.msk [vmem:[%s413] sm:$0xf] %vm3584, %v3579
        %s3586 = sand.u32 %s225, 1
        %s3587 = scalar_lea.sflag [#allocation6], %s3586
        %s3588 = sand.u32 %s225, 1
        %s3589 = smul.addr %s3588, 4
        %s3590 = scalar_lea.vmem [#allocation5], %s3589
        // Predicated region
        $region80: #{smallcnn_forward.1} parent=74 // pred_check
          %p3591 = pneg %p235
        $region81: #{smallcnn_forward.1} parent=74 // pred_check_branch
          %3593 = sbr.rel (%p3591) target = $region83
        $region82: #{smallcnn_forward.1} parent=74 // pred_region
          %s3595 = ssub.s32 64, 64
          %3596 = vsyncadd %s3587, %s3595
          %s3597 = smul.addr %s23, 64
          %s3598 = scalar_lea.hbm %s9, %s3597
          %s3600 = sshll.u32 %s3590, 4
          %s3601 = int_to_ptr.vmem [resolvable:$true] %s3600
          %3603 = dma.vmem_to_hbm [thread:$0]  %s3601, 64, %s3598, %s3587
        $region83: #{smallcnn_forward.1} parent=74 // pred_fallthru
          _
      $region75: #{smallcnn_forward.1} parent=5 // pred_fallthru
        _
      %p3604 = scmp.le.s32.totalorder 2, %s18
      // Predicated region
      $region84: #{smallcnn_forward.1} parent=5 // pred_check
        %p3605 = pneg %p3604
      $region85: #{smallcnn_forward.1} parent=5 // pred_check_branch
        %3607 = sbr.rel (%p3605) target = $region87
      $region86: #{smallcnn_forward.1} parent=5 // pred_region
        %s3608 = ssub.s32 %s18, 2
        // Predicated region
        $region88: #{smallcnn_forward.1} parent=86 // pred_check
          %p3609 = pneg %p241
        $region89: #{smallcnn_forward.1} parent=86 // pred_check_branch
          %3611 = sbr.rel (%p3609) target = $region91
        $region90: #{smallcnn_forward.1} parent=86 // pred_region
          %s3612 = sand.u32 %s226, 1
          %s3613 = scalar_lea.sflag [#allocation6], %s3612
          %s3614 = sand.u32 %s226, 1
          %s3615 = smul.addr %s3614, 4
          %s3616 = scalar_lea.vmem [#allocation5], %s3615
          %3617 = dma.done %s3613, 64
        $region91: #{smallcnn_forward.1} parent=86 // pred_fallthru
          _
      $region87: #{smallcnn_forward.1} parent=5 // pred_fallthru
        _
    $region6: #{smallcnn_forward.1} parent=1 // loop_footer
      %s22 = sadd.s32 1, %s18
    $region7: #{smallcnn_forward.1} parent=1 // loop_footer_branch
      %17 = sbr.rel target = $region3
    $region8: #{smallcnn_forward.1} parent=1 // loop_exit
      _
    %3618 = vsyncpa [#allocation6], 1
    %s3619 = scalar_lea.sflag [#allocation6], 1
    %3620 = vsyncpa %s3619, 1

</llo_original>
